<compile_context>
chip_gen: v7x
topology: tpu7x:2x2x1
jax: 0.10.0
libtpu: 0.0.40
codegen_flags: <defaults>
</compile_context>

<pallas_src>
import functools

import jax
import jax.numpy as jnp
from jax import lax
from jax.experimental import pallas as pl
from jax.experimental.pallas import tpu as pltpu


_VMEM_LIMIT = 32 * 1024 * 1024  # safe on v5e / v6e / v7x


def _hardswish(x):
    return x * jnp.clip(x + 3.0, 0.0, 6.0) * (1.0 / 6.0)


def _hardsigmoid(x):
    return jnp.clip(x + 3.0, 0.0, 6.0) * (1.0 / 6.0)


def _pick_tile(n, *, parallel_other=1, target_steps=4, cap=512):
    """Tile size (multiple of 8) along a length-n dim giving >=target_steps total steps."""
    if n <= 8:
        return n
    want = max(1, -(-target_steps // parallel_other))   # ceil(target/other)
    t = (n // want) // 8 * 8
    return max(8, min(cap, t))


def _fold_bn(w, conv_b, gamma, beta, mean, var, eps=1e-5):
    """Fold eval-mode BN into conv weight/bias (per-output-channel on last dim)."""
    scale = gamma / jnp.sqrt(var + eps)
    w_f = w * scale
    b_f = (conv_b - mean) * scale + beta
    return w_f, b_f.reshape(1, -1)


# --------------------------------------------------------------------------
# expand 1x1 conv (+ folded BN bias) + hardswish   — MXU matmul, bf16 in/out
# --------------------------------------------------------------------------
def _expand_kernel(x_ref, w_ref, b_ref, o_ref):
    x = x_ref[...].astype(jnp.bfloat16)
    y = jnp.dot(x, w_ref[...], preferred_element_type=jnp.float32)
    y = _hardswish(y + b_ref[...])
    o_ref[...] = y.astype(o_ref.dtype)


def expand_conv(x2d, w_bf16, bias):
    M, Cin = x2d.shape
    Cexp = w_bf16.shape[1]
    tm = _pick_tile(M)
    return pl.pallas_call(
        _expand_kernel,
        out_shape=jax.ShapeDtypeStruct((M, Cexp), jnp.bfloat16),
        grid_spec=pltpu.PrefetchScalarGridSpec(
            num_scalar_prefetch=0,
            grid=(pl.cdiv(M, tm),),
            in_specs=[
                pl.BlockSpec((tm, Cin), lambda i: (i, 0)),
                pl.BlockSpec((Cin, Cexp), lambda i: (0, 0)),
                pl.BlockSpec((1, Cexp), lambda i: (0, 0)),
            ],
            out_specs=pl.BlockSpec((tm, Cexp), lambda i: (i, 0)),
        ),
        compiler_params=pltpu.CompilerParams(
            dimension_semantics=("parallel",),
            vmem_limit_bytes=_VMEM_LIMIT),
    )(x2d, w_bf16, bias)


# --------------------------------------------------------------------------
# depthwise kxk conv (+ folded BN bias) + hardswish, halo built in VMEM,
# also emits per-image channel sums (free SE global-average-pool).
# --------------------------------------------------------------------------
def _dw_kernel(x_ref, w_ref, b_ref, o_ref, sum_ref, xp_ref,
               *, k, stride, Ho, Wo, pad):
    H, W, C = x_ref.shape
    # Build the zero-padded image directly in VMEM scratch (no HBM pad pass).
    xp_ref[...] = jnp.zeros(xp_ref.shape, jnp.float32)
    xp_ref[pad:pad + H, pad:pad + W, :] = x_ref[...].astype(jnp.float32)
    xp = xp_ref[...]
    w = w_ref[...]
    acc = jnp.zeros((Ho, Wo, C), jnp.float32)
    # TODO(synk): replace the offset/strided value slices with pltpu.roll-based
    #             shifted row slabs (XLU), and add an Ho-row grid axis with a
    #             (k-1)-row halo for large spatial extents (v7x 64 MiB VMEM).
    for kh in range(k):
        for kw in range(k):
            patch = xp[kh: kh + stride * (Ho - 1) + 1: stride,
                       kw: kw + stride * (Wo - 1) + 1: stride, :]
            acc = acc + patch * w[kh, kw, :]
    y = _hardswish(acc + b_ref[...])
    o_ref[...] = y.astype(o_ref.dtype)
    sum_ref[...] = jnp.sum(y, axis=(0, 1)).reshape(1, C)


def depthwise_conv(x, w, bias, *, k, stride):
    B, H, W, C = x.shape
    pad = k // 2
    Ho = (H + 2 * pad - k) // stride + 1
    Wo = (W + 2 * pad - k) // stride + 1
    kernel = functools.partial(_dw_kernel, k=k, stride=stride, Ho=Ho, Wo=Wo, pad=pad)
    y, sums = pl.pallas_call(
        kernel,
        out_shape=(jax.ShapeDtypeStruct((B, Ho, Wo, C), jnp.bfloat16),
                   jax.ShapeDtypeStruct((B, 1, C), jnp.float32)),
        grid_spec=pltpu.PrefetchScalarGridSpec(
            num_scalar_prefetch=0,
            grid=(B,),
            in_specs=[
                pl.BlockSpec((pl.Squeezed(), H, W, C), lambda b: (b, 0, 0, 0)),
                pl.BlockSpec((k, k, C), lambda b: (0, 0, 0)),
                pl.BlockSpec((1, C), lambda b: (0, 0)),
            ],
            out_specs=[
                pl.BlockSpec((pl.Squeezed(), Ho, Wo, C), lambda b: (b, 0, 0, 0)),
                pl.BlockSpec((pl.Squeezed(), 1, C), lambda b: (b, 0, 0)),
            ],
            scratch_shapes=[pltpu.VMEM((H + 2 * pad, W + 2 * pad, C), jnp.float32)],
        ),
        compiler_params=pltpu.CompilerParams(
            dimension_semantics=("parallel",),
            vmem_limit_bytes=_VMEM_LIMIT),
    )(x, w, bias)
    return y, sums, Ho, Wo


# --------------------------------------------------------------------------
# project 1x1 conv (+ folded BN bias) with fused SE scale and residual
# --------------------------------------------------------------------------
def _make_project_kernel(has_res):
    def kernel(*refs):
        if has_res:
            x_ref, w_ref, b_ref, s_ref, r_ref, o_ref = refs
        else:
            x_ref, w_ref, b_ref, s_ref, o_ref = refs
            r_ref = None
        xs = x_ref[...] * s_ref[...].astype(jnp.bfloat16)     # SE excitation fused
        y = jnp.dot(xs, w_ref[...], preferred_element_type=jnp.float32)
        y = y + b_ref[...]
        if has_res:
            y = y + r_ref[...]
        o_ref[...] = y
    return kernel


def project_conv(x3d, w_bf16, bias, se_scale, res3d=None):
    B, S, Cexp = x3d.shape
    Cout = w_bf16.shape[1]
    tm = _pick_tile(S, parallel_other=B)
    nb = pl.cdiv(S, tm)
    has_res = res3d is not None
    kernel = _make_project_kernel(has_res)

    in_specs = [
        pl.BlockSpec((pl.Squeezed(), tm, Cexp), lambda b, i: (b, i, 0)),
        pl.BlockSpec((Cexp, Cout), lambda b, i: (0, 0)),
        pl.BlockSpec((1, Cout), lambda b, i: (0, 0)),
        pl.BlockSpec((pl.Squeezed(), 1, Cexp), lambda b, i: (b, 0, 0)),
    ]
    args = [x3d, w_bf16, bias, se_scale]
    if has_res:
        in_specs.append(pl.BlockSpec((pl.Squeezed(), tm, Cout), lambda b, i: (b, i, 0)))
        args.append(res3d)

    return pl.pallas_call(
        kernel,
        out_shape=jax.ShapeDtypeStruct((B, S, Cout), jnp.float32),
        grid_spec=pltpu.PrefetchScalarGridSpec(
            num_scalar_prefetch=0,
            grid=(B, nb),
            in_specs=in_specs,
            out_specs=pl.BlockSpec((pl.Squeezed(), tm, Cout), lambda b, i: (b, i, 0)),
        ),
        compiler_params=pltpu.CompilerParams(
            dimension_semantics=("parallel", "parallel"),
            vmem_limit_bytes=_VMEM_LIMIT),
    )(*args)


# --------------------------------------------------------------------------
# MB_block forward
# --------------------------------------------------------------------------
def mb_block_forward_nhwc(x, p, *, kernal, stride):
    """x: (B, H, W, Cin) float32, NHWC (preferred when chaining blocks)."""
    B, H, W, Cin = x.shape
    Cexp = p["w1"].shape[1]
    Cout = p["w3"].shape[1]
    x = x.astype(jnp.float32)

    # fold eval-mode BN into conv weights/biases (tiny one-time XLA ops)
    w1, b1 = _fold_bn(p["w1"], p["b1"], p["bn1_g"], p["bn1_b"], p["bn1_m"], p["bn1_v"])
    w2, b2 = _fold_bn(p["w2"], p["b2"], p["bn2_g"], p["bn2_b"], p["bn2_m"], p["bn2_v"])
    w3, b3 = _fold_bn(p["w3"], p["b3"], p["bn3_g"], p["bn3_b"], p["bn3_m"], p["bn3_v"])

    # expand 1x1 conv + BN + hardswish
    y1 = expand_conv(x.reshape(B * H * W, Cin), w1.astype(jnp.bfloat16), b1)
    y1 = y1.reshape(B, H, W, Cexp)

    # depthwise kxk conv + BN + hardswish (also returns SE channel sums)
    y2, sums, Ho, Wo = depthwise_conv(y1, w2, b2, k=kernal, stride=stride)

    # SE squeeze/excite FCs on the tiny (B, Cexp) pooled vector (plain JAX)
    pooled = sums[:, 0, :] * (1.0 / (Ho * Wo))
    h = jnp.maximum(pooled @ p["se_w1"] + p["se_b1"], 0.0)
    se_scale = _hardsigmoid(h @ p["se_w2"] + p["se_b2"]).reshape(B, 1, Cexp)

    # project 1x1 conv + BN with SE scale and residual fused in
    use_res = (stride == 1 and Cin == Cout)
    res = x.reshape(B, H * W, Cin) if use_res else None
    out = project_conv(y2.reshape(B, Ho * Wo, Cexp), w3.astype(jnp.bfloat16), b3,
                       se_scale, res)
    return out.reshape(B, Ho, Wo, Cout)


def mb_block_forward(x_nchw, p, *, kernal, stride):
    # NCHW boundary for parity with the PyTorch module.
    x = jnp.transpose(x_nchw, (0, 2, 3, 1))
    out = mb_block_forward_nhwc(x, p, kernal=kernal, stride=stride)
    return jnp.transpose(out, (0, 3, 1, 2))


# --------------------------------------------------------------------------
# Pure-JAX f32 reference (same eval-mode BN semantics) for correctness check
# --------------------------------------------------------------------------
def mb_block_reference(x_nchw, p, *, kernal, stride):
    x = jnp.transpose(x_nchw, (0, 2, 3, 1)).astype(jnp.float32)
    B, H, W, Cin = x.shape
    Cexp = p["w1"].shape[1]
    Cout = p["w3"].shape[1]

    def bn(y, g, b, m, v, eps=1e-5):
        return (y - m) / jnp.sqrt(v + eps) * g + b

    y1 = jnp.einsum("bhwc,cd->bhwd", x, p["w1"]) + p["b1"]
    y1 = _hardswish(bn(y1, p["bn1_g"], p["bn1_b"], p["bn1_m"], p["bn1_v"]))

    pad = kernal // 2
    y2 = lax.conv_general_dilated(
        y1, p["w2"].reshape(kernal, kernal, 1, Cexp),
        window_strides=(stride, stride), padding=[(pad, pad), (pad, pad)],
        dimension_numbers=("NHWC", "HWIO", "NHWC"),
        feature_group_count=Cexp) + p["b2"]
    y2 = _hardswish(bn(y2, p["bn2_g"], p["bn2_b"], p["bn2_m"], p["bn2_v"]))

    pooled = jnp.mean(y2, axis=(1, 2))
    h = jnp.maximum(pooled @ p["se_w1"] + p["se_b1"], 0.0)
    s = _hardsigmoid(h @ p["se_w2"] + p["se_b2"])
    y3 = y2 * s[:, None, None, :]

    out = jnp.einsum("bhwc,cd->bhwd", y3, p["w3"]) + p["b3"]
    out = bn(out, p["bn3_g"], p["bn3_b"], p["bn3_m"], p["bn3_v"])
    if stride == 1 and Cin == Cout:
        out = out + x
    return jnp.transpose(out, (0, 3, 1, 2))


# --------------------------------------------------------------------------
# deterministic parameter construction
# --------------------------------------------------------------------------
def init_params(key, Cin, Cout, kernal, expand_ratio):
    Cexp = Cin * expand_ratio
    Cr = Cexp // 4
    ks = jax.random.split(key, 24)

    def rn(i, shape, s=0.2):
        return (s * jax.random.normal(ks[i], shape)).astype(jnp.float32)

    def pos(i, shape):
        return (0.5 + jax.random.uniform(ks[i], shape)).astype(jnp.float32)

    return {
        "w1": rn(0, (Cin, Cexp)), "b1": rn(1, (Cexp,)),
        "bn1_g": 1.0 + rn(2, (Cexp,)), "bn1_b": rn(3, (Cexp,)),
        "bn1_m": rn(4, (Cexp,)), "bn1_v": pos(5, (Cexp,)),
        "w2": rn(6, (kernal, kernal, Cexp)), "b2": rn(7, (Cexp,)),
        "bn2_g": 1.0 + rn(8, (Cexp,)), "bn2_b": rn(9, (Cexp,)),
        "bn2_m": rn(10, (Cexp,)), "bn2_v": pos(11, (Cexp,)),
        "se_w1": rn(12, (Cexp, Cr)), "se_b1": rn(13, (Cr,)),
        "se_w2": rn(14, (Cr, Cexp)), "se_b2": rn(15, (Cexp,)),
        "w3": rn(16, (Cexp, Cout)), "b3": rn(17, (Cout,)),
        "bn3_g": 1.0 + rn(18, (Cout,)), "bn3_b": rn(19, (Cout,)),
        "bn3_m": rn(20, (Cout,)), "bn3_v": pos(21, (Cout,)),
    }


if __name__ == "__main__":
    B, Cin, H, W = 2, 4, 16, 16
    Cout, kernal, stride, expand_ratio = 4, 3, 1, 4   # residual path active

    key = jax.random.PRNGKey(0)
    kx, kp = jax.random.split(key)
    x = jax.random.normal(kx, (B, Cin, H, W), dtype=jnp.float32)
    params = init_params(kp, Cin, Cout, kernal, expand_ratio)

    fwd = jax.jit(functools.partial(mb_block_forward, kernal=kernal, stride=stride))
    out = jax.block_until_ready(fwd(x, params))

    ref = mb_block_reference(x, params, kernal=kernal, stride=stride)
    err = float(jnp.max(jnp.abs(out - ref)))
    assert out.shape == (B, Cout, H, W), out.shape
    # bf16 MXU operands + bf16 HBM intermediates -> expected max abs err ~1e-2
    assert err < 5e-2, f"max abs err too large: {err}"
    print("KERNEL_OK")
</pallas_src>

<mosaic_0001>
module attributes {stable_mosaic.version = 11 : i64} {
  func.func @_expand_kernel(%arg0: i32, %arg1: memref<128x4xf32, #tpu.memory_space<vmem>>, %arg2: memref<4x16xbf16, #tpu.memory_space<vmem>>, %arg3: memref<1x16xf32, #tpu.memory_space<vmem>>, %arg4: memref<128x16xbf16, #tpu.memory_space<vmem>>) attributes {dimension_semantics = [#tpu.dimension_semantics<parallel>], iteration_bounds = array<i64: 4>, scalar_prefetch = 0 : i64, scratch_operands = 0 : i64, tpu.core_type = #tpu.core_type<tc>, window_params = [{transform_indices = @transform_0, window_bounds = array<i64: 128, 4>}, {pipeline_mode = #tpu.pipeline_mode<synchronous>, transform_indices = @transform_1, window_bounds = array<i64: 4, 16>}, {pipeline_mode = #tpu.pipeline_mode<synchronous>, transform_indices = @transform_2, window_bounds = array<i64: 1, 16>}, {transform_indices = @transform_3, window_bounds = array<i64: 128, 16>}]} {
    %c0 = arith.constant 0 : index
    %c0_0 = arith.constant 0 : index
    %0 = vector.load %arg1[%c0, %c0_0] : memref<128x4xf32, #tpu.memory_space<vmem>>, vector<128x4xf32>
    %1 = arith.truncf %0 : vector<128x4xf32> to vector<128x4xbf16>
    %c0_1 = arith.constant 0 : index
    %c0_2 = arith.constant 0 : index
    %2 = vector.load %arg2[%c0_1, %c0_2] : memref<4x16xbf16, #tpu.memory_space<vmem>>, vector<4x16xbf16>
    %cst = arith.constant dense<0.000000e+00> : vector<128x16xf32>
    %3 = tpu.matmul %1, %2, %cst {dimension_numbers = #tpu.dot_dimension_numbers<[1], [0], [0], [1], [0, 0, 1, 1], [], []>} : vector<128x4xbf16>, vector<4x16xbf16>, vector<128x16xf32> -> vector<128x16xf32>
    %c0_3 = arith.constant 0 : index
    %c0_4 = arith.constant 0 : index
    %4 = vector.load %arg3[%c0_3, %c0_4] : memref<1x16xf32, #tpu.memory_space<vmem>>, vector<1x16xf32>
    %5 = vector.broadcast %4 : vector<1x16xf32> to vector<128x16xf32>
    %6 = arith.addf %3, %5 : vector<128x16xf32>
    %cst_5 = arith.constant 3.000000e+00 : f32
    %7 = vector.broadcast %cst_5 : f32 to vector<128x16xf32>
    %8 = arith.addf %6, %7 : vector<128x16xf32>
    %cst_6 = arith.constant 0.000000e+00 : f32
    %cst_7 = arith.constant 6.000000e+00 : f32
    %9 = vector.broadcast %cst_6 : f32 to vector<128x16xf32>
    %10 = arith.maximumf %9, %8 : vector<128x16xf32>
    %11 = vector.broadcast %cst_7 : f32 to vector<128x16xf32>
    %12 = arith.minimumf %11, %10 : vector<128x16xf32>
    %13 = arith.mulf %6, %12 : vector<128x16xf32>
    %cst_8 = arith.constant 0.166666672 : f32
    %14 = vector.broadcast %cst_8 : f32 to vector<128x16xf32>
    %15 = arith.mulf %13, %14 : vector<128x16xf32>
    %16 = arith.truncf %15 : vector<128x16xf32> to vector<128x16xbf16>
    %c0_9 = arith.constant 0 : index
    %c0_10 = arith.constant 0 : index
    %17 = vector.load %arg4[%c0_9, %c0_10] : memref<128x16xbf16, #tpu.memory_space<vmem>>, vector<128x16xbf16>
    tpu.vector_store %arg4[%c0_9, %c0_10], %16 {strides = array<i32>} : memref<128x16xbf16, #tpu.memory_space<vmem>>, vector<128x16xbf16>,
    return
  }
  func.func @transform_0(%arg0: i32) -> (i32, i32) {
    %c0_i32 = arith.constant 0 : i32
    %c0_i32_0 = arith.constant 0 : i32
    return %arg0, %c0_i32 : i32, i32
  }
  func.func @transform_1(%arg0: i32) -> (i32, i32) {
    %c0_i32 = arith.constant 0 : i32
    %c0_i32_0 = arith.constant 0 : i32
    %c0_i32_1 = arith.constant 0 : i32
    return %c0_i32, %c0_i32_0 : i32, i32
  }
  func.func @transform_2(%arg0: i32) -> (i32, i32) {
    %c0_i32 = arith.constant 0 : i32
    %c0_i32_0 = arith.constant 0 : i32
    %c0_i32_1 = arith.constant 0 : i32
    return %c0_i32, %c0_i32_0 : i32, i32
  }
  func.func @transform_3(%arg0: i32) -> (i32, i32) {
    %c0_i32 = arith.constant 0 : i32
    %c0_i32_0 = arith.constant 0 : i32
    return %arg0, %c0_i32 : i32, i32
  }
}

module attributes {stable_mosaic.version = 11 : i64} {
  func.func @_dw_kernel(%arg0: i32, %arg1: memref<1x16x16x16xbf16, #tpu.memory_space<vmem>>, %arg2: memref<3x3x16xf32, #tpu.memory_space<vmem>>, %arg3: memref<1x16xf32, #tpu.memory_space<vmem>>, %arg4: memref<1x16x16x16xbf16, #tpu.memory_space<vmem>>, %arg5: memref<1x1x16xf32, #tpu.memory_space<vmem>>, %arg6: memref<18x18x16xf32, #tpu.memory_space<vmem>>) attributes {dimension_semantics = [#tpu.dimension_semantics<parallel>], iteration_bounds = array<i64: 2>, scalar_prefetch = 0 : i64, scratch_operands = 1 : i64, tpu.core_type = #tpu.core_type<tc>, window_params = [{transform_indices = @transform_0, window_bounds = array<i64: 1, 16, 16, 16>}, {pipeline_mode = #tpu.pipeline_mode<synchronous>, transform_indices = @transform_1, window_bounds = array<i64: 3, 3, 16>}, {pipeline_mode = #tpu.pipeline_mode<synchronous>, transform_indices = @transform_2, window_bounds = array<i64: 1, 16>}, {transform_indices = @transform_3, window_bounds = array<i64: 1, 16, 16, 16>}, {transform_indices = @transform_4, window_bounds = array<i64: 1, 1, 16>}]} {
    %cst = arith.constant 0.000000e+00 : f32
    %0 = vector.broadcast %cst : f32 to vector<18x18x16xf32>
    %c0 = arith.constant 0 : index
    %c0_0 = arith.constant 0 : index
    %c0_1 = arith.constant 0 : index
    %1 = vector.load %arg6[%c0, %c0_0, %c0_1] : memref<18x18x16xf32, #tpu.memory_space<vmem>>, vector<18x18x16xf32>
    tpu.vector_store %arg6[%c0, %c0_0, %c0_1], %0 {strides = array<i32>} : memref<18x18x16xf32, #tpu.memory_space<vmem>>, vector<18x18x16xf32>,
    %c0_2 = arith.constant 0 : index
    %c0_3 = arith.constant 0 : index
    %c0_4 = arith.constant 0 : index
    %c0_5 = arith.constant 0 : index
    %2 = vector.load %arg1[%c0_2, %c0_3, %c0_4, %c0_5] : memref<1x16x16x16xbf16, #tpu.memory_space<vmem>>, vector<1x16x16x16xbf16>
    %3 = vector.shape_cast %2 : vector<1x16x16x16xbf16> to vector<16x16x16xbf16>
    %4 = arith.extf %3 : vector<16x16x16xbf16> to vector<16x16x16xf32>
    %c1 = arith.constant 1 : index
    %c1_6 = arith.constant 1 : index
    %c0_7 = arith.constant 0 : index
    %5 = vector.load %arg6[%c1, %c1_6, %c0_7] : memref<18x18x16xf32, #tpu.memory_space<vmem>>, vector<16x16x16xf32>
    tpu.vector_store %arg6[%c1, %c1_6, %c0_7], %4 {strides = array<i32>} : memref<18x18x16xf32, #tpu.memory_space<vmem>>, vector<16x16x16xf32>,
    %c0_8 = arith.constant 0 : index
    %c0_9 = arith.constant 0 : index
    %c0_10 = arith.constant 0 : index
    %6 = vector.load %arg6[%c0_8, %c0_9, %c0_10] : memref<18x18x16xf32, #tpu.memory_space<vmem>>, vector<18x18x16xf32>
    %c0_11 = arith.constant 0 : index
    %c0_12 = arith.constant 0 : index
    %c0_13 = arith.constant 0 : index
    %7 = vector.load %arg2[%c0_11, %c0_12, %c0_13] : memref<3x3x16xf32, #tpu.memory_space<vmem>>, vector<3x3x16xf32>
    %cst_14 = arith.constant 0.000000e+00 : f32
    %8 = vector.broadcast %cst_14 : f32 to vector<16x16x16xf32>
    %9 = vector.extract_strided_slice %6 {offsets = [0, 0, 0], sizes = [16, 16, 16], strides = [1, 1, 1]} : vector<18x18x16xf32> to vector<16x16x16xf32>
    %10 = vector.extract_strided_slice %7 {offsets = [0, 0, 0], sizes = [1, 1, 16], strides = [1, 1, 1]} : vector<3x3x16xf32> to vector<1x1x16xf32>
    %11 = vector.shape_cast %10 : vector<1x1x16xf32> to vector<16xf32>
    %12 = vector.shape_cast %11 : vector<16xf32> to vector<1x1x16xf32>
    %13 = vector.broadcast %12 : vector<1x1x16xf32> to vector<16x16x16xf32>
    %14 = arith.mulf %9, %13 : vector<16x16x16xf32>
    %15 = arith.addf %8, %14 : vector<16x16x16xf32>
    %16 = vector.extract_strided_slice %6 {offsets = [0, 1, 0], sizes = [16, 16, 16], strides = [1, 1, 1]} : vector<18x18x16xf32> to vector<16x16x16xf32>
    %17 = vector.extract_strided_slice %7 {offsets = [0, 1, 0], sizes = [1, 1, 16], strides = [1, 1, 1]} : vector<3x3x16xf32> to vector<1x1x16xf32>
    %18 = vector.shape_cast %17 : vector<1x1x16xf32> to vector<16xf32>
    %19 = vector.shape_cast %18 : vector<16xf32> to vector<1x1x16xf32>
    %20 = vector.broadcast %19 : vector<1x1x16xf32> to vector<16x16x16xf32>
    %21 = arith.mulf %16, %20 : vector<16x16x16xf32>
    %22 = arith.addf %15, %21 : vector<16x16x16xf32>
    %23 = vector.extract_strided_slice %6 {offsets = [0, 2, 0], sizes = [16, 16, 16], strides = [1, 1, 1]} : vector<18x18x16xf32> to vector<16x16x16xf32>
    %24 = vector.extract_strided_slice %7 {offsets = [0, 2, 0], sizes = [1, 1, 16], strides = [1, 1, 1]} : vector<3x3x16xf32> to vector<1x1x16xf32>
    %25 = vector.shape_cast %24 : vector<1x1x16xf32> to vector<16xf32>
    %26 = vector.shape_cast %25 : vector<16xf32> to vector<1x1x16xf32>
    %27 = vector.broadcast %26 : vector<1x1x16xf32> to vector<16x16x16xf32>
    %28 = arith.mulf %23, %27 : vector<16x16x16xf32>
    %29 = arith.addf %22, %28 : vector<16x16x16xf32>
    %30 = vector.extract_strided_slice %6 {offsets = [1, 0, 0], sizes = [16, 16, 16], strides = [1, 1, 1]} : vector<18x18x16xf32> to vector<16x16x16xf32>
    %31 = vector.extract_strided_slice %7 {offsets = [1, 0, 0], sizes = [1, 1, 16], strides = [1, 1, 1]} : vector<3x3x16xf32> to vector<1x1x16xf32>
    %32 = vector.shape_cast %31 : vector<1x1x16xf32> to vector<16xf32>
    %33 = vector.shape_cast %32 : vector<16xf32> to vector<1x1x16xf32>
    %34 = vector.broadcast %33 : vector<1x1x16xf32> to vector<16x16x16xf32>
    %35 = arith.mulf %30, %34 : vector<16x16x16xf32>
    %36 = arith.addf %29, %35 : vector<16x16x16xf32>
    %37 = vector.extract_strided_slice %6 {offsets = [1, 1, 0], sizes = [16, 16, 16], strides = [1, 1, 1]} : vector<18x18x16xf32> to vector<16x16x16xf32>
    %38 = vector.extract_strided_slice %7 {offsets = [1, 1, 0], sizes = [1, 1, 16], strides = [1, 1, 1]} : vector<3x3x16xf32> to vector<1x1x16xf32>
    %39 = vector.shape_cast %38 : vector<1x1x16xf32> to vector<16xf32>
    %40 = vector.shape_cast %39 : vector<16xf32> to vector<1x1x16xf32>
    %41 = vector.broadcast %40 : vector<1x1x16xf32> to vector<16x16x16xf32>
    %42 = arith.mulf %37, %41 : vector<16x16x16xf32>
    %43 = arith.addf %36, %42 : vector<16x16x16xf32>
    %44 = vector.extract_strided_slice %6 {offsets = [1, 2, 0], sizes = [16, 16, 16], strides = [1, 1, 1]} : vector<18x18x16xf32> to vector<16x16x16xf32>
    %45 = vector.extract_strided_slice %7 {offsets = [1, 2, 0], sizes = [1, 1, 16], strides = [1, 1, 1]} : vector<3x3x16xf32> to vector<1x1x16xf32>
    %46 = vector.shape_cast %45 : vector<1x1x16xf32> to vector<16xf32>
    %47 = vector.shape_cast %46 : vector<16xf32> to vector<1x1x16xf32>
    %48 = vector.broadcast %47 : vector<1x1x16xf32> to vector<16x16x16xf32>
    %49 = arith.mulf %44, %48 : vector<16x16x16xf32>
    %50 = arith.addf %43, %49 : vector<16x16x16xf32>
    %51 = vector.extract_strided_slice %6 {offsets = [2, 0, 0], sizes = [16, 16, 16], strides = [1, 1, 1]} : vector<18x18x16xf32> to vector<16x16x16xf32>
    %52 = vector.extract_strided_slice %7 {offsets = [2, 0, 0], sizes = [1, 1, 16], strides = [1, 1, 1]} : vector<3x3x16xf32> to vector<1x1x16xf32>
    %53 = vector.shape_cast %52 : vector<1x1x16xf32> to vector<16xf32>
    %54 = vector.shape_cast %53 : vector<16xf32> to vector<1x1x16xf32>
    %55 = vector.broadcast %54 : vector<1x1x16xf32> to vector<16x16x16xf32>
    %56 = arith.mulf %51, %55 : vector<16x16x16xf32>
    %57 = arith.addf %50, %56 : vector<16x16x16xf32>
    %58 = vector.extract_strided_slice %6 {offsets = [2, 1, 0], sizes = [16, 16, 16], strides = [1, 1, 1]} : vector<18x18x16xf32> to vector<16x16x16xf32>
    %59 = vector.extract_strided_slice %7 {offsets = [2, 1, 0], sizes = [1, 1, 16], strides = [1, 1, 1]} : vector<3x3x16xf32> to vector<1x1x16xf32>
    %60 = vector.shape_cast %59 : vector<1x1x16xf32> to vector<16xf32>
    %61 = vector.shape_cast %60 : vector<16xf32> to vector<1x1x16xf32>
    %62 = vector.broadcast %61 : vector<1x1x16xf32> to vector<16x16x16xf32>
    %63 = arith.mulf %58, %62 : vector<16x16x16xf32>
    %64 = arith.addf %57, %63 : vector<16x16x16xf32>
    %65 = vector.extract_strided_slice %6 {offsets = [2, 2, 0], sizes = [16, 16, 16], strides = [1, 1, 1]} : vector<18x18x16xf32> to vector<16x16x16xf32>
    %66 = vector.extract_strided_slice %7 {offsets = [2, 2, 0], sizes = [1, 1, 16], strides = [1, 1, 1]} : vector<3x3x16xf32> to vector<1x1x16xf32>
    %67 = vector.shape_cast %66 : vector<1x1x16xf32> to vector<16xf32>
    %68 = vector.shape_cast %67 : vector<16xf32> to vector<1x1x16xf32>
    %69 = vector.broadcast %68 : vector<1x1x16xf32> to vector<16x16x16xf32>
    %70 = arith.mulf %65, %69 : vector<16x16x16xf32>
    %71 = arith.addf %64, %70 : vector<16x16x16xf32>
    %c0_15 = arith.constant 0 : index
    %c0_16 = arith.constant 0 : index
    %72 = vector.load %arg3[%c0_15, %c0_16] : memref<1x16xf32, #tpu.memory_space<vmem>>, vector<1x16xf32>
    %73 = vector.shape_cast %72 : vector<1x16xf32> to vector<1x1x16xf32>
    %74 = vector.broadcast %73 : vector<1x1x16xf32> to vector<16x16x16xf32>
    %75 = arith.addf %71, %74 : vector<16x16x16xf32>
    %cst_17 = arith.constant 3.000000e+00 : f32
    %76 = vector.broadcast %cst_17 : f32 to vector<16x16x16xf32>
    %77 = arith.addf %75, %76 : vector<16x16x16xf32>
    %cst_18 = arith.constant 0.000000e+00 : f32
    %cst_19 = arith.constant 6.000000e+00 : f32
    %78 = vector.broadcast %cst_18 : f32 to vector<16x16x16xf32>
    %79 = arith.maximumf %78, %77 : vector<16x16x16xf32>
    %80 = vector.broadcast %cst_19 : f32 to vector<16x16x16xf32>
    %81 = arith.minimumf %80, %79 : vector<16x16x16xf32>
    %82 = arith.mulf %75, %81 : vector<16x16x16xf32>
    %cst_20 = arith.constant 0.166666672 : f32
    %83 = vector.broadcast %cst_20 : f32 to vector<16x16x16xf32>
    %84 = arith.mulf %82, %83 : vector<16x16x16xf32>
    %85 = arith.truncf %84 : vector<16x16x16xf32> to vector<16x16x16xbf16>
    %c0_21 = arith.constant 0 : index
    %c0_22 = arith.constant 0 : index
    %c0_23 = arith.constant 0 : index
    %c0_24 = arith.constant 0 : index
    %86 = vector.load %arg4[%c0_21, %c0_22, %c0_23, %c0_24] : memref<1x16x16x16xbf16, #tpu.memory_space<vmem>>, vector<1x16x16x16xbf16>
    %87 = vector.shape_cast %86 : vector<1x16x16x16xbf16> to vector<16x16x16xbf16>
    %88 = vector.shape_cast %85 : vector<16x16x16xbf16> to vector<1x16x16x16xbf16>
    tpu.vector_store %arg4[%c0_21, %c0_22, %c0_23, %c0_24], %88 {strides = array<i32>} : memref<1x16x16x16xbf16, #tpu.memory_space<vmem>>, vector<1x16x16x16xbf16>,
    %cst_25 = arith.constant dense<0.000000e+00> : vector<16xf32>
    %89 = vector.multi_reduction <add>, %84, %cst_25 [0, 1] : vector<16x16x16xf32> to vector<16xf32>
    %90 = vector.shape_cast %89 : vector<16xf32> to vector<1x16xf32>
    %c0_26 = arith.constant 0 : index
    %c0_27 = arith.constant 0 : index
    %c0_28 = arith.constant 0 : index
    %91 = vector.load %arg5[%c0_26, %c0_27, %c0_28] : memref<1x1x16xf32, #tpu.memory_space<vmem>>, vector<1x1x16xf32>
    %92 = vector.shape_cast %91 : vector<1x1x16xf32> to vector<1x16xf32>
    %93 = vector.shape_cast %90 : vector<1x16xf32> to vector<1x1x16xf32>
    tpu.vector_store %arg5[%c0_26, %c0_27, %c0_28], %93 {strides = array<i32>} : memref<1x1x16xf32, #tpu.memory_space<vmem>>, vector<1x1x16xf32>,
    return
  }
  func.func @transform_0(%arg0: i32) -> (i32, i32, i32, i32) {
    %c0_i32 = arith.constant 0 : i32
    %c0_i32_0 = arith.constant 0 : i32
    %c0_i32_1 = arith.constant 0 : i32
    %c0_i32_2 = arith.constant 0 : i32
    return %arg0, %c0_i32, %c0_i32_0, %c0_i32_1 : i32, i32, i32, i32
  }
  func.func @transform_1(%arg0: i32) -> (i32, i32, i32) {
    %c0_i32 = arith.constant 0 : i32
    %c0_i32_0 = arith.constant 0 : i32
    %c0_i32_1 = arith.constant 0 : i32
    %c0_i32_2 = arith.constant 0 : i32
    return %c0_i32, %c0_i32_0, %c0_i32_1 : i32, i32, i32
  }
  func.func @transform_2(%arg0: i32) -> (i32, i32) {
    %c0_i32 = arith.constant 0 : i32
    %c0_i32_0 = arith.constant 0 : i32
    %c0_i32_1 = arith.constant 0 : i32
    return %c0_i32, %c0_i32_0 : i32, i32
  }
  func.func @transform_3(%arg0: i32) -> (i32, i32, i32, i32) {
    %c0_i32 = arith.constant 0 : i32
    %c0_i32_0 = arith.constant 0 : i32
    %c0_i32_1 = arith.constant 0 : i32
    %c0_i32_2 = arith.constant 0 : i32
    return %arg0, %c0_i32, %c0_i32_0, %c0_i32_1 : i32, i32, i32, i32
  }
  func.func @transform_4(%arg0: i32) -> (i32, i32, i32) {
    %c0_i32 = arith.constant 0 : i32
    %c0_i32_0 = arith.constant 0 : i32
    %c0_i32_1 = arith.constant 0 : i32
    return %arg0, %c0_i32, %c0_i32_0 : i32, i32, i32
  }
}

module attributes {stable_mosaic.version = 11 : i64} {
  func.func @kernel(%arg0: i32, %arg1: i32, %arg2: memref<1x128x16xbf16, #tpu.memory_space<vmem>>, %arg3: memref<16x4xbf16, #tpu.memory_space<vmem>>, %arg4: memref<1x4xf32, #tpu.memory_space<vmem>>, %arg5: memref<1x1x16xf32, #tpu.memory_space<vmem>>, %arg6: memref<1x128x4xf32, #tpu.memory_space<vmem>>, %arg7: memref<1x128x4xf32, #tpu.memory_space<vmem>>) attributes {dimension_semantics = [#tpu.dimension_semantics<parallel>, #tpu.dimension_semantics<parallel>], iteration_bounds = array<i64: 2, 2>, scalar_prefetch = 0 : i64, scratch_operands = 0 : i64, tpu.core_type = #tpu.core_type<tc>, window_params = [{transform_indices = @transform_0, window_bounds = array<i64: 1, 128, 16>}, {pipeline_mode = #tpu.pipeline_mode<synchronous>, transform_indices = @transform_1, window_bounds = array<i64: 16, 4>}, {pipeline_mode = #tpu.pipeline_mode<synchronous>, transform_indices = @transform_2, window_bounds = array<i64: 1, 4>}, {transform_indices = @transform_3, window_bounds = array<i64: 1, 1, 16>}, {transform_indices = @transform_4, window_bounds = array<i64: 1, 128, 4>}, {transform_indices = @transform_5, window_bounds = array<i64: 1, 128, 4>}]} {
    %c0 = arith.constant 0 : index
    %c0_0 = arith.constant 0 : index
    %c0_1 = arith.constant 0 : index
    %0 = vector.load %arg2[%c0, %c0_0, %c0_1] : memref<1x128x16xbf16, #tpu.memory_space<vmem>>, vector<1x128x16xbf16>
    %1 = vector.shape_cast %0 : vector<1x128x16xbf16> to vector<128x16xbf16>
    %c0_2 = arith.constant 0 : index
    %c0_3 = arith.constant 0 : index
    %c0_4 = arith.constant 0 : index
    %2 = vector.load %arg5[%c0_2, %c0_3, %c0_4] : memref<1x1x16xf32, #tpu.memory_space<vmem>>, vector<1x1x16xf32>
    %3 = vector.shape_cast %2 : vector<1x1x16xf32> to vector<1x16xf32>
    %4 = arith.truncf %3 : vector<1x16xf32> to vector<1x16xbf16>
    %5 = vector.broadcast %4 : vector<1x16xbf16> to vector<128x16xbf16>
    %6 = arith.mulf %1, %5 : vector<128x16xbf16>
    %c0_5 = arith.constant 0 : index
    %c0_6 = arith.constant 0 : index
    %7 = vector.load %arg3[%c0_5, %c0_6] : memref<16x4xbf16, #tpu.memory_space<vmem>>, vector<16x4xbf16>
    %cst = arith.constant dense<0.000000e+00> : vector<128x4xf32>
    %8 = tpu.matmul %6, %7, %cst {dimension_numbers = #tpu.dot_dimension_numbers<[1], [0], [0], [1], [0, 0, 1, 1], [], []>} : vector<128x16xbf16>, vector<16x4xbf16>, vector<128x4xf32> -> vector<128x4xf32>
    %c0_7 = arith.constant 0 : index
    %c0_8 = arith.constant 0 : index
    %9 = vector.load %arg4[%c0_7, %c0_8] : memref<1x4xf32, #tpu.memory_space<vmem>>, vector<1x4xf32>
    %10 = vector.broadcast %9 : vector<1x4xf32> to vector<128x4xf32>
    %11 = arith.addf %8, %10 : vector<128x4xf32>
    %c0_9 = arith.constant 0 : index
    %c0_10 = arith.constant 0 : index
    %c0_11 = arith.constant 0 : index
    %12 = vector.load %arg6[%c0_9, %c0_10, %c0_11] : memref<1x128x4xf32, #tpu.memory_space<vmem>>, vector<1x128x4xf32>
    %13 = vector.shape_cast %12 : vector<1x128x4xf32> to vector<128x4xf32>
    %14 = arith.addf %11, %13 : vector<128x4xf32>
    %c0_12 = arith.constant 0 : index
    %c0_13 = arith.constant 0 : index
    %c0_14 = arith.constant 0 : index
    %15 = vector.load %arg7[%c0_12, %c0_13, %c0_14] : memref<1x128x4xf32, #tpu.memory_space<vmem>>, vector<1x128x4xf32>
    %16 = vector.shape_cast %15 : vector<1x128x4xf32> to vector<128x4xf32>
    %17 = vector.shape_cast %14 : vector<128x4xf32> to vector<1x128x4xf32>
    tpu.vector_store %arg7[%c0_12, %c0_13, %c0_14], %17 {strides = array<i32>} : memref<1x128x4xf32, #tpu.memory_space<vmem>>, vector<1x128x4xf32>,
    return
  }
  func.func @transform_0(%arg0: i32, %arg1: i32) -> (i32, i32, i32) {
    %c0_i32 = arith.constant 0 : i32
    %c0_i32_0 = arith.constant 0 : i32
    return %arg0, %arg1, %c0_i32 : i32, i32, i32
  }
  func.func @transform_1(%arg0: i32, %arg1: i32) -> (i32, i32) {
    %c0_i32 = arith.constant 0 : i32
    %c0_i32_0 = arith.constant 0 : i32
    %c0_i32_1 = arith.constant 0 : i32
    return %c0_i32, %c0_i32_0 : i32, i32
  }
  func.func @transform_2(%arg0: i32, %arg1: i32) -> (i32, i32) {
    %c0_i32 = arith.constant 0 : i32
    %c0_i32_0 = arith.constant 0 : i32
    %c0_i32_1 = arith.constant 0 : i32
    return %c0_i32, %c0_i32_0 : i32, i32
  }
  func.func @transform_3(%arg0: i32, %arg1: i32) -> (i32, i32, i32) {
    %c0_i32 = arith.constant 0 : i32
    %c0_i32_0 = arith.constant 0 : i32
    %c0_i32_1 = arith.constant 0 : i32
    return %arg0, %c0_i32, %c0_i32_0 : i32, i32, i32
  }
  func.func @transform_4(%arg0: i32, %arg1: i32) -> (i32, i32, i32) {
    %c0_i32 = arith.constant 0 : i32
    %c0_i32_0 = arith.constant 0 : i32
    return %arg0, %arg1, %c0_i32 : i32, i32, i32
  }
  func.func @transform_5(%arg0: i32, %arg1: i32) -> (i32, i32, i32) {
    %c0_i32 = arith.constant 0 : i32
    %c0_i32_0 = arith.constant 0 : i32
    return %arg0, %arg1, %c0_i32 : i32, i32, i32
  }
}

</mosaic_0001>

<llo_original>
// kernel: mb_block_forward.5
$region0: #{mb_block_forward.5}
  #allocation0 [shape = 'u32[]', space=smem, size = 0x4, offset = 0x4, fixed_abs, tag = 'smem constant byte address 0x4 - core index']
  #allocation1 [shape = 'u32[144,128]{1,0:T(1,128)}', space=vmem, size = 0x12000, scoped, tag = 'internal scratch']
  %s0 = inlined_call_operand.vmem [shape: bf16[2,256,16], index: 0, kind: input, shape index: {}]
  %s1 = inlined_call_operand.vmem [shape: bf16[16,4], index: 1, kind: input, shape index: {}]
  %s2 = inlined_call_operand.vmem [shape: f32[1,4], index: 2, kind: input, shape index: {}]
  %s3 = inlined_call_operand.vmem [shape: f32[2,1,16], index: 3, kind: input, shape index: {}]
  %s4 = inlined_call_operand.vmem [shape: f32[2,256,4], index: 4, kind: input, shape index: {}]
  %s5 = inlined_call_operand.vmem [shape: f32[2,256,4], index: 5, kind: output, shape index: {}]
  %s6 = sld [smem:[#allocation0]]
  $region53: #{mb_block_forward.5} parent=0
    _
  %s8 = ssub.s32 1, %s6
  %s9 = scalar_select 0, %s8, %s6
  loop: start=0, step=1, limit=6
  $region2: #{mb_block_forward.5} parent=0 // loop_pre_header
    _
  $region3: #{mb_block_forward.5} parent=0 // loop_header
    %s11 = sphi 0, %s15
    %p12 = scmp.ge.s32.totalorder %s11, 6
    %s18 = sphi 0, %s30
    %s19 = sphi 0, %s26
    %s20 = sphi 0, %s18
    %s21 = sphi 0, %s19
    %s22 = sphi 0, %s20
    %s23 = sphi 0, %s21
    %s35 = sphi 0, %s37
    %s38 = sphi 0, %s35
    %s39 = sphi 0, %s38
    %s55 = sphi 0, %s39
    %s59 = sphi 0, %s59
    %s61 = sphi 0, %s59
    %s62 = sphi 0, %s61
    %s76 = sphi 0, %s62
    %s80 = sphi 0, %s80
    %s82 = sphi 0, %s80
    %s83 = sphi 0, %s82
    %s97 = sphi 0, %s83
    %s103 = sphi 0, %s105
    %s106 = sphi 0, %s103
    %s107 = sphi 0, %s106
    %s123 = sphi 0, %s107
    %s131 = sphi 0, %s133
    %s134 = sphi 0, %s131
    %s135 = sphi 0, %s134
    %s151 = sphi 0, %s135
    %s159 = sphi 0, %s161
    %s162 = sphi 0, %s159
    %s163 = sphi 0, %s162
    %s179 = sphi 0, %s163
  $region4: #{mb_block_forward.5} parent=0 // loop_header_branch
    %14 = sbr.rel (%p12) target = $region8
  $region5: #{mb_block_forward.5} parent=0 // loop_body
    %s16 = ssub.s32 %s11, 1
    %s17 = ssub.s32 %s11, 2
    %s24 = sadd.s32 1, %s19
    %p25 = scmp.ge.s32.totalorder %s24, 2
    %s26 = scalar_select %p25, 0, %s24
    %s27 = sadd.s32 1, %s18
    %s28 = scalar_select %p25, %s27, %s18
    %p29 = scmp.ge.s32.totalorder %s28, 2
    %s30 = scalar_select %p29, 0, %s28
    %s31 = ssub.s32 %s18, %s30
    %s32 = ssub.s32 %s19, %s26
    %s33 = sor.u32 %s31, %s32
    %p34 = scmp.eq.s32.totalorder %s33, 0
    %s36 = sadd.s32 %s35, 1
    %s37 = scalar_select %p34, %s35, %s36
    %p40 = pneg %p34
    %p41 = scmp.eq.s32.totalorder %s11, 3
    %p42 = por %p40, %p41
    %p43 = scmp.ne.s32.totalorder %s35, %s38
    %p44 = scmp.eq.s32.totalorder %s11, 0
    %p45 = por %p43, %p44
    %p46 = scmp.ne.s32.totalorder %s35, %s38
    %p47 = scmp.eq.s32.totalorder %s16, 3
    %p48 = por %p46, %p47
    %p49 = scmp.ne.s32.totalorder %s38, %s39
    %p50 = scmp.eq.s32.totalorder %s16, 0
    %p51 = por %p49, %p50
    %p52 = scmp.ne.s32.totalorder %s38, %s39
    %p53 = scmp.eq.s32.totalorder %s17, 3
    %p54 = por %p52, %p53
    %p56 = scmp.ne.s32.totalorder %s39, %s55
    %p57 = scmp.eq.s32.totalorder %s17, 0
    %p58 = por %p56, %p57
    %s60 = sadd.s32 %s59, 1
    %p63 = scmp.eq.s32.totalorder %s11, 3
    %p64 = scmp.ne.s32.totalorder %s59, %s61
    %p65 = scmp.eq.s32.totalorder %s11, 0
    %p66 = por %p64, %p65
    %p67 = scmp.ne.s32.totalorder %s59, %s61
    %p68 = scmp.eq.s32.totalorder %s16, 3
    %p69 = por %p67, %p68
    %p70 = scmp.ne.s32.totalorder %s61, %s62
    %p71 = scmp.eq.s32.totalorder %s16, 0
    %p72 = por %p70, %p71
    %p73 = scmp.ne.s32.totalorder %s61, %s62
    %p74 = scmp.eq.s32.totalorder %s17, 3
    %p75 = por %p73, %p74
    %p77 = scmp.ne.s32.totalorder %s62, %s76
    %p78 = scmp.eq.s32.totalorder %s17, 0
    %p79 = por %p77, %p78
    %s81 = sadd.s32 %s80, 1
    %p84 = scmp.eq.s32.totalorder %s11, 3
    %p85 = scmp.ne.s32.totalorder %s80, %s82
    %p86 = scmp.eq.s32.totalorder %s11, 0
    %p87 = por %p85, %p86
    %p88 = scmp.ne.s32.totalorder %s80, %s82
    %p89 = scmp.eq.s32.totalorder %s16, 3
    %p90 = por %p88, %p89
    %p91 = scmp.ne.s32.totalorder %s82, %s83
    %p92 = scmp.eq.s32.totalorder %s16, 0
    %p93 = por %p91, %p92
    %p94 = scmp.ne.s32.totalorder %s82, %s83
    %p95 = scmp.eq.s32.totalorder %s17, 3
    %p96 = por %p94, %p95
    %p98 = scmp.ne.s32.totalorder %s83, %s97
    %p99 = scmp.eq.s32.totalorder %s17, 0
    %p100 = por %p98, %p99
    %s101 = ssub.s32 %s18, %s30
    %p102 = scmp.eq.s32.totalorder %s101, 0
    %s104 = sadd.s32 %s103, 1
    %s105 = scalar_select %p102, %s103, %s104
    %p108 = pneg %p102
    %p109 = scmp.eq.s32.totalorder %s11, 3
    %p110 = por %p108, %p109
    %p111 = scmp.ne.s32.totalorder %s103, %s106
    %p112 = scmp.eq.s32.totalorder %s11, 0
    %p113 = por %p111, %p112
    %p114 = scmp.ne.s32.totalorder %s103, %s106
    %p115 = scmp.eq.s32.totalorder %s16, 3
    %p116 = por %p114, %p115
    %p117 = scmp.ne.s32.totalorder %s106, %s107
    %p118 = scmp.eq.s32.totalorder %s16, 0
    %p119 = por %p117, %p118
    %p120 = scmp.ne.s32.totalorder %s106, %s107
    %p121 = scmp.eq.s32.totalorder %s17, 3
    %p122 = por %p120, %p121
    %p124 = scmp.ne.s32.totalorder %s107, %s123
    %p125 = scmp.eq.s32.totalorder %s17, 0
    %p126 = por %p124, %p125
    %s127 = ssub.s32 %s18, %s30
    %s128 = ssub.s32 %s19, %s26
    %s129 = sor.u32 %s127, %s128
    %p130 = scmp.eq.s32.totalorder %s129, 0
    %s132 = sadd.s32 %s131, 1
    %s133 = scalar_select %p130, %s131, %s132
    %p136 = pneg %p130
    %p137 = scmp.eq.s32.totalorder %s11, 3
    %p138 = por %p136, %p137
    %p139 = scmp.ne.s32.totalorder %s131, %s134
    %p140 = scmp.eq.s32.totalorder %s11, 0
    %p141 = por %p139, %p140
    %p142 = scmp.ne.s32.totalorder %s131, %s134
    %p143 = scmp.eq.s32.totalorder %s16, 3
    %p144 = por %p142, %p143
    %p145 = scmp.ne.s32.totalorder %s134, %s135
    %p146 = scmp.eq.s32.totalorder %s16, 0
    %p147 = por %p145, %p146
    %p148 = scmp.ne.s32.totalorder %s134, %s135
    %p149 = scmp.eq.s32.totalorder %s17, 3
    %p150 = por %p148, %p149
    %p152 = scmp.ne.s32.totalorder %s135, %s151
    %p153 = scmp.eq.s32.totalorder %s17, 0
    %p154 = por %p152, %p153
    %s155 = ssub.s32 %s18, %s30
    %s156 = ssub.s32 %s19, %s26
    %s157 = sor.u32 %s155, %s156
    %p158 = scmp.eq.s32.totalorder %s157, 0
    %s160 = sadd.s32 %s159, 1
    %s161 = scalar_select %p158, %s159, %s160
    %p164 = pneg %p158
    %p165 = scmp.eq.s32.totalorder %s11, 3
    %p166 = por %p164, %p165
    %p167 = scmp.ne.s32.totalorder %s159, %s162
    %p168 = scmp.eq.s32.totalorder %s11, 0
    %p169 = por %p167, %p168
    %p170 = scmp.ne.s32.totalorder %s159, %s162
    %p171 = scmp.eq.s32.totalorder %s16, 3
    %p172 = por %p170, %p171
    %p173 = scmp.ne.s32.totalorder %s162, %s163
    %p174 = scmp.eq.s32.totalorder %s16, 0
    %p175 = por %p173, %p174
    %p176 = scmp.ne.s32.totalorder %s162, %s163
    %p177 = scmp.eq.s32.totalorder %s17, 3
    %p178 = por %p176, %p177
    %p180 = scmp.ne.s32.totalorder %s163, %s179
    %p181 = scmp.eq.s32.totalorder %s17, 0
    %p182 = por %p180, %p181
    %p183 = scmp.le.s32.totalorder 1, %s11
    %p184 = scmp.lt.s32.totalorder %s11, 5
    %p185 = pnand %p183, %p184
    %p186 = pneg %p185
    // Predicated region
    $region9: #{mb_block_forward.5} parent=5 // pred_check
      _
    $region10: #{mb_block_forward.5} parent=5 // pred_check_branch
      %188 = sbr.rel (%p185) target = $region12
    $region11: #{mb_block_forward.5} parent=5 // pred_region
      %s189 = ssub.s32 %s11, 1
      // Predicated region
      $region13: #{mb_block_forward.5} parent=11 // pred_check
        %p190 = pneg %p72
      $region14: #{mb_block_forward.5} parent=11 // pred_check_branch
        %192 = sbr.rel (%p190) target = $region16
      $region15: #{mb_block_forward.5} parent=11 // pred_region
        _
      $region16: #{mb_block_forward.5} parent=11 // pred_fallthru
        _
      // Predicated region
      $region17: #{mb_block_forward.5} parent=11 // pred_check
        %p193 = pneg %p93
      $region18: #{mb_block_forward.5} parent=11 // pred_check_branch
        %195 = sbr.rel (%p193) target = $region20
      $region19: #{mb_block_forward.5} parent=11 // pred_region
        _
      $region20: #{mb_block_forward.5} parent=11 // pred_fallthru
        _
    $region12: #{mb_block_forward.5} parent=5 // pred_fallthru
      _
    %p196 = scmp.lt.s32.totalorder %s11, 4
    // Predicated region
    $region21: #{mb_block_forward.5} parent=5 // pred_check
      %p197 = pneg %p196
    $region22: #{mb_block_forward.5} parent=5 // pred_check_branch
      %199 = sbr.rel (%p197) target = $region24
    $region23: #{mb_block_forward.5} parent=5 // pred_region
      // Predicated region
      $region25: #{mb_block_forward.5} parent=23 // pred_check
        %p200 = pneg %p45
      $region26: #{mb_block_forward.5} parent=23 // pred_check_branch
        %202 = sbr.rel (%p200) target = $region28
      $region27: #{mb_block_forward.5} parent=23 // pred_region
        %s203 = smul.u32 16, %s19
        %p204 = scmp.lt.s32.totalorder %s18, 1
        %s205 = scalar_select %p204, %s18, 1
        %p206 = scmp.lt.s32.totalorder %s203, 31
        %s207 = scalar_select %p206, %s203, 31
        %s208 = smul.addr %s205, 32
        %s209 = sadd.s32 %s207, %s208
        %s210 = smul.addr %s209, 4
        %s211 = scalar_lea.vmem %s0, %s210
        %s212 = smul.u32 16, %s19
      $region28: #{mb_block_forward.5} parent=23 // pred_fallthru
        _
      // Predicated region
      $region29: #{mb_block_forward.5} parent=23 // pred_check
        %p213 = pneg %p113
      $region30: #{mb_block_forward.5} parent=23 // pred_check_branch
        %215 = sbr.rel (%p213) target = $region32
      $region31: #{mb_block_forward.5} parent=23 // pred_region
        %p216 = scmp.lt.s32.totalorder %s18, 1
        %s217 = scalar_select %p216, %s18, 1
        %s218 = scalar_lea.vmem %s3, %s217
      $region32: #{mb_block_forward.5} parent=23 // pred_fallthru
        _
      // Predicated region
      $region33: #{mb_block_forward.5} parent=23 // pred_check
        %p219 = pneg %p141
      $region34: #{mb_block_forward.5} parent=23 // pred_check_branch
        %221 = sbr.rel (%p219) target = $region36
      $region35: #{mb_block_forward.5} parent=23 // pred_region
        %s222 = smul.u32 16, %s19
        %p223 = scmp.lt.s32.totalorder %s18, 1
        %s224 = scalar_select %p223, %s18, 1
        %p225 = scmp.lt.s32.totalorder %s222, 31
        %s226 = scalar_select %p225, %s222, 31
        %s227 = smul.addr %s224, 32
        %s228 = sadd.s32 %s226, %s227
        %s229 = smul.addr %s228, 8
        %s230 = scalar_lea.vmem %s4, %s229
        %s231 = smul.u32 16, %s19
      $region36: #{mb_block_forward.5} parent=23 // pred_fallthru
        _
    $region24: #{mb_block_forward.5} parent=5 // pred_fallthru
      _
    %p232 = scmp.le.s32.totalorder 1, %s11
    %p233 = scmp.lt.s32.totalorder %s11, 5
    %p234 = pnand %p232, %p233
    %p235 = pneg %p234
    // Predicated region
    $region37: #{mb_block_forward.5} parent=5 // pred_check
      _
    $region38: #{mb_block_forward.5} parent=5 // pred_check_branch
      %237 = sbr.rel (%p234) target = $region40
    $region39: #{mb_block_forward.5} parent=5 // pred_region
      %s238 = ssub.s32 %s11, 1
      %s239 = smul.u32 16, %s21
      %p240 = scmp.lt.s32.totalorder %s20, 1
      %s241 = scalar_select %p240, %s20, 1
      %p242 = scmp.lt.s32.totalorder %s239, 31
      %s243 = scalar_select %p242, %s239, 31
      %s244 = smul.addr %s241, 32
      %s245 = sadd.s32 %s243, %s244
      %s246 = smul.addr %s245, 4
      %s247 = scalar_lea.vmem %s0, %s246
      %p248 = pneg %p51
      %p249 = pneg %p48
      %p250 = pneg %p72
      %p251 = pneg %p69
      %p252 = pneg %p93
      %p253 = pneg %p90
      %p254 = scmp.lt.s32.totalorder %s20, 1
      %s255 = scalar_select %p254, %s20, 1
      %s256 = scalar_lea.vmem %s3, %s255
      %p257 = pneg %p119
      %p258 = pneg %p116
      %s259 = smul.u32 16, %s21
      %p260 = scmp.lt.s32.totalorder %s20, 1
      %s261 = scalar_select %p260, %s20, 1
      %p262 = scmp.lt.s32.totalorder %s259, 31
      %s263 = scalar_select %p262, %s259, 31
      %s264 = smul.addr %s261, 32
      %s265 = sadd.s32 %s263, %s264
      %s266 = smul.addr %s265, 8
      %s267 = scalar_lea.vmem %s4, %s266
      %p268 = pneg %p147
      %p269 = pneg %p144
      %p270 = pneg %p175
      %p271 = pneg %p172
      %s272 = smul.u32 16, %s21
      %p273 = scmp.lt.s32.totalorder %s20, 1
      %s274 = scalar_select %p273, %s20, 1
      %p275 = scmp.lt.s32.totalorder %s272, 31
      %s276 = scalar_select %p275, %s272, 31
      %s277 = smul.addr %s274, 32
      %s278 = sadd.s32 %s276, %s277
      %s279 = smul.addr %s278, 8
      %s280 = scalar_lea.vmem %s5, %s279
      %s281 = smul.u32 16, %s21
      %p282 = scmp.lt.s32.totalorder %s20, 1
      %s283 = scalar_select %p282, %s20, 1
      %p284 = scmp.lt.s32.totalorder %s281, 31
      %s285 = scalar_select %p284, %s281, 31
      %s286 = smul.addr %s283, 32
      %s287 = sadd.s32 %s285, %s286
      %s288 = smul.addr %s287, 4
      %s289 = scalar_lea.vmem %s0, %s288
      %s290 = smul.u32 16, %s21
      %p291 = scmp.lt.s32.totalorder %s20, 1
      %s292 = scalar_select %p291, %s20, 1
      %s293 = scalar_lea.vmem %s3, %s292
      %s294 = smul.u32 16, %s21
      %p295 = scmp.lt.s32.totalorder %s20, 1
      %s296 = scalar_select %p295, %s20, 1
      %p297 = scmp.lt.s32.totalorder %s294, 31
      %s298 = scalar_select %p297, %s294, 31
      %s299 = smul.addr %s296, 32
      %s300 = sadd.s32 %s298, %s299
      %s301 = smul.addr %s300, 8
      %s302 = scalar_lea.vmem %s4, %s301
      %s303 = smul.u32 16, %s21
      %s304 = smul.u32 16, %s21
      %p305 = scmp.lt.s32.totalorder %s20, 1
      %s306 = scalar_select %p305, %s20, 1
      %p307 = scmp.lt.s32.totalorder %s304, 31
      %s308 = scalar_select %p307, %s304, 31
      %s309 = smul.addr %s306, 32
      %s310 = sadd.s32 %s308, %s309
      %s311 = smul.addr %s310, 8
      %s312 = scalar_lea.vmem %s5, %s311
      %s313 = smul.u32 16, %s21
      %v315 = vld [vmem:[%s289] sm:$0xf]
      %v316 = vld [vmem:[%s289 + $0x4] sm:$0xf]
      %v317 = vld [vmem:[%s289 + $0x8] sm:$0xf]
      %v318 = vld [vmem:[%s289 + $0xc] sm:$0xf]
      %v319 = vld [vmem:[%s289 + $0x10] sm:$0xf]
      %v320 = vld [vmem:[%s289 + $0x14] sm:$0xf]
      %v321 = vld [vmem:[%s289 + $0x18] sm:$0xf]
      %v322 = vld [vmem:[%s289 + $0x1c] sm:$0xf]
      %v323 = vld [vmem:[%s289 + $0x20] sm:$0xf]
      %v324 = vld [vmem:[%s289 + $0x24] sm:$0xf]
      %v325 = vld [vmem:[%s289 + $0x28] sm:$0xf]
      %v326 = vld [vmem:[%s289 + $0x2c] sm:$0xf]
      %v327 = vld [vmem:[%s289 + $0x30] sm:$0xf]
      %v328 = vld [vmem:[%s289 + $0x34] sm:$0xf]
      %v329 = vld [vmem:[%s289 + $0x38] sm:$0xf]
      %v330 = vld [vmem:[%s289 + $0x3c] sm:$0xf]
      %v331 = vld [vmem:[%s293] sm:$0x1]
      %v332 = vpack.c.bf16 %v331, %v331
      %v334 = vpack.i.b16 %v332, %v332
      %v336 = vlaneseq
      %v337 = vshrl.u32 %v336, 7
      %v338 = vsub.s32 0, %v337
      %v339 = vrot.slane %v334, %v338
      %v341 = vunpack.c.l.b16 %v339
      %v342 = vpack.c.b16 %v341, %v341
      %v344 = vmul.bf16 %v315, %v342
      %v345 = vmul.bf16 %v316, %v342
      %v346 = vmul.bf16 %v317, %v342
      %v347 = vmul.bf16 %v318, %v342
      %v348 = vmul.bf16 %v319, %v342
      %v349 = vmul.bf16 %v320, %v342
      %v350 = vmul.bf16 %v321, %v342
      %v351 = vmul.bf16 %v322, %v342
      %v352 = vmul.bf16 %v323, %v342
      %v353 = vmul.bf16 %v324, %v342
      %v354 = vmul.bf16 %v325, %v342
      %v355 = vmul.bf16 %v326, %v342
      %v356 = vmul.bf16 %v327, %v342
      %v357 = vmul.bf16 %v328, %v342
      %v358 = vmul.bf16 %v329, %v342
      %v359 = vmul.bf16 %v330, %v342
      %v360 = vld [vmem:[%s1] sm:$0xf]
      %v361 = vld [vmem:[%s1 + $0x4] sm:$0xf]
      %v362 = vld [vmem:[%s2] sm:$0x1]
      %v364 = vlaneseq
      %v365 = vshrl.u32 %v364, 7
      %v366 = vsub.s32 0, %v365
      %v367 = vrot.slane %v362, %v366
      %v385 = vunpack.c.l.b16 %v344
      %v386 = vunpack.c.l.b16 %v345
      %v387 = vunpack.c.l.b16 %v346
      %v388 = vunpack.c.l.b16 %v347
      %v389 = vunpack.c.l.b16 %v348
      %v390 = vunpack.c.l.b16 %v349
      %v391 = vunpack.c.l.b16 %v350
      %v392 = vunpack.c.l.b16 %v351
      %v393 = vunpack.c.l.b16 %v352
      %v394 = vunpack.c.l.b16 %v353
      %v395 = vunpack.c.l.b16 %v354
      %v396 = vunpack.c.l.b16 %v355
      %v397 = vunpack.c.l.b16 %v356
      %v398 = vunpack.c.l.b16 %v357
      %v399 = vunpack.c.l.b16 %v358
      %v400 = vunpack.c.l.b16 %v359
      %v401 = vpack.c.b16 %v386, %v385
      %v402 = vpack.c.b16 %v388, %v387
      %v403 = vpack.c.b16 %v390, %v389
      %v404 = vpack.c.b16 %v392, %v391
      %v405 = vpack.c.b16 %v394, %v393
      %v406 = vpack.c.b16 %v396, %v395
      %v407 = vpack.c.b16 %v398, %v397
      %v408 = vpack.c.b16 %v400, %v399
      %v411 = vunpack.c.l.b16 %v360
      %v412 = vunpack.c.l.b16 %v361
      %v413 = vpack.c.b16 %v412, %v411
      %vm415 = vcmask 130048
      %v417 = vsel %vm415, %v401, 0
      %v420 = vsel %vm415, %v402, 0
      %v423 = vsel %vm415, %v403, 0
      %v426 = vsel %vm415, %v404, 0
      %v429 = vsel %vm415, %v405, 0
      %v432 = vsel %vm415, %v406, 0
      %v435 = vsel %vm415, %v407, 0
      %v438 = vsel %vm415, %v408, 0
      %440 = vmatprep.subr.bf16.mxu0 0
      %441 = vmatpush1.bf16.msra.mxu0 %v413
      %442 = vmatprep.subr.bf16.mxu0 0
      %443 = vmatpush1.bf16.msra.mxu0 0
      %444 = vmatprep.subr.bf16.mxu0 0
      %445 = vmatpush1.bf16.msra.mxu0 0
      %446 = vmatprep.subr.bf16.mxu0 0
      %447 = vmatpush1.bf16.msra.mxu0 0
      %448 = vmatprep.subr.bf16.mxu0 0
      %449 = vmatpush1.bf16.msra.mxu0 0
      %450 = vmatprep.subr.bf16.mxu0 0
      %451 = vmatpush1.bf16.msra.mxu0 0
      %452 = vmatprep.subr.bf16.mxu0 0
      %453 = vmatpush1.bf16.msra.mxu0 0
      %454 = vmatprep.subr.bf16.mxu0 0
      %455 = vmatpush1.bf16.msra.mxu0 0
      %456 = vmatprep.subr.bf16.mxu0 0
      %457 = vmatpush1.bf16.msra.mxu0 0
      %458 = vmatprep.subr.bf16.mxu0 0
      %459 = vmatpush1.bf16.msra.mxu0 0
      %460 = vmatprep.subr.bf16.mxu0 0
      %461 = vmatpush1.bf16.msra.mxu0 0
      %462 = vmatprep.subr.bf16.mxu0 0
      %463 = vmatpush1.bf16.msra.mxu0 0
      %464 = vmatprep.subr.bf16.mxu0 0
      %465 = vmatpush1.bf16.msra.mxu0 0
      %466 = vmatprep.subr.bf16.mxu0 0
      %467 = vmatpush1.bf16.msra.mxu0 0
      %468 = vmatprep.subr.bf16.mxu0 0
      %469 = vmatpush1.bf16.msra.mxu0 0
      %470 = vmatprep.subr.bf16.mxu0 0
      %471 = vmatpush1.bf16.msra.mxu0 0
      %472 = vmatprep.mubr.bf16.mxu0 0
      %473 = vmatmul.mubr.bf16.gmra.mrb[0].mxu0 %v417
      %v474 = vpop.f32.mrb[0].mxu0
      %v475 = vadd.f32 %v367, %v474
      %v476 = vpop.f32.mrb[0].mxu0
      %v477 = vpop.f32.mrb[0].mxu0
      %v478 = vadd.f32 %v367, %v477
      %v479 = vpop.f32.mrb[0].mxu0
      %480 = vmatprep.mubr.bf16.mxu0 0
      %481 = vmatmul.mubr.bf16.gmra.mrb[0].mxu0 %v420
      %v482 = vpop.f32.mrb[0].mxu0
      %v483 = vadd.f32 %v367, %v482
      %v484 = vpop.f32.mrb[0].mxu0
      %v485 = vpop.f32.mrb[0].mxu0
      %v486 = vadd.f32 %v367, %v485
      %v487 = vpop.f32.mrb[0].mxu0
      %488 = vmatprep.mubr.bf16.mxu0 0
      %489 = vmatmul.mubr.bf16.gmra.mrb[0].mxu0 %v423
      %v490 = vpop.f32.mrb[0].mxu0
      %v491 = vadd.f32 %v367, %v490
      %v492 = vpop.f32.mrb[0].mxu0
      %v493 = vpop.f32.mrb[0].mxu0
      %v494 = vadd.f32 %v367, %v493
      %v495 = vpop.f32.mrb[0].mxu0
      %496 = vmatprep.mubr.bf16.mxu0 0
      %497 = vmatmul.mubr.bf16.gmra.mrb[0].mxu0 %v426
      %v498 = vpop.f32.mrb[0].mxu0
      %v499 = vadd.f32 %v367, %v498
      %v500 = vpop.f32.mrb[0].mxu0
      %v501 = vpop.f32.mrb[0].mxu0
      %v502 = vadd.f32 %v367, %v501
      %v503 = vpop.f32.mrb[0].mxu0
      %504 = vmatprep.mubr.bf16.mxu0 0
      %505 = vmatmul.mubr.bf16.gmra.mrb[0].mxu0 %v429
      %v506 = vpop.f32.mrb[0].mxu0
      %v507 = vadd.f32 %v367, %v506
      %v508 = vpop.f32.mrb[0].mxu0
      %v509 = vpop.f32.mrb[0].mxu0
      %v510 = vadd.f32 %v367, %v509
      %v511 = vpop.f32.mrb[0].mxu0
      %512 = vmatprep.mubr.bf16.mxu0 0
      %513 = vmatmul.mubr.bf16.gmra.mrb[0].mxu0 %v432
      %v514 = vpop.f32.mrb[0].mxu0
      %v515 = vadd.f32 %v367, %v514
      %v516 = vpop.f32.mrb[0].mxu0
      %v517 = vpop.f32.mrb[0].mxu0
      %v518 = vadd.f32 %v367, %v517
      %v519 = vpop.f32.mrb[0].mxu0
      %520 = vmatprep.mubr.bf16.mxu0 0
      %521 = vmatmul.mubr.bf16.gmra.mrb[0].mxu0 %v435
      %v522 = vpop.f32.mrb[0].mxu0
      %v523 = vadd.f32 %v367, %v522
      %v524 = vpop.f32.mrb[0].mxu0
      %v525 = vpop.f32.mrb[0].mxu0
      %v526 = vadd.f32 %v367, %v525
      %v527 = vpop.f32.mrb[0].mxu0
      %528 = vmatprep.mubr.bf16.mxu0 0
      %529 = vmatmul.mubr.bf16.gmra.mrb[0].mxu0 %v438
      %v530 = vpop.f32.mrb[0].mxu0
      %v531 = vadd.f32 %v367, %v530
      %v532 = vpop.f32.mrb[0].mxu0
      %v533 = vpop.f32.mrb[0].mxu0
      %v534 = vadd.f32 %v367, %v533
      %v535 = vpop.f32.mrb[0].mxu0
      %536 = vdwg.mxu0
      %v537 = vld [vmem:[%s302] sm:$0xff]
      %v538 = vld [vmem:[%s302 + $0x8] sm:$0xff]
      %v539 = vld [vmem:[%s302 + $0x10] sm:$0xff]
      %v540 = vld [vmem:[%s302 + $0x18] sm:$0xff]
      %v541 = vld [vmem:[%s302 + $0x20] sm:$0xff]
      %v542 = vld [vmem:[%s302 + $0x28] sm:$0xff]
      %v543 = vld [vmem:[%s302 + $0x30] sm:$0xff]
      %v544 = vld [vmem:[%s302 + $0x38] sm:$0xff]
      %v545 = vld [vmem:[%s302 + $0x40] sm:$0xff]
      %v546 = vld [vmem:[%s302 + $0x48] sm:$0xff]
      %v547 = vld [vmem:[%s302 + $0x50] sm:$0xff]
      %v548 = vld [vmem:[%s302 + $0x58] sm:$0xff]
      %v549 = vld [vmem:[%s302 + $0x60] sm:$0xff]
      %v550 = vld [vmem:[%s302 + $0x68] sm:$0xff]
      %v551 = vld [vmem:[%s302 + $0x70] sm:$0xff]
      %v552 = vld [vmem:[%s302 + $0x78] sm:$0xff]
      %v553 = vadd.f32 %v475, %v537
      %v554 = vadd.f32 %v478, %v538
      %v555 = vadd.f32 %v483, %v539
      %v556 = vadd.f32 %v486, %v540
      %v557 = vadd.f32 %v491, %v541
      %v558 = vadd.f32 %v494, %v542
      %v559 = vadd.f32 %v499, %v543
      %v560 = vadd.f32 %v502, %v544
      %v561 = vadd.f32 %v507, %v545
      %v562 = vadd.f32 %v510, %v546
      %v563 = vadd.f32 %v515, %v547
      %v564 = vadd.f32 %v518, %v548
      %v565 = vadd.f32 %v523, %v549
      %v566 = vadd.f32 %v526, %v550
      %v567 = vadd.f32 %v531, %v551
      %v568 = vadd.f32 %v534, %v552
      %vm569 = vcmask 31744
      %570 = vst.msk [vmem:[%s312] sm:$0xff] %vm569, %v553
      %571 = vst.msk [vmem:[%s312 + $0x8] sm:$0xff] %vm569, %v554
      %572 = vst.msk [vmem:[%s312 + $0x10] sm:$0xff] %vm569, %v555
      %573 = vst.msk [vmem:[%s312 + $0x18] sm:$0xff] %vm569, %v556
      %574 = vst.msk [vmem:[%s312 + $0x20] sm:$0xff] %vm569, %v557
      %575 = vst.msk [vmem:[%s312 + $0x28] sm:$0xff] %vm569, %v558
      %576 = vst.msk [vmem:[%s312 + $0x30] sm:$0xff] %vm569, %v559
      %577 = vst.msk [vmem:[%s312 + $0x38] sm:$0xff] %vm569, %v560
      %578 = vst.msk [vmem:[%s312 + $0x40] sm:$0xff] %vm569, %v561
      %579 = vst.msk [vmem:[%s312 + $0x48] sm:$0xff] %vm569, %v562
      %580 = vst.msk [vmem:[%s312 + $0x50] sm:$0xff] %vm569, %v563
      %581 = vst.msk [vmem:[%s312 + $0x58] sm:$0xff] %vm569, %v564
      %582 = vst.msk [vmem:[%s312 + $0x60] sm:$0xff] %vm569, %v565
      %583 = vst.msk [vmem:[%s312 + $0x68] sm:$0xff] %vm569, %v566
      %584 = vst.msk [vmem:[%s312 + $0x70] sm:$0xff] %vm569, %v567
      %585 = vst.msk [vmem:[%s312 + $0x78] sm:$0xff] %vm569, %v568
      %s586 = smul.u32 16, %s21
      %p587 = scmp.lt.s32.totalorder %s20, 1
      %s588 = scalar_select %p587, %s20, 1
      %p589 = scmp.lt.s32.totalorder %s586, 31
      %s590 = scalar_select %p589, %s586, 31
      %s591 = smul.addr %s588, 32
      %s592 = sadd.s32 %s590, %s591
      %s593 = smul.addr %s592, 8
      %s594 = scalar_lea.vmem %s5, %s593
      // Predicated region
      $region41: #{mb_block_forward.5} parent=39 // pred_check
        %p595 = pneg %p172
      $region42: #{mb_block_forward.5} parent=39 // pred_check_branch
        %597 = sbr.rel (%p595) target = $region44
      $region43: #{mb_block_forward.5} parent=39 // pred_region
        %s598 = smul.u32 16, %s21
      $region44: #{mb_block_forward.5} parent=39 // pred_fallthru
        _
    $region40: #{mb_block_forward.5} parent=5 // pred_fallthru
      _
    %p599 = scmp.le.s32.totalorder 2, %s11
    // Predicated region
    $region45: #{mb_block_forward.5} parent=5 // pred_check
      %p600 = pneg %p599
    $region46: #{mb_block_forward.5} parent=5 // pred_check_branch
      %602 = sbr.rel (%p600) target = $region48
    $region47: #{mb_block_forward.5} parent=5 // pred_region
      %s603 = ssub.s32 %s11, 2
      // Predicated region
      $region49: #{mb_block_forward.5} parent=47 // pred_check
        %p604 = pneg %p178
      $region50: #{mb_block_forward.5} parent=47 // pred_check_branch
        %606 = sbr.rel (%p604) target = $region52
      $region51: #{mb_block_forward.5} parent=47 // pred_region
        %s607 = smul.u32 16, %s23
        %p608 = scmp.lt.s32.totalorder %s22, 1
        %s609 = scalar_select %p608, %s22, 1
        %p610 = scmp.lt.s32.totalorder %s607, 31
        %s611 = scalar_select %p610, %s607, 31
        %s612 = smul.addr %s609, 32
        %s613 = sadd.s32 %s611, %s612
        %s614 = smul.addr %s613, 8
        %s615 = scalar_lea.vmem %s5, %s614
      $region52: #{mb_block_forward.5} parent=47 // pred_fallthru
        _
    $region48: #{mb_block_forward.5} parent=5 // pred_fallthru
      _
  $region6: #{mb_block_forward.5} parent=0 // loop_footer
    %s15 = sadd.s32 1, %s11
  $region7: #{mb_block_forward.5} parent=0 // loop_footer_branch
    %10 = sbr.rel target = $region3
  $region8: #{mb_block_forward.5} parent=0 // loop_exit
    _

// kernel: mb_block_forward.3
$region0: #{mb_block_forward.3}
  #allocation0 [shape = 'u32[]', space=smem, size = 0x4, offset = 0x4, fixed_abs, tag = 'smem constant byte address 0x4 - core index']
  #allocation1 [shape = 'u32[144,128]{1,0:T(1,128)}', space=vmem, size = 0x12000, scoped, tag = 'internal scratch']
  %s0 = inlined_call_operand.vmem [shape: f32[512,4], index: 0, kind: input, shape index: {}]
  %s1 = inlined_call_operand.vmem [shape: bf16[4,16], index: 1, kind: input, shape index: {}]
  %s2 = inlined_call_operand.vmem [shape: f32[1,16], index: 2, kind: input, shape index: {}]
  %s3 = inlined_call_operand.vmem [shape: bf16[512,16], index: 3, kind: output, shape index: {}]
  %s4 = sld [smem:[#allocation0]]
  $region45: #{mb_block_forward.3} parent=0
    _
  %s6 = ssub.s32 1, %s4
  %s7 = scalar_select 0, %s6, %s4
  loop: start=0, step=1, limit=6
  $region2: #{mb_block_forward.3} parent=0 // loop_pre_header
    _
  $region3: #{mb_block_forward.3} parent=0 // loop_header
    %s9 = sphi 0, %s13
    %p10 = scmp.ge.s32.totalorder %s9, 6
    %s19 = sphi 0, %s21
    %s22 = sphi 0, %s19
    %s23 = sphi 0, %s22
    %s39 = sphi 0, %s23
    %s43 = sphi 0, %s43
    %s45 = sphi 0, %s43
    %s46 = sphi 0, %s45
    %s60 = sphi 0, %s46
    %s64 = sphi 0, %s64
    %s66 = sphi 0, %s64
    %s67 = sphi 0, %s66
    %s81 = sphi 0, %s67
    %s87 = sphi 0, %s89
    %s90 = sphi 0, %s87
    %s91 = sphi 0, %s90
    %s107 = sphi 0, %s91
  $region4: #{mb_block_forward.3} parent=0 // loop_header_branch
    %12 = sbr.rel (%p10) target = $region8
  $region5: #{mb_block_forward.3} parent=0 // loop_body
    %s14 = ssub.s32 %s9, 1
    %s15 = ssub.s32 %s9, 2
    %s16 = sadd.s32 %s9, 1
    %s17 = ssub.s32 %s9, %s16
    %p18 = scmp.eq.s32.totalorder %s17, 0
    %s20 = sadd.s32 %s19, 1
    %s21 = scalar_select %p18, %s19, %s20
    %p24 = pneg %p18
    %p25 = scmp.eq.s32.totalorder %s9, 3
    %p26 = por %p24, %p25
    %p27 = scmp.ne.s32.totalorder %s19, %s22
    %p28 = scmp.eq.s32.totalorder %s9, 0
    %p29 = por %p27, %p28
    %p30 = scmp.ne.s32.totalorder %s19, %s22
    %p31 = scmp.eq.s32.totalorder %s14, 3
    %p32 = por %p30, %p31
    %p33 = scmp.ne.s32.totalorder %s22, %s23
    %p34 = scmp.eq.s32.totalorder %s14, 0
    %p35 = por %p33, %p34
    %p36 = scmp.ne.s32.totalorder %s22, %s23
    %p37 = scmp.eq.s32.totalorder %s15, 3
    %p38 = por %p36, %p37
    %p40 = scmp.ne.s32.totalorder %s23, %s39
    %p41 = scmp.eq.s32.totalorder %s15, 0
    %p42 = por %p40, %p41
    %s44 = sadd.s32 %s43, 1
    %p47 = scmp.eq.s32.totalorder %s9, 3
    %p48 = scmp.ne.s32.totalorder %s43, %s45
    %p49 = scmp.eq.s32.totalorder %s9, 0
    %p50 = por %p48, %p49
    %p51 = scmp.ne.s32.totalorder %s43, %s45
    %p52 = scmp.eq.s32.totalorder %s14, 3
    %p53 = por %p51, %p52
    %p54 = scmp.ne.s32.totalorder %s45, %s46
    %p55 = scmp.eq.s32.totalorder %s14, 0
    %p56 = por %p54, %p55
    %p57 = scmp.ne.s32.totalorder %s45, %s46
    %p58 = scmp.eq.s32.totalorder %s15, 3
    %p59 = por %p57, %p58
    %p61 = scmp.ne.s32.totalorder %s46, %s60
    %p62 = scmp.eq.s32.totalorder %s15, 0
    %p63 = por %p61, %p62
    %s65 = sadd.s32 %s64, 1
    %p68 = scmp.eq.s32.totalorder %s9, 3
    %p69 = scmp.ne.s32.totalorder %s64, %s66
    %p70 = scmp.eq.s32.totalorder %s9, 0
    %p71 = por %p69, %p70
    %p72 = scmp.ne.s32.totalorder %s64, %s66
    %p73 = scmp.eq.s32.totalorder %s14, 3
    %p74 = por %p72, %p73
    %p75 = scmp.ne.s32.totalorder %s66, %s67
    %p76 = scmp.eq.s32.totalorder %s14, 0
    %p77 = por %p75, %p76
    %p78 = scmp.ne.s32.totalorder %s66, %s67
    %p79 = scmp.eq.s32.totalorder %s15, 3
    %p80 = por %p78, %p79
    %p82 = scmp.ne.s32.totalorder %s67, %s81
    %p83 = scmp.eq.s32.totalorder %s15, 0
    %p84 = por %p82, %p83
    %s85 = ssub.s32 %s9, %s16
    %p86 = scmp.eq.s32.totalorder %s85, 0
    %s88 = sadd.s32 %s87, 1
    %s89 = scalar_select %p86, %s87, %s88
    %p92 = pneg %p86
    %p93 = scmp.eq.s32.totalorder %s9, 3
    %p94 = por %p92, %p93
    %p95 = scmp.ne.s32.totalorder %s87, %s90
    %p96 = scmp.eq.s32.totalorder %s9, 0
    %p97 = por %p95, %p96
    %p98 = scmp.ne.s32.totalorder %s87, %s90
    %p99 = scmp.eq.s32.totalorder %s14, 3
    %p100 = por %p98, %p99
    %p101 = scmp.ne.s32.totalorder %s90, %s91
    %p102 = scmp.eq.s32.totalorder %s14, 0
    %p103 = por %p101, %p102
    %p104 = scmp.ne.s32.totalorder %s90, %s91
    %p105 = scmp.eq.s32.totalorder %s15, 3
    %p106 = por %p104, %p105
    %p108 = scmp.ne.s32.totalorder %s91, %s107
    %p109 = scmp.eq.s32.totalorder %s15, 0
    %p110 = por %p108, %p109
    %p111 = scmp.le.s32.totalorder 1, %s9
    %p112 = scmp.lt.s32.totalorder %s9, 5
    %p113 = pnand %p111, %p112
    %p114 = pneg %p113
    // Predicated region
    $region9: #{mb_block_forward.3} parent=5 // pred_check
      _
    $region10: #{mb_block_forward.3} parent=5 // pred_check_branch
      %116 = sbr.rel (%p113) target = $region12
    $region11: #{mb_block_forward.3} parent=5 // pred_region
      %s117 = ssub.s32 %s9, 1
      // Predicated region
      $region13: #{mb_block_forward.3} parent=11 // pred_check
        %p118 = pneg %p56
      $region14: #{mb_block_forward.3} parent=11 // pred_check_branch
        %120 = sbr.rel (%p118) target = $region16
      $region15: #{mb_block_forward.3} parent=11 // pred_region
        _
      $region16: #{mb_block_forward.3} parent=11 // pred_fallthru
        _
      // Predicated region
      $region17: #{mb_block_forward.3} parent=11 // pred_check
        %p121 = pneg %p77
      $region18: #{mb_block_forward.3} parent=11 // pred_check_branch
        %123 = sbr.rel (%p121) target = $region20
      $region19: #{mb_block_forward.3} parent=11 // pred_region
        _
      $region20: #{mb_block_forward.3} parent=11 // pred_fallthru
        _
    $region12: #{mb_block_forward.3} parent=5 // pred_fallthru
      _
    %p124 = scmp.lt.s32.totalorder %s9, 4
    // Predicated region
    $region21: #{mb_block_forward.3} parent=5 // pred_check
      %p125 = pneg %p124
    $region22: #{mb_block_forward.3} parent=5 // pred_check_branch
      %127 = sbr.rel (%p125) target = $region24
    $region23: #{mb_block_forward.3} parent=5 // pred_region
      // Predicated region
      $region25: #{mb_block_forward.3} parent=23 // pred_check
        %p128 = pneg %p29
      $region26: #{mb_block_forward.3} parent=23 // pred_check_branch
        %130 = sbr.rel (%p128) target = $region28
      $region27: #{mb_block_forward.3} parent=23 // pred_region
        %s131 = smul.u32 16, %s9
        %p132 = scmp.lt.s32.totalorder %s131, 63
        %s133 = scalar_select %p132, %s131, 63
        %s134 = smul.addr %s133, 8
        %s135 = scalar_lea.vmem %s0, %s134
        %s136 = smul.u32 16, %s9
      $region28: #{mb_block_forward.3} parent=23 // pred_fallthru
        _
    $region24: #{mb_block_forward.3} parent=5 // pred_fallthru
      _
    %p137 = scmp.le.s32.totalorder 1, %s9
    %p138 = scmp.lt.s32.totalorder %s9, 5
    %p139 = pnand %p137, %p138
    %p140 = pneg %p139
    // Predicated region
    $region29: #{mb_block_forward.3} parent=5 // pred_check
      _
    $region30: #{mb_block_forward.3} parent=5 // pred_check_branch
      %142 = sbr.rel (%p139) target = $region32
    $region31: #{mb_block_forward.3} parent=5 // pred_region
      %s143 = ssub.s32 %s9, 1
      %s144 = smul.u32 16, %s14
      %p145 = scmp.lt.s32.totalorder %s144, 63
      %s146 = scalar_select %p145, %s144, 63
      %s147 = smul.addr %s146, 8
      %s148 = scalar_lea.vmem %s0, %s147
      %p149 = pneg %p35
      %p150 = pneg %p32
      %p151 = pneg %p56
      %p152 = pneg %p53
      %p153 = pneg %p77
      %p154 = pneg %p74
      %p155 = pneg %p103
      %p156 = pneg %p100
      %s157 = smul.u32 16, %s14
      %p158 = scmp.lt.s32.totalorder %s157, 63
      %s159 = scalar_select %p158, %s157, 63
      %s160 = smul.addr %s159, 4
      %s161 = scalar_lea.vmem %s3, %s160
      %s162 = smul.u32 16, %s14
      %p163 = scmp.lt.s32.totalorder %s162, 63
      %s164 = scalar_select %p163, %s162, 63
      %s165 = smul.addr %s164, 8
      %s166 = scalar_lea.vmem %s0, %s165
      %s167 = smul.u32 16, %s14
      %s168 = smul.u32 16, %s14
      %p169 = scmp.lt.s32.totalorder %s168, 63
      %s170 = scalar_select %p169, %s168, 63
      %s171 = smul.addr %s170, 4
      %s172 = scalar_lea.vmem %s3, %s171
      %s173 = smul.u32 16, %s14
      %v175 = vld [vmem:[%s166] sm:$0xff]
      %v176 = vld [vmem:[%s166 + $0x8] sm:$0xff]
      %v177 = vld [vmem:[%s166 + $0x10] sm:$0xff]
      %v178 = vld [vmem:[%s166 + $0x18] sm:$0xff]
      %v179 = vld [vmem:[%s166 + $0x20] sm:$0xff]
      %v180 = vld [vmem:[%s166 + $0x28] sm:$0xff]
      %v181 = vld [vmem:[%s166 + $0x30] sm:$0xff]
      %v182 = vld [vmem:[%s166 + $0x38] sm:$0xff]
      %v183 = vld [vmem:[%s166 + $0x40] sm:$0xff]
      %v184 = vld [vmem:[%s166 + $0x48] sm:$0xff]
      %v185 = vld [vmem:[%s166 + $0x50] sm:$0xff]
      %v186 = vld [vmem:[%s166 + $0x58] sm:$0xff]
      %v187 = vld [vmem:[%s166 + $0x60] sm:$0xff]
      %v188 = vld [vmem:[%s166 + $0x68] sm:$0xff]
      %v189 = vld [vmem:[%s166 + $0x70] sm:$0xff]
      %v190 = vld [vmem:[%s166 + $0x78] sm:$0xff]
      %v191 = vpack.c.bf16 %v176, %v175
      %v192 = vpack.c.bf16 %v178, %v177
      %v193 = vpack.c.bf16 %v180, %v179
      %v194 = vpack.c.bf16 %v182, %v181
      %v195 = vpack.c.bf16 %v184, %v183
      %v196 = vpack.c.bf16 %v186, %v185
      %v197 = vpack.c.bf16 %v188, %v187
      %v198 = vpack.c.bf16 %v190, %v189
      %v199 = vld [vmem:[%s1] sm:$0x3]
      %v200 = vld [vmem:[%s2] sm:$0x1]
      %v202 = vlaneseq
      %v203 = vshrl.u32 %v202, 7
      %v204 = vsub.s32 0, %v203
      %v205 = vrot.slane %v200, %v204
      %vm207 = vcmask 31744
      %v209 = vsel %vm207, %v191, 0
      %v212 = vsel %vm207, %v192, 0
      %v215 = vsel %vm207, %v193, 0
      %v218 = vsel %vm207, %v194, 0
      %v221 = vsel %vm207, %v195, 0
      %v224 = vsel %vm207, %v196, 0
      %v227 = vsel %vm207, %v197, 0
      %v230 = vsel %vm207, %v198, 0
      %vm232 = vcmask 1041408
      %v234 = vsel %vm232, %v199, 0
      %236 = vmatprep.subr.bf16.mxu0 0
      %237 = vmatpush1.bf16.msra.mxu0 %v234
      %238 = vmatprep.subr.bf16.mxu0 0
      %239 = vmatpush1.bf16.msra.mxu0 0
      %240 = vmatprep.subr.bf16.mxu0 0
      %241 = vmatpush1.bf16.msra.mxu0 0
      %242 = vmatprep.subr.bf16.mxu0 0
      %243 = vmatpush1.bf16.msra.mxu0 0
      %244 = vmatprep.subr.bf16.mxu0 0
      %245 = vmatpush1.bf16.msra.mxu0 0
      %246 = vmatprep.subr.bf16.mxu0 0
      %247 = vmatpush1.bf16.msra.mxu0 0
      %248 = vmatprep.subr.bf16.mxu0 0
      %249 = vmatpush1.bf16.msra.mxu0 0
      %250 = vmatprep.subr.bf16.mxu0 0
      %251 = vmatpush1.bf16.msra.mxu0 0
      %252 = vmatprep.subr.bf16.mxu0 0
      %253 = vmatpush1.bf16.msra.mxu0 0
      %254 = vmatprep.subr.bf16.mxu0 0
      %255 = vmatpush1.bf16.msra.mxu0 0
      %256 = vmatprep.subr.bf16.mxu0 0
      %257 = vmatpush1.bf16.msra.mxu0 0
      %258 = vmatprep.subr.bf16.mxu0 0
      %259 = vmatpush1.bf16.msra.mxu0 0
      %260 = vmatprep.subr.bf16.mxu0 0
      %261 = vmatpush1.bf16.msra.mxu0 0
      %262 = vmatprep.subr.bf16.mxu0 0
      %263 = vmatpush1.bf16.msra.mxu0 0
      %264 = vmatprep.subr.bf16.mxu0 0
      %265 = vmatpush1.bf16.msra.mxu0 0
      %266 = vmatprep.subr.bf16.mxu0 0
      %267 = vmatpush1.bf16.msra.mxu0 0
      %268 = vmatprep.mubr.bf16.mxu0 0
      %269 = vmatmul.mubr.bf16.gmra.mrb[0].mxu0 %v209
      %v270 = vpop.f32.mrb[0].mxu0
      %v271 = vadd.f32 %v205, %v270
      %v272 = vpop.f32.mrb[0].mxu0
      %v273 = vpop.f32.mrb[0].mxu0
      %v274 = vadd.f32 %v205, %v273
      %v275 = vpop.f32.mrb[0].mxu0
      %276 = vmatprep.mubr.bf16.mxu0 0
      %277 = vmatmul.mubr.bf16.gmra.mrb[0].mxu0 %v212
      %v278 = vpop.f32.mrb[0].mxu0
      %v279 = vadd.f32 %v205, %v278
      %v280 = vpop.f32.mrb[0].mxu0
      %v281 = vpop.f32.mrb[0].mxu0
      %v282 = vadd.f32 %v205, %v281
      %v283 = vpop.f32.mrb[0].mxu0
      %284 = vmatprep.mubr.bf16.mxu0 0
      %285 = vmatmul.mubr.bf16.gmra.mrb[0].mxu0 %v215
      %v286 = vpop.f32.mrb[0].mxu0
      %v287 = vadd.f32 %v205, %v286
      %v288 = vpop.f32.mrb[0].mxu0
      %v289 = vpop.f32.mrb[0].mxu0
      %v290 = vadd.f32 %v205, %v289
      %v291 = vpop.f32.mrb[0].mxu0
      %292 = vmatprep.mubr.bf16.mxu0 0
      %293 = vmatmul.mubr.bf16.gmra.mrb[0].mxu0 %v218
      %v294 = vpop.f32.mrb[0].mxu0
      %v295 = vadd.f32 %v205, %v294
      %v296 = vpop.f32.mrb[0].mxu0
      %v297 = vpop.f32.mrb[0].mxu0
      %v298 = vadd.f32 %v205, %v297
      %v299 = vpop.f32.mrb[0].mxu0
      %300 = vmatprep.mubr.bf16.mxu0 0
      %301 = vmatmul.mubr.bf16.gmra.mrb[0].mxu0 %v221
      %v302 = vpop.f32.mrb[0].mxu0
      %v303 = vadd.f32 %v205, %v302
      %v304 = vpop.f32.mrb[0].mxu0
      %v305 = vpop.f32.mrb[0].mxu0
      %v306 = vadd.f32 %v205, %v305
      %v307 = vpop.f32.mrb[0].mxu0
      %308 = vmatprep.mubr.bf16.mxu0 0
      %309 = vmatmul.mubr.bf16.gmra.mrb[0].mxu0 %v224
      %v310 = vpop.f32.mrb[0].mxu0
      %v311 = vadd.f32 %v205, %v310
      %v312 = vpop.f32.mrb[0].mxu0
      %v313 = vpop.f32.mrb[0].mxu0
      %v314 = vadd.f32 %v205, %v313
      %v315 = vpop.f32.mrb[0].mxu0
      %316 = vmatprep.mubr.bf16.mxu0 0
      %317 = vmatmul.mubr.bf16.gmra.mrb[0].mxu0 %v227
      %v318 = vpop.f32.mrb[0].mxu0
      %v319 = vadd.f32 %v205, %v318
      %v320 = vpop.f32.mrb[0].mxu0
      %v321 = vpop.f32.mrb[0].mxu0
      %v322 = vadd.f32 %v205, %v321
      %v323 = vpop.f32.mrb[0].mxu0
      %324 = vmatprep.mubr.bf16.mxu0 0
      %325 = vmatmul.mubr.bf16.gmra.mrb[0].mxu0 %v230
      %v326 = vpop.f32.mrb[0].mxu0
      %v327 = vadd.f32 %v205, %v326
      %v328 = vpop.f32.mrb[0].mxu0
      %v329 = vpop.f32.mrb[0].mxu0
      %v330 = vadd.f32 %v205, %v329
      %v331 = vpop.f32.mrb[0].mxu0
      %332 = vdwg.mxu0
      %v333 = vadd.f32 %v271, 3.0
      %v334 = vadd.f32 %v274, 3.0
      %v335 = vadd.f32 %v279, 3.0
      %v336 = vadd.f32 %v282, 3.0
      %v337 = vadd.f32 %v287, 3.0
      %v338 = vadd.f32 %v290, 3.0
      %v339 = vadd.f32 %v295, 3.0
      %v340 = vadd.f32 %v298, 3.0
      %v341 = vadd.f32 %v303, 3.0
      %v342 = vadd.f32 %v306, 3.0
      %v343 = vadd.f32 %v311, 3.0
      %v344 = vadd.f32 %v314, 3.0
      %v345 = vadd.f32 %v319, 3.0
      %v346 = vadd.f32 %v322, 3.0
      %v347 = vadd.f32 %v327, 3.0
      %v348 = vadd.f32 %v330, 3.0
      %v349 = vmax.f32 %v333, 0.0
      %v350 = vmax.f32 %v334, 0.0
      %v351 = vmax.f32 %v335, 0.0
      %v352 = vmax.f32 %v336, 0.0
      %v353 = vmax.f32 %v337, 0.0
      %v354 = vmax.f32 %v338, 0.0
      %v355 = vmax.f32 %v339, 0.0
      %v356 = vmax.f32 %v340, 0.0
      %v357 = vmax.f32 %v341, 0.0
      %v358 = vmax.f32 %v342, 0.0
      %v359 = vmax.f32 %v343, 0.0
      %v360 = vmax.f32 %v344, 0.0
      %v361 = vmax.f32 %v345, 0.0
      %v362 = vmax.f32 %v346, 0.0
      %v363 = vmax.f32 %v347, 0.0
      %v364 = vmax.f32 %v348, 0.0
      %v365 = vmin.f32 %v349, 6.0
      %v366 = vmin.f32 %v350, 6.0
      %v367 = vmin.f32 %v351, 6.0
      %v368 = vmin.f32 %v352, 6.0
      %v369 = vmin.f32 %v353, 6.0
      %v370 = vmin.f32 %v354, 6.0
      %v371 = vmin.f32 %v355, 6.0
      %v372 = vmin.f32 %v356, 6.0
      %v373 = vmin.f32 %v357, 6.0
      %v374 = vmin.f32 %v358, 6.0
      %v375 = vmin.f32 %v359, 6.0
      %v376 = vmin.f32 %v360, 6.0
      %v377 = vmin.f32 %v361, 6.0
      %v378 = vmin.f32 %v362, 6.0
      %v379 = vmin.f32 %v363, 6.0
      %v380 = vmin.f32 %v364, 6.0
      %v381 = vmul.f32 %v271, %v365
      %v382 = vmul.f32 %v274, %v366
      %v383 = vmul.f32 %v279, %v367
      %v384 = vmul.f32 %v282, %v368
      %v385 = vmul.f32 %v287, %v369
      %v386 = vmul.f32 %v290, %v370
      %v387 = vmul.f32 %v295, %v371
      %v388 = vmul.f32 %v298, %v372
      %v389 = vmul.f32 %v303, %v373
      %v390 = vmul.f32 %v306, %v374
      %v391 = vmul.f32 %v311, %v375
      %v392 = vmul.f32 %v314, %v376
      %v393 = vmul.f32 %v319, %v377
      %v394 = vmul.f32 %v322, %v378
      %v395 = vmul.f32 %v327, %v379
      %v396 = vmul.f32 %v330, %v380
      %v397 = vmul.f32 %v381, 0.16666667
      %v398 = vmul.f32 %v382, 0.16666667
      %v399 = vmul.f32 %v383, 0.16666667
      %v400 = vmul.f32 %v384, 0.16666667
      %v401 = vmul.f32 %v385, 0.16666667
      %v402 = vmul.f32 %v386, 0.16666667
      %v403 = vmul.f32 %v387, 0.16666667
      %v404 = vmul.f32 %v388, 0.16666667
      %v405 = vmul.f32 %v389, 0.16666667
      %v406 = vmul.f32 %v390, 0.16666667
      %v407 = vmul.f32 %v391, 0.16666667
      %v408 = vmul.f32 %v392, 0.16666667
      %v409 = vmul.f32 %v393, 0.16666667
      %v410 = vmul.f32 %v394, 0.16666667
      %v411 = vmul.f32 %v395, 0.16666667
      %v412 = vmul.f32 %v396, 0.16666667
      %v413 = vpack.c.bf16 %v398, %v397
      %v414 = vpack.c.bf16 %v400, %v399
      %v415 = vpack.c.bf16 %v402, %v401
      %v416 = vpack.c.bf16 %v404, %v403
      %v417 = vpack.c.bf16 %v406, %v405
      %v418 = vpack.c.bf16 %v408, %v407
      %v419 = vpack.c.bf16 %v410, %v409
      %v420 = vpack.c.bf16 %v412, %v411
      %v429 = vunpack.c.l.b16 %v413
      %v430 = vunpack.c.h.b16 %v413
      %v431 = vunpack.c.l.b16 %v414
      %v432 = vunpack.c.h.b16 %v414
      %v433 = vunpack.c.l.b16 %v415
      %v434 = vunpack.c.h.b16 %v415
      %v435 = vunpack.c.l.b16 %v416
      %v436 = vunpack.c.h.b16 %v416
      %v437 = vunpack.c.l.b16 %v417
      %v438 = vunpack.c.h.b16 %v417
      %v439 = vunpack.c.l.b16 %v418
      %v440 = vunpack.c.h.b16 %v418
      %v441 = vunpack.c.l.b16 %v419
      %v442 = vunpack.c.h.b16 %v419
      %v443 = vunpack.c.l.b16 %v420
      %v444 = vunpack.c.h.b16 %v420
      %v445 = vpack.c.b16 %v429, %v429
      %v446 = vpack.c.b16 %v430, %v430
      %v447 = vpack.c.b16 %v431, %v431
      %v448 = vpack.c.b16 %v432, %v432
      %v449 = vpack.c.b16 %v433, %v433
      %v450 = vpack.c.b16 %v434, %v434
      %v451 = vpack.c.b16 %v435, %v435
      %v452 = vpack.c.b16 %v436, %v436
      %v453 = vpack.c.b16 %v437, %v437
      %v454 = vpack.c.b16 %v438, %v438
      %v455 = vpack.c.b16 %v439, %v439
      %v456 = vpack.c.b16 %v440, %v440
      %v457 = vpack.c.b16 %v441, %v441
      %v458 = vpack.c.b16 %v442, %v442
      %v459 = vpack.c.b16 %v443, %v443
      %v460 = vpack.c.b16 %v444, %v444
      %vm477 = vcmask 125952
      %478 = vst.msk [vmem:[%s172] sm:$0xf] %vm477, %v445
      %479 = vst.msk [vmem:[%s172 + $0x4] sm:$0xf] %vm477, %v446
      %480 = vst.msk [vmem:[%s172 + $0x8] sm:$0xf] %vm477, %v447
      %481 = vst.msk [vmem:[%s172 + $0xc] sm:$0xf] %vm477, %v448
      %482 = vst.msk [vmem:[%s172 + $0x10] sm:$0xf] %vm477, %v449
      %483 = vst.msk [vmem:[%s172 + $0x14] sm:$0xf] %vm477, %v450
      %484 = vst.msk [vmem:[%s172 + $0x18] sm:$0xf] %vm477, %v451
      %485 = vst.msk [vmem:[%s172 + $0x1c] sm:$0xf] %vm477, %v452
      %486 = vst.msk [vmem:[%s172 + $0x20] sm:$0xf] %vm477, %v453
      %487 = vst.msk [vmem:[%s172 + $0x24] sm:$0xf] %vm477, %v454
      %488 = vst.msk [vmem:[%s172 + $0x28] sm:$0xf] %vm477, %v455
      %489 = vst.msk [vmem:[%s172 + $0x2c] sm:$0xf] %vm477, %v456
      %490 = vst.msk [vmem:[%s172 + $0x30] sm:$0xf] %vm477, %v457
      %491 = vst.msk [vmem:[%s172 + $0x34] sm:$0xf] %vm477, %v458
      %492 = vst.msk [vmem:[%s172 + $0x38] sm:$0xf] %vm477, %v459
      %493 = vst.msk [vmem:[%s172 + $0x3c] sm:$0xf] %vm477, %v460
      %s494 = smul.u32 16, %s14
      %p495 = scmp.lt.s32.totalorder %s494, 63
      %s496 = scalar_select %p495, %s494, 63
      %s497 = smul.addr %s496, 4
      %s498 = scalar_lea.vmem %s3, %s497
      // Predicated region
      $region33: #{mb_block_forward.3} parent=31 // pred_check
        %p499 = pneg %p100
      $region34: #{mb_block_forward.3} parent=31 // pred_check_branch
        %501 = sbr.rel (%p499) target = $region36
      $region35: #{mb_block_forward.3} parent=31 // pred_region
        %s502 = smul.u32 16, %s14
      $region36: #{mb_block_forward.3} parent=31 // pred_fallthru
        _
    $region32: #{mb_block_forward.3} parent=5 // pred_fallthru
      _
    %p503 = scmp.le.s32.totalorder 2, %s9
    // Predicated region
    $region37: #{mb_block_forward.3} parent=5 // pred_check
      %p504 = pneg %p503
    $region38: #{mb_block_forward.3} parent=5 // pred_check_branch
      %506 = sbr.rel (%p504) target = $region40
    $region39: #{mb_block_forward.3} parent=5 // pred_region
      %s507 = ssub.s32 %s9, 2
      // Predicated region
      $region41: #{mb_block_forward.3} parent=39 // pred_check
        %p508 = pneg %p106
      $region42: #{mb_block_forward.3} parent=39 // pred_check_branch
        %510 = sbr.rel (%p508) target = $region44
      $region43: #{mb_block_forward.3} parent=39 // pred_region
        %s511 = smul.u32 16, %s15
        %p512 = scmp.lt.s32.totalorder %s511, 63
        %s513 = scalar_select %p512, %s511, 63
        %s514 = smul.addr %s513, 4
        %s515 = scalar_lea.vmem %s3, %s514
      $region44: #{mb_block_forward.3} parent=39 // pred_fallthru
        _
    $region40: #{mb_block_forward.3} parent=5 // pred_fallthru
      _
  $region6: #{mb_block_forward.3} parent=0 // loop_footer
    %s13 = sadd.s32 1, %s9
  $region7: #{mb_block_forward.3} parent=0 // loop_footer_branch
    %8 = sbr.rel target = $region3
  $region8: #{mb_block_forward.3} parent=0 // loop_exit
    _

// kernel: mb_block_forward.4
$region0: #{mb_block_forward.4}
  #allocation0 [shape = 'u32[]', space=smem, size = 0x4, offset = 0x4, fixed_abs, tag = 'smem constant byte address 0x4 - core index']
  #allocation1 [shape = 'u32[144,128]{1,0:T(1,128)}', space=vmem, size = 0x12000, scoped, tag = 'internal scratch']
  #allocation2 [shape = 'f32[18,18,16]{2,1,0:T(8,128)}', space=vmem, size = 0x36000, scoped, tag = 'scratch operand']
  %s0 = inlined_call_operand.vmem [shape: bf16[2,16,16,16], index: 0, kind: input, shape index: {}]
  %s1 = inlined_call_operand.vmem [shape: f32[3,3,16], index: 1, kind: input, shape index: {}]
  %s2 = inlined_call_operand.vmem [shape: f32[1,16], index: 2, kind: input, shape index: {}]
  %s3 = inlined_call_operand.vmem [shape: bf16[2,16,16,16], index: 3, kind: output, shape index: {0}]
  %s4 = inlined_call_operand.vmem [shape: f32[2,1,16], index: 4, kind: output, shape index: {1}]
  %5 = xla_tuple %s3, %s4
  %s6 = sld [smem:[#allocation0]]
  $region53: #{mb_block_forward.4} parent=0
    _
  %s8 = ssub.s32 1, %s6
  %s9 = scalar_select 0, %s8, %s6
  loop: start=0, step=1, limit=4
  $region2: #{mb_block_forward.4} parent=0 // loop_pre_header
    _
  $region3: #{mb_block_forward.4} parent=0 // loop_header
    %s11 = sphi 0, %s15
    %p12 = scmp.ge.s32.totalorder %s11, 4
    %s21 = sphi 0, %s23
    %s24 = sphi 0, %s21
    %s25 = sphi 0, %s24
    %s41 = sphi 0, %s25
    %s45 = sphi 0, %s45
    %s47 = sphi 0, %s45
    %s48 = sphi 0, %s47
    %s62 = sphi 0, %s48
    %s66 = sphi 0, %s66
    %s68 = sphi 0, %s66
    %s69 = sphi 0, %s68
    %s83 = sphi 0, %s69
    %s89 = sphi 0, %s91
    %s92 = sphi 0, %s89
    %s93 = sphi 0, %s92
    %s109 = sphi 0, %s93
    %s115 = sphi 0, %s117
    %s118 = sphi 0, %s115
    %s119 = sphi 0, %s118
    %s135 = sphi 0, %s119
  $region4: #{mb_block_forward.4} parent=0 // loop_header_branch
    %14 = sbr.rel (%p12) target = $region8
  $region5: #{mb_block_forward.4} parent=0 // loop_body
    %s16 = ssub.s32 %s11, 1
    %s17 = ssub.s32 %s11, 2
    %s18 = sadd.s32 %s11, 1
    %s19 = ssub.s32 %s11, %s18
    %p20 = scmp.eq.s32.totalorder %s19, 0
    %s22 = sadd.s32 %s21, 1
    %s23 = scalar_select %p20, %s21, %s22
    %p26 = pneg %p20
    %p27 = scmp.eq.s32.totalorder %s11, 1
    %p28 = por %p26, %p27
    %p29 = scmp.ne.s32.totalorder %s21, %s24
    %p30 = scmp.eq.s32.totalorder %s11, 0
    %p31 = por %p29, %p30
    %p32 = scmp.ne.s32.totalorder %s21, %s24
    %p33 = scmp.eq.s32.totalorder %s16, 1
    %p34 = por %p32, %p33
    %p35 = scmp.ne.s32.totalorder %s24, %s25
    %p36 = scmp.eq.s32.totalorder %s16, 0
    %p37 = por %p35, %p36
    %p38 = scmp.ne.s32.totalorder %s24, %s25
    %p39 = scmp.eq.s32.totalorder %s17, 1
    %p40 = por %p38, %p39
    %p42 = scmp.ne.s32.totalorder %s25, %s41
    %p43 = scmp.eq.s32.totalorder %s17, 0
    %p44 = por %p42, %p43
    %s46 = sadd.s32 %s45, 1
    %p49 = scmp.eq.s32.totalorder %s11, 1
    %p50 = scmp.ne.s32.totalorder %s45, %s47
    %p51 = scmp.eq.s32.totalorder %s11, 0
    %p52 = por %p50, %p51
    %p53 = scmp.ne.s32.totalorder %s45, %s47
    %p54 = scmp.eq.s32.totalorder %s16, 1
    %p55 = por %p53, %p54
    %p56 = scmp.ne.s32.totalorder %s47, %s48
    %p57 = scmp.eq.s32.totalorder %s16, 0
    %p58 = por %p56, %p57
    %p59 = scmp.ne.s32.totalorder %s47, %s48
    %p60 = scmp.eq.s32.totalorder %s17, 1
    %p61 = por %p59, %p60
    %p63 = scmp.ne.s32.totalorder %s48, %s62
    %p64 = scmp.eq.s32.totalorder %s17, 0
    %p65 = por %p63, %p64
    %s67 = sadd.s32 %s66, 1
    %p70 = scmp.eq.s32.totalorder %s11, 1
    %p71 = scmp.ne.s32.totalorder %s66, %s68
    %p72 = scmp.eq.s32.totalorder %s11, 0
    %p73 = por %p71, %p72
    %p74 = scmp.ne.s32.totalorder %s66, %s68
    %p75 = scmp.eq.s32.totalorder %s16, 1
    %p76 = por %p74, %p75
    %p77 = scmp.ne.s32.totalorder %s68, %s69
    %p78 = scmp.eq.s32.totalorder %s16, 0
    %p79 = por %p77, %p78
    %p80 = scmp.ne.s32.totalorder %s68, %s69
    %p81 = scmp.eq.s32.totalorder %s17, 1
    %p82 = por %p80, %p81
    %p84 = scmp.ne.s32.totalorder %s69, %s83
    %p85 = scmp.eq.s32.totalorder %s17, 0
    %p86 = por %p84, %p85
    %s87 = ssub.s32 %s11, %s18
    %p88 = scmp.eq.s32.totalorder %s87, 0
    %s90 = sadd.s32 %s89, 1
    %s91 = scalar_select %p88, %s89, %s90
    %p94 = pneg %p88
    %p95 = scmp.eq.s32.totalorder %s11, 1
    %p96 = por %p94, %p95
    %p97 = scmp.ne.s32.totalorder %s89, %s92
    %p98 = scmp.eq.s32.totalorder %s11, 0
    %p99 = por %p97, %p98
    %p100 = scmp.ne.s32.totalorder %s89, %s92
    %p101 = scmp.eq.s32.totalorder %s16, 1
    %p102 = por %p100, %p101
    %p103 = scmp.ne.s32.totalorder %s92, %s93
    %p104 = scmp.eq.s32.totalorder %s16, 0
    %p105 = por %p103, %p104
    %p106 = scmp.ne.s32.totalorder %s92, %s93
    %p107 = scmp.eq.s32.totalorder %s17, 1
    %p108 = por %p106, %p107
    %p110 = scmp.ne.s32.totalorder %s93, %s109
    %p111 = scmp.eq.s32.totalorder %s17, 0
    %p112 = por %p110, %p111
    %s113 = ssub.s32 %s11, %s18
    %p114 = scmp.eq.s32.totalorder %s113, 0
    %s116 = sadd.s32 %s115, 1
    %s117 = scalar_select %p114, %s115, %s116
    %p120 = pneg %p114
    %p121 = scmp.eq.s32.totalorder %s11, 1
    %p122 = por %p120, %p121
    %p123 = scmp.ne.s32.totalorder %s115, %s118
    %p124 = scmp.eq.s32.totalorder %s11, 0
    %p125 = por %p123, %p124
    %p126 = scmp.ne.s32.totalorder %s115, %s118
    %p127 = scmp.eq.s32.totalorder %s16, 1
    %p128 = por %p126, %p127
    %p129 = scmp.ne.s32.totalorder %s118, %s119
    %p130 = scmp.eq.s32.totalorder %s16, 0
    %p131 = por %p129, %p130
    %p132 = scmp.ne.s32.totalorder %s118, %s119
    %p133 = scmp.eq.s32.totalorder %s17, 1
    %p134 = por %p132, %p133
    %p136 = scmp.ne.s32.totalorder %s119, %s135
    %p137 = scmp.eq.s32.totalorder %s17, 0
    %p138 = por %p136, %p137
    %p139 = scmp.le.s32.totalorder 1, %s11
    %p140 = scmp.lt.s32.totalorder %s11, 3
    %p141 = pnand %p139, %p140
    %p142 = pneg %p141
    // Predicated region
    $region9: #{mb_block_forward.4} parent=5 // pred_check
      _
    $region10: #{mb_block_forward.4} parent=5 // pred_check_branch
      %144 = sbr.rel (%p141) target = $region12
    $region11: #{mb_block_forward.4} parent=5 // pred_region
      %s145 = ssub.s32 %s11, 1
      // Predicated region
      $region13: #{mb_block_forward.4} parent=11 // pred_check
        %p146 = pneg %p58
      $region14: #{mb_block_forward.4} parent=11 // pred_check_branch
        %148 = sbr.rel (%p146) target = $region16
      $region15: #{mb_block_forward.4} parent=11 // pred_region
        _
      $region16: #{mb_block_forward.4} parent=11 // pred_fallthru
        _
      // Predicated region
      $region17: #{mb_block_forward.4} parent=11 // pred_check
        %p149 = pneg %p79
      $region18: #{mb_block_forward.4} parent=11 // pred_check_branch
        %151 = sbr.rel (%p149) target = $region20
      $region19: #{mb_block_forward.4} parent=11 // pred_region
        _
      $region20: #{mb_block_forward.4} parent=11 // pred_fallthru
        _
    $region12: #{mb_block_forward.4} parent=5 // pred_fallthru
      _
    %p152 = scmp.lt.s32.totalorder %s11, 2
    // Predicated region
    $region21: #{mb_block_forward.4} parent=5 // pred_check
      %p153 = pneg %p152
    $region22: #{mb_block_forward.4} parent=5 // pred_check_branch
      %155 = sbr.rel (%p153) target = $region24
    $region23: #{mb_block_forward.4} parent=5 // pred_region
      // Predicated region
      $region25: #{mb_block_forward.4} parent=23 // pred_check
        %p156 = pneg %p31
      $region26: #{mb_block_forward.4} parent=23 // pred_check_branch
        %158 = sbr.rel (%p156) target = $region28
      $region27: #{mb_block_forward.4} parent=23 // pred_region
        %p159 = scmp.lt.s32.totalorder %s11, 1
        %s160 = scalar_select %p159, %s11, 1
        %s161 = smul.addr %s160, 32
        %s162 = smul.addr %s161, 4
        %s163 = scalar_lea.vmem %s0, %s162
      $region28: #{mb_block_forward.4} parent=23 // pred_fallthru
        _
    $region24: #{mb_block_forward.4} parent=5 // pred_fallthru
      _
    %p164 = scmp.le.s32.totalorder 1, %s11
    %p165 = scmp.lt.s32.totalorder %s11, 3
    %p166 = pnand %p164, %p165
    %p167 = pneg %p166
    // Predicated region
    $region29: #{mb_block_forward.4} parent=5 // pred_check
      _
    $region30: #{mb_block_forward.4} parent=5 // pred_check_branch
      %169 = sbr.rel (%p166) target = $region32
    $region31: #{mb_block_forward.4} parent=5 // pred_region
      %s170 = ssub.s32 %s11, 1
      %p171 = scmp.lt.s32.totalorder %s16, 1
      %s172 = scalar_select %p171, %s16, 1
      %s173 = smul.addr %s172, 32
      %s174 = smul.addr %s173, 4
      %s175 = scalar_lea.vmem %s0, %s174
      %p176 = pneg %p37
      %p177 = pneg %p34
      %p178 = pneg %p58
      %p179 = pneg %p55
      %p180 = pneg %p79
      %p181 = pneg %p76
      %p182 = pneg %p105
      %p183 = pneg %p102
      %p184 = scmp.lt.s32.totalorder %s16, 1
      %s185 = scalar_select %p184, %s16, 1
      %s186 = smul.addr %s185, 32
      %s187 = smul.addr %s186, 4
      %s188 = scalar_lea.vmem %s3, %s187
      %p189 = pneg %p131
      %p190 = pneg %p128
      %p191 = scmp.lt.s32.totalorder %s16, 1
      %s192 = scalar_select %p191, %s16, 1
      %s193 = scalar_lea.vmem %s4, %s192
      %p194 = scmp.lt.s32.totalorder %s16, 1
      %s195 = scalar_select %p194, %s16, 1
      %s196 = smul.addr %s195, 32
      %s197 = smul.addr %s196, 4
      %s198 = scalar_lea.vmem %s0, %s197
      %p199 = scmp.lt.s32.totalorder %s16, 1
      %s200 = scalar_select %p199, %s16, 1
      %s201 = smul.addr %s200, 32
      %s202 = smul.addr %s201, 4
      %s203 = scalar_lea.vmem %s3, %s202
      %p204 = scmp.lt.s32.totalorder %s16, 1
      %s205 = scalar_select %p204, %s16, 1
      %s206 = scalar_lea.vmem %s4, %s205
      %vm207 = vcmask 130048
      %208 = vst.msk [vmem:[#allocation2] sm:$0xff] %vm207, 0.0
      %209 = vst.msk [vmem:[#allocation2 + $0x8] sm:$0xff] %vm207, 0.0
      %vm210 = vcmask 123904
      %211 = vst.msk [vmem:[#allocation2 + $0x10] sm:$0x3] %vm210, 0.0
      %212 = vst.msk [vmem:[#allocation2 + $0x18] sm:$0xff] %vm207, 0.0
      %213 = vst.msk [vmem:[#allocation2 + $0x20] sm:$0xff] %vm207, 0.0
      %214 = vst.msk [vmem:[#allocation2 + $0x28] sm:$0x3] %vm210, 0.0
      %215 = vst.msk [vmem:[#allocation2 + $0x30] sm:$0xff] %vm207, 0.0
      %216 = vst.msk [vmem:[#allocation2 + $0x38] sm:$0xff] %vm207, 0.0
      %217 = vst.msk [vmem:[#allocation2 + $0x40] sm:$0x3] %vm210, 0.0
      %218 = vst.msk [vmem:[#allocation2 + $0x48] sm:$0xff] %vm207, 0.0
      %219 = vst.msk [vmem:[#allocation2 + $0x50] sm:$0xff] %vm207, 0.0
      %220 = vst.msk [vmem:[#allocation2 + $0x58] sm:$0x3] %vm210, 0.0
      %221 = vst.msk [vmem:[#allocation2 + $0x60] sm:$0xff] %vm207, 0.0
      %222 = vst.msk [vmem:[#allocation2 + $0x68] sm:$0xff] %vm207, 0.0
      %223 = vst.msk [vmem:[#allocation2 + $0x70] sm:$0x3] %vm210, 0.0
      %224 = vst.msk [vmem:[#allocation2 + $0x78] sm:$0xff] %vm207, 0.0
      %225 = vst.msk [vmem:[#allocation2 + $0x80] sm:$0xff] %vm207, 0.0
      %226 = vst.msk [vmem:[#allocation2 + $0x88] sm:$0x3] %vm210, 0.0
      %227 = vst.msk [vmem:[#allocation2 + $0x90] sm:$0xff] %vm207, 0.0
      %228 = vst.msk [vmem:[#allocation2 + $0x98] sm:$0xff] %vm207, 0.0
      %229 = vst.msk [vmem:[#allocation2 + $0xa0] sm:$0x3] %vm210, 0.0
      %230 = vst.msk [vmem:[#allocation2 + $0xa8] sm:$0xff] %vm207, 0.0
      %231 = vst.msk [vmem:[#allocation2 + $0xb0] sm:$0xff] %vm207, 0.0
      %232 = vst.msk [vmem:[#allocation2 + $0xb8] sm:$0x3] %vm210, 0.0
      %233 = vst.msk [vmem:[#allocation2 + $0xc0] sm:$0xff] %vm207, 0.0
      %234 = vst.msk [vmem:[#allocation2 + $0xc8] sm:$0xff] %vm207, 0.0
      %235 = vst.msk [vmem:[#allocation2 + $0xd0] sm:$0x3] %vm210, 0.0
      %236 = vst.msk [vmem:[#allocation2 + $0xd8] sm:$0xff] %vm207, 0.0
      %237 = vst.msk [vmem:[#allocation2 + $0xe0] sm:$0xff] %vm207, 0.0
      %238 = vst.msk [vmem:[#allocation2 + $0xe8] sm:$0x3] %vm210, 0.0
      %239 = vst.msk [vmem:[#allocation2 + $0xf0] sm:$0xff] %vm207, 0.0
      %240 = vst.msk [vmem:[#allocation2 + $0xf8] sm:$0xff] %vm207, 0.0
      %241 = vst.msk [vmem:[#allocation2 + $0x100] sm:$0x3] %vm210, 0.0
      %242 = vst.msk [vmem:[#allocation2 + $0x108] sm:$0xff] %vm207, 0.0
      %243 = vst.msk [vmem:[#allocation2 + $0x110] sm:$0xff] %vm207, 0.0
      %244 = vst.msk [vmem:[#allocation2 + $0x118] sm:$0x3] %vm210, 0.0
      %245 = vst.msk [vmem:[#allocation2 + $0x120] sm:$0xff] %vm207, 0.0
      %246 = vst.msk [vmem:[#allocation2 + $0x128] sm:$0xff] %vm207, 0.0
      %247 = vst.msk [vmem:[#allocation2 + $0x130] sm:$0x3] %vm210, 0.0
      %248 = vst.msk [vmem:[#allocation2 + $0x138] sm:$0xff] %vm207, 0.0
      %249 = vst.msk [vmem:[#allocation2 + $0x140] sm:$0xff] %vm207, 0.0
      %250 = vst.msk [vmem:[#allocation2 + $0x148] sm:$0x3] %vm210, 0.0
      %251 = vst.msk [vmem:[#allocation2 + $0x150] sm:$0xff] %vm207, 0.0
      %252 = vst.msk [vmem:[#allocation2 + $0x158] sm:$0xff] %vm207, 0.0
      %253 = vst.msk [vmem:[#allocation2 + $0x160] sm:$0x3] %vm210, 0.0
      %254 = vst.msk [vmem:[#allocation2 + $0x168] sm:$0xff] %vm207, 0.0
      %255 = vst.msk [vmem:[#allocation2 + $0x170] sm:$0xff] %vm207, 0.0
      %256 = vst.msk [vmem:[#allocation2 + $0x178] sm:$0x3] %vm210, 0.0
      %257 = vst.msk [vmem:[#allocation2 + $0x180] sm:$0xff] %vm207, 0.0
      %258 = vst.msk [vmem:[#allocation2 + $0x188] sm:$0xff] %vm207, 0.0
      %259 = vst.msk [vmem:[#allocation2 + $0x190] sm:$0x3] %vm210, 0.0
      %260 = vst.msk [vmem:[#allocation2 + $0x198] sm:$0xff] %vm207, 0.0
      %261 = vst.msk [vmem:[#allocation2 + $0x1a0] sm:$0xff] %vm207, 0.0
      %262 = vst.msk [vmem:[#allocation2 + $0x1a8] sm:$0x3] %vm210, 0.0
      %v263 = vld [vmem:[%s198] sm:$0xf]
      %v264 = vld [vmem:[%s198 + $0x4] sm:$0xf]
      %v265 = vld [vmem:[%s198 + $0x8] sm:$0xf]
      %v266 = vld [vmem:[%s198 + $0xc] sm:$0xf]
      %v267 = vld [vmem:[%s198 + $0x10] sm:$0xf]
      %v268 = vld [vmem:[%s198 + $0x14] sm:$0xf]
      %v269 = vld [vmem:[%s198 + $0x18] sm:$0xf]
      %v270 = vld [vmem:[%s198 + $0x1c] sm:$0xf]
      %v271 = vld [vmem:[%s198 + $0x20] sm:$0xf]
      %v272 = vld [vmem:[%s198 + $0x24] sm:$0xf]
      %v273 = vld [vmem:[%s198 + $0x28] sm:$0xf]
      %v274 = vld [vmem:[%s198 + $0x2c] sm:$0xf]
      %v275 = vld [vmem:[%s198 + $0x30] sm:$0xf]
      %v276 = vld [vmem:[%s198 + $0x34] sm:$0xf]
      %v277 = vld [vmem:[%s198 + $0x38] sm:$0xf]
      %v278 = vld [vmem:[%s198 + $0x3c] sm:$0xf]
      %v279 = vld [vmem:[%s198 + $0x40] sm:$0xf]
      %v280 = vld [vmem:[%s198 + $0x44] sm:$0xf]
      %v281 = vld [vmem:[%s198 + $0x48] sm:$0xf]
      %v282 = vld [vmem:[%s198 + $0x4c] sm:$0xf]
      %v283 = vld [vmem:[%s198 + $0x50] sm:$0xf]
      %v284 = vld [vmem:[%s198 + $0x54] sm:$0xf]
      %v285 = vld [vmem:[%s198 + $0x58] sm:$0xf]
      %v286 = vld [vmem:[%s198 + $0x5c] sm:$0xf]
      %v287 = vld [vmem:[%s198 + $0x60] sm:$0xf]
      %v288 = vld [vmem:[%s198 + $0x64] sm:$0xf]
      %v289 = vld [vmem:[%s198 + $0x68] sm:$0xf]
      %v290 = vld [vmem:[%s198 + $0x6c] sm:$0xf]
      %v291 = vld [vmem:[%s198 + $0x70] sm:$0xf]
      %v292 = vld [vmem:[%s198 + $0x74] sm:$0xf]
      %v293 = vld [vmem:[%s198 + $0x78] sm:$0xf]
      %v294 = vld [vmem:[%s198 + $0x7c] sm:$0xf]
      %v295 = vunpack.c.l.bf16 %v263
      %v296 = vunpack.c.l.bf16 %v264
      %v297 = vunpack.c.l.bf16 %v265
      %v298 = vunpack.c.l.bf16 %v266
      %v299 = vunpack.c.l.bf16 %v267
      %v300 = vunpack.c.l.bf16 %v268
      %v301 = vunpack.c.l.bf16 %v269
      %v302 = vunpack.c.l.bf16 %v270
      %v303 = vunpack.c.l.bf16 %v271
      %v304 = vunpack.c.l.bf16 %v272
      %v305 = vunpack.c.l.bf16 %v273
      %v306 = vunpack.c.l.bf16 %v274
      %v307 = vunpack.c.l.bf16 %v275
      %v308 = vunpack.c.l.bf16 %v276
      %v309 = vunpack.c.l.bf16 %v277
      %v310 = vunpack.c.l.bf16 %v278
      %v311 = vunpack.c.l.bf16 %v279
      %v312 = vunpack.c.l.bf16 %v280
      %v313 = vunpack.c.l.bf16 %v281
      %v314 = vunpack.c.l.bf16 %v282
      %v315 = vunpack.c.l.bf16 %v283
      %v316 = vunpack.c.l.bf16 %v284
      %v317 = vunpack.c.l.bf16 %v285
      %v318 = vunpack.c.l.bf16 %v286
      %v319 = vunpack.c.l.bf16 %v287
      %v320 = vunpack.c.l.bf16 %v288
      %v321 = vunpack.c.l.bf16 %v289
      %v322 = vunpack.c.l.bf16 %v290
      %v323 = vunpack.c.l.bf16 %v291
      %v324 = vunpack.c.l.bf16 %v292
      %v325 = vunpack.c.l.bf16 %v293
      %v326 = vunpack.c.l.bf16 %v294
      %s327 = scalar_lea.vmem [#allocation2], 24
      %328 = vst.msk [vmem:[%s327 + $0x1] sm:$0xff] %vm207, %v295
      %329 = vst.msk [vmem:[%s327 + $0x9] sm:$0xff] %vm207, %v296
      %330 = vst.msk [vmem:[%s327 + $0x19] sm:$0xff] %vm207, %v297
      %331 = vst.msk [vmem:[%s327 + $0x21] sm:$0xff] %vm207, %v298
      %332 = vst.msk [vmem:[%s327 + $0x31] sm:$0xff] %vm207, %v299
      %333 = vst.msk [vmem:[%s327 + $0x39] sm:$0xff] %vm207, %v300
      %334 = vst.msk [vmem:[%s327 + $0x49] sm:$0xff] %vm207, %v301
      %335 = vst.msk [vmem:[%s327 + $0x51] sm:$0xff] %vm207, %v302
      %336 = vst.msk [vmem:[%s327 + $0x61] sm:$0xff] %vm207, %v303
      %337 = vst.msk [vmem:[%s327 + $0x69] sm:$0xff] %vm207, %v304
      %338 = vst.msk [vmem:[%s327 + $0x79] sm:$0xff] %vm207, %v305
      %339 = vst.msk [vmem:[%s327 + $0x81] sm:$0xff] %vm207, %v306
      %340 = vst.msk [vmem:[%s327 + $0x91] sm:$0xff] %vm207, %v307
      %341 = vst.msk [vmem:[%s327 + $0x99] sm:$0xff] %vm207, %v308
      %342 = vst.msk [vmem:[%s327 + $0xa9] sm:$0xff] %vm207, %v309
      %343 = vst.msk [vmem:[%s327 + $0xb1] sm:$0xff] %vm207, %v310
      %344 = vst.msk [vmem:[%s327 + $0xc1] sm:$0xff] %vm207, %v311
      %345 = vst.msk [vmem:[%s327 + $0xc9] sm:$0xff] %vm207, %v312
      %346 = vst.msk [vmem:[%s327 + $0xd9] sm:$0xff] %vm207, %v313
      %347 = vst.msk [vmem:[%s327 + $0xe1] sm:$0xff] %vm207, %v314
      %348 = vst.msk [vmem:[%s327 + $0xf1] sm:$0xff] %vm207, %v315
      %349 = vst.msk [vmem:[%s327 + $0xf9] sm:$0xff] %vm207, %v316
      %350 = vst.msk [vmem:[%s327 + $0x109] sm:$0xff] %vm207, %v317
      %351 = vst.msk [vmem:[%s327 + $0x111] sm:$0xff] %vm207, %v318
      %352 = vst.msk [vmem:[%s327 + $0x121] sm:$0xff] %vm207, %v319
      %353 = vst.msk [vmem:[%s327 + $0x129] sm:$0xff] %vm207, %v320
      %354 = vst.msk [vmem:[%s327 + $0x139] sm:$0xff] %vm207, %v321
      %355 = vst.msk [vmem:[%s327 + $0x141] sm:$0xff] %vm207, %v322
      %356 = vst.msk [vmem:[%s327 + $0x151] sm:$0xff] %vm207, %v323
      %357 = vst.msk [vmem:[%s327 + $0x159] sm:$0xff] %vm207, %v324
      %358 = vst.msk [vmem:[%s327 + $0x169] sm:$0xff] %vm207, %v325
      %359 = vst.msk [vmem:[%s327 + $0x171] sm:$0xff] %vm207, %v326
      %v360 = vld [vmem:[#allocation2] sm:$0xff]
      %v361 = vld [vmem:[#allocation2 + $0x8] sm:$0xff]
      %v362 = vld [vmem:[#allocation2 + $0x10] sm:$0x3]
      %v363 = vld [vmem:[#allocation2 + $0x18] sm:$0xff]
      %v364 = vld [vmem:[#allocation2 + $0x20] sm:$0xff]
      %v365 = vld [vmem:[#allocation2 + $0x28] sm:$0x3]
      %v366 = vld [vmem:[#allocation2 + $0x30] sm:$0xff]
      %v367 = vld [vmem:[#allocation2 + $0x38] sm:$0xff]
      %v368 = vld [vmem:[#allocation2 + $0x40] sm:$0x3]
      %v369 = vld [vmem:[#allocation2 + $0x48] sm:$0xff]
      %v370 = vld [vmem:[#allocation2 + $0x50] sm:$0xff]
      %v371 = vld [vmem:[#allocation2 + $0x58] sm:$0x3]
      %v372 = vld [vmem:[#allocation2 + $0x60] sm:$0xff]
      %v373 = vld [vmem:[#allocation2 + $0x68] sm:$0xff]
      %v374 = vld [vmem:[#allocation2 + $0x70] sm:$0x3]
      %v375 = vld [vmem:[#allocation2 + $0x78] sm:$0xff]
      %v376 = vld [vmem:[#allocation2 + $0x80] sm:$0xff]
      %v377 = vld [vmem:[#allocation2 + $0x88] sm:$0x3]
      %v378 = vld [vmem:[#allocation2 + $0x90] sm:$0xff]
      %v379 = vld [vmem:[#allocation2 + $0x98] sm:$0xff]
      %v380 = vld [vmem:[#allocation2 + $0xa0] sm:$0x3]
      %v381 = vld [vmem:[#allocation2 + $0xa8] sm:$0xff]
      %v382 = vld [vmem:[#allocation2 + $0xb0] sm:$0xff]
      %v383 = vld [vmem:[#allocation2 + $0xb8] sm:$0x3]
      %v384 = vld [vmem:[#allocation2 + $0xc0] sm:$0xff]
      %v385 = vld [vmem:[#allocation2 + $0xc8] sm:$0xff]
      %v386 = vld [vmem:[#allocation2 + $0xd0] sm:$0x3]
      %v387 = vld [vmem:[#allocation2 + $0xd8] sm:$0xff]
      %v388 = vld [vmem:[#allocation2 + $0xe0] sm:$0xff]
      %v389 = vld [vmem:[#allocation2 + $0xe8] sm:$0x3]
      %v390 = vld [vmem:[#allocation2 + $0xf0] sm:$0xff]
      %v391 = vld [vmem:[#allocation2 + $0xf8] sm:$0xff]
      %v392 = vld [vmem:[#allocation2 + $0x100] sm:$0x3]
      %v393 = vld [vmem:[#allocation2 + $0x108] sm:$0xff]
      %v394 = vld [vmem:[#allocation2 + $0x110] sm:$0xff]
      %v395 = vld [vmem:[#allocation2 + $0x118] sm:$0x3]
      %v396 = vld [vmem:[#allocation2 + $0x120] sm:$0xff]
      %v397 = vld [vmem:[#allocation2 + $0x128] sm:$0xff]
      %v398 = vld [vmem:[#allocation2 + $0x130] sm:$0x3]
      %v399 = vld [vmem:[#allocation2 + $0x138] sm:$0xff]
      %v400 = vld [vmem:[#allocation2 + $0x140] sm:$0xff]
      %v401 = vld [vmem:[#allocation2 + $0x148] sm:$0x3]
      %v402 = vld [vmem:[#allocation2 + $0x150] sm:$0xff]
      %v403 = vld [vmem:[#allocation2 + $0x158] sm:$0xff]
      %v404 = vld [vmem:[#allocation2 + $0x160] sm:$0x3]
      %v405 = vld [vmem:[#allocation2 + $0x168] sm:$0xff]
      %v406 = vld [vmem:[#allocation2 + $0x170] sm:$0xff]
      %v407 = vld [vmem:[#allocation2 + $0x178] sm:$0x3]
      %v408 = vld [vmem:[#allocation2 + $0x180] sm:$0xff]
      %v409 = vld [vmem:[#allocation2 + $0x188] sm:$0xff]
      %v410 = vld [vmem:[#allocation2 + $0x190] sm:$0x3]
      %v411 = vld [vmem:[#allocation2 + $0x198] sm:$0xff]
      %v412 = vld [vmem:[#allocation2 + $0x1a0] sm:$0xff]
      %v413 = vld [vmem:[#allocation2 + $0x1a8] sm:$0x3]
      %v414 = vld [vmem:[%s1] sm:$0x7]
      %v415 = vld [vmem:[%s1 + $0x4] sm:$0x7]
      %v416 = vld [vmem:[%s1 + $0x8] sm:$0x7]
      %v417 = vlaneseq
      %v418 = vshrl.u32 %v417, 7
      %v419 = vsub.s32 0, %v418
      %v420 = vrot.slane %v414, %v419
      %v421 = vmul.f32 %v360, %v420
      %v422 = vmul.f32 %v361, %v420
      %v423 = vmul.f32 %v363, %v420
      %v424 = vmul.f32 %v364, %v420
      %v425 = vmul.f32 %v366, %v420
      %v426 = vmul.f32 %v367, %v420
      %v427 = vmul.f32 %v369, %v420
      %v428 = vmul.f32 %v370, %v420
      %v429 = vmul.f32 %v372, %v420
      %v430 = vmul.f32 %v373, %v420
      %v431 = vmul.f32 %v375, %v420
      %v432 = vmul.f32 %v376, %v420
      %v433 = vmul.f32 %v378, %v420
      %v434 = vmul.f32 %v379, %v420
      %v435 = vmul.f32 %v381, %v420
      %v436 = vmul.f32 %v382, %v420
      %v437 = vmul.f32 %v384, %v420
      %v438 = vmul.f32 %v385, %v420
      %v439 = vmul.f32 %v387, %v420
      %v440 = vmul.f32 %v388, %v420
      %v441 = vmul.f32 %v390, %v420
      %v442 = vmul.f32 %v391, %v420
      %v443 = vmul.f32 %v393, %v420
      %v444 = vmul.f32 %v394, %v420
      %v445 = vmul.f32 %v396, %v420
      %v446 = vmul.f32 %v397, %v420
      %v447 = vmul.f32 %v399, %v420
      %v448 = vmul.f32 %v400, %v420
      %v449 = vmul.f32 %v402, %v420
      %v450 = vmul.f32 %v403, %v420
      %v451 = vmul.f32 %v405, %v420
      %v452 = vmul.f32 %v406, %v420
      %v453 = vadd.f32 %v421, 0.0
      %v454 = vadd.f32 %v422, 0.0
      %v455 = vadd.f32 %v423, 0.0
      %v456 = vadd.f32 %v424, 0.0
      %v457 = vadd.f32 %v425, 0.0
      %v458 = vadd.f32 %v426, 0.0
      %v459 = vadd.f32 %v427, 0.0
      %v460 = vadd.f32 %v428, 0.0
      %v461 = vadd.f32 %v429, 0.0
      %v462 = vadd.f32 %v430, 0.0
      %v463 = vadd.f32 %v431, 0.0
      %v464 = vadd.f32 %v432, 0.0
      %v465 = vadd.f32 %v433, 0.0
      %v466 = vadd.f32 %v434, 0.0
      %v467 = vadd.f32 %v435, 0.0
      %v468 = vadd.f32 %v436, 0.0
      %v469 = vadd.f32 %v437, 0.0
      %v470 = vadd.f32 %v438, 0.0
      %v471 = vadd.f32 %v439, 0.0
      %v472 = vadd.f32 %v440, 0.0
      %v473 = vadd.f32 %v441, 0.0
      %v474 = vadd.f32 %v442, 0.0
      %v475 = vadd.f32 %v443, 0.0
      %v476 = vadd.f32 %v444, 0.0
      %v477 = vadd.f32 %v445, 0.0
      %v478 = vadd.f32 %v446, 0.0
      %v479 = vadd.f32 %v447, 0.0
      %v480 = vadd.f32 %v448, 0.0
      %v481 = vadd.f32 %v449, 0.0
      %v482 = vadd.f32 %v450, 0.0
      %v483 = vadd.f32 %v451, 0.0
      %v484 = vadd.f32 %v452, 0.0
      %v485 = vlaneseq
      %v486 = vshrl.u32 %v485, 7
      %v487 = vsub.s32 1, %v486
      %v488 = vrot.slane %v414, %v487
      %v489 = vmul.f32 %v360, %v488
      %v490 = vmul.f32 %v361, %v488
      %v491 = vmul.f32 %v362, %v488
      %v492 = vmul.f32 %v363, %v488
      %v493 = vmul.f32 %v364, %v488
      %v494 = vmul.f32 %v365, %v488
      %v495 = vmul.f32 %v366, %v488
      %v496 = vmul.f32 %v367, %v488
      %v497 = vmul.f32 %v368, %v488
      %v498 = vmul.f32 %v369, %v488
      %v499 = vmul.f32 %v370, %v488
      %v500 = vmul.f32 %v371, %v488
      %v501 = vmul.f32 %v372, %v488
      %v502 = vmul.f32 %v373, %v488
      %v503 = vmul.f32 %v374, %v488
      %v504 = vmul.f32 %v375, %v488
      %v505 = vmul.f32 %v376, %v488
      %v506 = vmul.f32 %v377, %v488
      %v507 = vmul.f32 %v378, %v488
      %v508 = vmul.f32 %v379, %v488
      %v509 = vmul.f32 %v380, %v488
      %v510 = vmul.f32 %v381, %v488
      %v511 = vmul.f32 %v382, %v488
      %v512 = vmul.f32 %v383, %v488
      %v513 = vmul.f32 %v384, %v488
      %v514 = vmul.f32 %v385, %v488
      %v515 = vmul.f32 %v386, %v488
      %v516 = vmul.f32 %v387, %v488
      %v517 = vmul.f32 %v388, %v488
      %v518 = vmul.f32 %v389, %v488
      %v519 = vmul.f32 %v390, %v488
      %v520 = vmul.f32 %v391, %v488
      %v521 = vmul.f32 %v392, %v488
      %v522 = vmul.f32 %v393, %v488
      %v523 = vmul.f32 %v394, %v488
      %v524 = vmul.f32 %v395, %v488
      %v525 = vmul.f32 %v396, %v488
      %v526 = vmul.f32 %v397, %v488
      %v527 = vmul.f32 %v398, %v488
      %v528 = vmul.f32 %v399, %v488
      %v529 = vmul.f32 %v400, %v488
      %v530 = vmul.f32 %v401, %v488
      %v531 = vmul.f32 %v402, %v488
      %v532 = vmul.f32 %v403, %v488
      %v533 = vmul.f32 %v404, %v488
      %v534 = vmul.f32 %v405, %v488
      %v535 = vmul.f32 %v406, %v488
      %v536 = vmul.f32 %v407, %v488
      %vm585 = vcmask 1046528
      %v586 = vrot.slane %v489, 1
      %v587 = vrot.slane %v490, 1
      %v588 = vsel %vm585, %v586, %v587
      %v589 = vrot.slane %v491, 1
      %v590 = vsel %vm585, %v587, %v589
      %v591 = vrot.slane %v492, 1
      %v592 = vrot.slane %v493, 1
      %v593 = vsel %vm585, %v591, %v592
      %v594 = vrot.slane %v494, 1
      %v595 = vsel %vm585, %v592, %v594
      %v596 = vrot.slane %v495, 1
      %v597 = vrot.slane %v496, 1
      %v598 = vsel %vm585, %v596, %v597
      %v599 = vrot.slane %v497, 1
      %v600 = vsel %vm585, %v597, %v599
      %v601 = vrot.slane %v498, 1
      %v602 = vrot.slane %v499, 1
      %v603 = vsel %vm585, %v601, %v602
      %v604 = vrot.slane %v500, 1
      %v605 = vsel %vm585, %v602, %v604
      %v606 = vrot.slane %v501, 1
      %v607 = vrot.slane %v502, 1
      %v608 = vsel %vm585, %v606, %v607
      %v609 = vrot.slane %v503, 1
      %v610 = vsel %vm585, %v607, %v609
      %v611 = vrot.slane %v504, 1
      %v612 = vrot.slane %v505, 1
      %v613 = vsel %vm585, %v611, %v612
      %v614 = vrot.slane %v506, 1
      %v615 = vsel %vm585, %v612, %v614
      %v616 = vrot.slane %v507, 1
      %v617 = vrot.slane %v508, 1
      %v618 = vsel %vm585, %v616, %v617
      %v619 = vrot.slane %v509, 1
      %v620 = vsel %vm585, %v617, %v619
      %v621 = vrot.slane %v510, 1
      %v622 = vrot.slane %v511, 1
      %v623 = vsel %vm585, %v621, %v622
      %v624 = vrot.slane %v512, 1
      %v625 = vsel %vm585, %v622, %v624
      %v626 = vrot.slane %v513, 1
      %v627 = vrot.slane %v514, 1
      %v628 = vsel %vm585, %v626, %v627
      %v629 = vrot.slane %v515, 1
      %v630 = vsel %vm585, %v627, %v629
      %v631 = vrot.slane %v516, 1
      %v632 = vrot.slane %v517, 1
      %v633 = vsel %vm585, %v631, %v632
      %v634 = vrot.slane %v518, 1
      %v635 = vsel %vm585, %v632, %v634
      %v636 = vrot.slane %v519, 1
      %v637 = vrot.slane %v520, 1
      %v638 = vsel %vm585, %v636, %v637
      %v639 = vrot.slane %v521, 1
      %v640 = vsel %vm585, %v637, %v639
      %v641 = vrot.slane %v522, 1
      %v642 = vrot.slane %v523, 1
      %v643 = vsel %vm585, %v641, %v642
      %v644 = vrot.slane %v524, 1
      %v645 = vsel %vm585, %v642, %v644
      %v646 = vrot.slane %v525, 1
      %v647 = vrot.slane %v526, 1
      %v648 = vsel %vm585, %v646, %v647
      %v649 = vrot.slane %v527, 1
      %v650 = vsel %vm585, %v647, %v649
      %v651 = vrot.slane %v528, 1
      %v652 = vrot.slane %v529, 1
      %v653 = vsel %vm585, %v651, %v652
      %v654 = vrot.slane %v530, 1
      %v655 = vsel %vm585, %v652, %v654
      %v656 = vrot.slane %v531, 1
      %v657 = vrot.slane %v532, 1
      %v658 = vsel %vm585, %v656, %v657
      %v659 = vrot.slane %v533, 1
      %v660 = vsel %vm585, %v657, %v659
      %v661 = vrot.slane %v534, 1
      %v662 = vrot.slane %v535, 1
      %v663 = vsel %vm585, %v661, %v662
      %v664 = vrot.slane %v536, 1
      %v665 = vsel %vm585, %v662, %v664
      %v698 = vadd.f32 %v453, %v588
      %v699 = vadd.f32 %v454, %v590
      %v700 = vadd.f32 %v455, %v593
      %v701 = vadd.f32 %v456, %v595
      %v702 = vadd.f32 %v457, %v598
      %v703 = vadd.f32 %v458, %v600
      %v704 = vadd.f32 %v459, %v603
      %v705 = vadd.f32 %v460, %v605
      %v706 = vadd.f32 %v461, %v608
      %v707 = vadd.f32 %v462, %v610
      %v708 = vadd.f32 %v463, %v613
      %v709 = vadd.f32 %v464, %v615
      %v710 = vadd.f32 %v465, %v618
      %v711 = vadd.f32 %v466, %v620
      %v712 = vadd.f32 %v467, %v623
      %v713 = vadd.f32 %v468, %v625
      %v714 = vadd.f32 %v469, %v628
      %v715 = vadd.f32 %v470, %v630
      %v716 = vadd.f32 %v471, %v633
      %v717 = vadd.f32 %v472, %v635
      %v718 = vadd.f32 %v473, %v638
      %v719 = vadd.f32 %v474, %v640
      %v720 = vadd.f32 %v475, %v643
      %v721 = vadd.f32 %v476, %v645
      %v722 = vadd.f32 %v477, %v648
      %v723 = vadd.f32 %v478, %v650
      %v724 = vadd.f32 %v479, %v653
      %v725 = vadd.f32 %v480, %v655
      %v726 = vadd.f32 %v481, %v658
      %v727 = vadd.f32 %v482, %v660
      %v728 = vadd.f32 %v483, %v663
      %v729 = vadd.f32 %v484, %v665
      %v730 = vlaneseq
      %v731 = vshrl.u32 %v730, 7
      %v732 = vsub.s32 2, %v731
      %v733 = vrot.slane %v414, %v732
      %v734 = vmul.f32 %v360, %v733
      %v735 = vmul.f32 %v361, %v733
      %v736 = vmul.f32 %v362, %v733
      %v737 = vmul.f32 %v363, %v733
      %v738 = vmul.f32 %v364, %v733
      %v739 = vmul.f32 %v365, %v733
      %v740 = vmul.f32 %v366, %v733
      %v741 = vmul.f32 %v367, %v733
      %v742 = vmul.f32 %v368, %v733
      %v743 = vmul.f32 %v369, %v733
      %v744 = vmul.f32 %v370, %v733
      %v745 = vmul.f32 %v371, %v733
      %v746 = vmul.f32 %v372, %v733
      %v747 = vmul.f32 %v373, %v733
      %v748 = vmul.f32 %v374, %v733
      %v749 = vmul.f32 %v375, %v733
      %v750 = vmul.f32 %v376, %v733
      %v751 = vmul.f32 %v377, %v733
      %v752 = vmul.f32 %v378, %v733
      %v753 = vmul.f32 %v379, %v733
      %v754 = vmul.f32 %v380, %v733
      %v755 = vmul.f32 %v381, %v733
      %v756 = vmul.f32 %v382, %v733
      %v757 = vmul.f32 %v383, %v733
      %v758 = vmul.f32 %v384, %v733
      %v759 = vmul.f32 %v385, %v733
      %v760 = vmul.f32 %v386, %v733
      %v761 = vmul.f32 %v387, %v733
      %v762 = vmul.f32 %v388, %v733
      %v763 = vmul.f32 %v389, %v733
      %v764 = vmul.f32 %v390, %v733
      %v765 = vmul.f32 %v391, %v733
      %v766 = vmul.f32 %v392, %v733
      %v767 = vmul.f32 %v393, %v733
      %v768 = vmul.f32 %v394, %v733
      %v769 = vmul.f32 %v395, %v733
      %v770 = vmul.f32 %v396, %v733
      %v771 = vmul.f32 %v397, %v733
      %v772 = vmul.f32 %v398, %v733
      %v773 = vmul.f32 %v399, %v733
      %v774 = vmul.f32 %v400, %v733
      %v775 = vmul.f32 %v401, %v733
      %v776 = vmul.f32 %v402, %v733
      %v777 = vmul.f32 %v403, %v733
      %v778 = vmul.f32 %v404, %v733
      %v779 = vmul.f32 %v405, %v733
      %v780 = vmul.f32 %v406, %v733
      %v781 = vmul.f32 %v407, %v733
      %vm830 = vcmask 1045504
      %v831 = vrot.slane %v734, 2
      %v832 = vrot.slane %v735, 2
      %v833 = vsel %vm830, %v831, %v832
      %v834 = vrot.slane %v736, 2
      %v835 = vsel %vm830, %v832, %v834
      %v836 = vrot.slane %v737, 2
      %v837 = vrot.slane %v738, 2
      %v838 = vsel %vm830, %v836, %v837
      %v839 = vrot.slane %v739, 2
      %v840 = vsel %vm830, %v837, %v839
      %v841 = vrot.slane %v740, 2
      %v842 = vrot.slane %v741, 2
      %v843 = vsel %vm830, %v841, %v842
      %v844 = vrot.slane %v742, 2
      %v845 = vsel %vm830, %v842, %v844
      %v846 = vrot.slane %v743, 2
      %v847 = vrot.slane %v744, 2
      %v848 = vsel %vm830, %v846, %v847
      %v849 = vrot.slane %v745, 2
      %v850 = vsel %vm830, %v847, %v849
      %v851 = vrot.slane %v746, 2
      %v852 = vrot.slane %v747, 2
      %v853 = vsel %vm830, %v851, %v852
      %v854 = vrot.slane %v748, 2
      %v855 = vsel %vm830, %v852, %v854
      %v856 = vrot.slane %v749, 2
      %v857 = vrot.slane %v750, 2
      %v858 = vsel %vm830, %v856, %v857
      %v859 = vrot.slane %v751, 2
      %v860 = vsel %vm830, %v857, %v859
      %v861 = vrot.slane %v752, 2
      %v862 = vrot.slane %v753, 2
      %v863 = vsel %vm830, %v861, %v862
      %v864 = vrot.slane %v754, 2
      %v865 = vsel %vm830, %v862, %v864
      %v866 = vrot.slane %v755, 2
      %v867 = vrot.slane %v756, 2
      %v868 = vsel %vm830, %v866, %v867
      %v869 = vrot.slane %v757, 2
      %v870 = vsel %vm830, %v867, %v869
      %v871 = vrot.slane %v758, 2
      %v872 = vrot.slane %v759, 2
      %v873 = vsel %vm830, %v871, %v872
      %v874 = vrot.slane %v760, 2
      %v875 = vsel %vm830, %v872, %v874
      %v876 = vrot.slane %v761, 2
      %v877 = vrot.slane %v762, 2
      %v878 = vsel %vm830, %v876, %v877
      %v879 = vrot.slane %v763, 2
      %v880 = vsel %vm830, %v877, %v879
      %v881 = vrot.slane %v764, 2
      %v882 = vrot.slane %v765, 2
      %v883 = vsel %vm830, %v881, %v882
      %v884 = vrot.slane %v766, 2
      %v885 = vsel %vm830, %v882, %v884
      %v886 = vrot.slane %v767, 2
      %v887 = vrot.slane %v768, 2
      %v888 = vsel %vm830, %v886, %v887
      %v889 = vrot.slane %v769, 2
      %v890 = vsel %vm830, %v887, %v889
      %v891 = vrot.slane %v770, 2
      %v892 = vrot.slane %v771, 2
      %v893 = vsel %vm830, %v891, %v892
      %v894 = vrot.slane %v772, 2
      %v895 = vsel %vm830, %v892, %v894
      %v896 = vrot.slane %v773, 2
      %v897 = vrot.slane %v774, 2
      %v898 = vsel %vm830, %v896, %v897
      %v899 = vrot.slane %v775, 2
      %v900 = vsel %vm830, %v897, %v899
      %v901 = vrot.slane %v776, 2
      %v902 = vrot.slane %v777, 2
      %v903 = vsel %vm830, %v901, %v902
      %v904 = vrot.slane %v778, 2
      %v905 = vsel %vm830, %v902, %v904
      %v906 = vrot.slane %v779, 2
      %v907 = vrot.slane %v780, 2
      %v908 = vsel %vm830, %v906, %v907
      %v909 = vrot.slane %v781, 2
      %v910 = vsel %vm830, %v907, %v909
      %v943 = vadd.f32 %v698, %v833
      %v944 = vadd.f32 %v699, %v835
      %v945 = vadd.f32 %v700, %v838
      %v946 = vadd.f32 %v701, %v840
      %v947 = vadd.f32 %v702, %v843
      %v948 = vadd.f32 %v703, %v845
      %v949 = vadd.f32 %v704, %v848
      %v950 = vadd.f32 %v705, %v850
      %v951 = vadd.f32 %v706, %v853
      %v952 = vadd.f32 %v707, %v855
      %v953 = vadd.f32 %v708, %v858
      %v954 = vadd.f32 %v709, %v860
      %v955 = vadd.f32 %v710, %v863
      %v956 = vadd.f32 %v711, %v865
      %v957 = vadd.f32 %v712, %v868
      %v958 = vadd.f32 %v713, %v870
      %v959 = vadd.f32 %v714, %v873
      %v960 = vadd.f32 %v715, %v875
      %v961 = vadd.f32 %v716, %v878
      %v962 = vadd.f32 %v717, %v880
      %v963 = vadd.f32 %v718, %v883
      %v964 = vadd.f32 %v719, %v885
      %v965 = vadd.f32 %v720, %v888
      %v966 = vadd.f32 %v721, %v890
      %v967 = vadd.f32 %v722, %v893
      %v968 = vadd.f32 %v723, %v895
      %v969 = vadd.f32 %v724, %v898
      %v970 = vadd.f32 %v725, %v900
      %v971 = vadd.f32 %v726, %v903
      %v972 = vadd.f32 %v727, %v905
      %v973 = vadd.f32 %v728, %v908
      %v974 = vadd.f32 %v729, %v910
      %v975 = vlaneseq
      %v976 = vshrl.u32 %v975, 7
      %v977 = vsub.s32 0, %v976
      %v978 = vrot.slane %v415, %v977
      %v979 = vmul.f32 %v363, %v978
      %v980 = vmul.f32 %v364, %v978
      %v981 = vmul.f32 %v366, %v978
      %v982 = vmul.f32 %v367, %v978
      %v983 = vmul.f32 %v369, %v978
      %v984 = vmul.f32 %v370, %v978
      %v985 = vmul.f32 %v372, %v978
      %v986 = vmul.f32 %v373, %v978
      %v987 = vmul.f32 %v375, %v978
      %v988 = vmul.f32 %v376, %v978
      %v989 = vmul.f32 %v378, %v978
      %v990 = vmul.f32 %v379, %v978
      %v991 = vmul.f32 %v381, %v978
      %v992 = vmul.f32 %v382, %v978
      %v993 = vmul.f32 %v384, %v978
      %v994 = vmul.f32 %v385, %v978
      %v995 = vmul.f32 %v387, %v978
      %v996 = vmul.f32 %v388, %v978
      %v997 = vmul.f32 %v390, %v978
      %v998 = vmul.f32 %v391, %v978
      %v999 = vmul.f32 %v393, %v978
      %v1000 = vmul.f32 %v394, %v978
      %v1001 = vmul.f32 %v396, %v978
      %v1002 = vmul.f32 %v397, %v978
      %v1003 = vmul.f32 %v399, %v978
      %v1004 = vmul.f32 %v400, %v978
      %v1005 = vmul.f32 %v402, %v978
      %v1006 = vmul.f32 %v403, %v978
      %v1007 = vmul.f32 %v405, %v978
      %v1008 = vmul.f32 %v406, %v978
      %v1009 = vmul.f32 %v408, %v978
      %v1010 = vmul.f32 %v409, %v978
      %v1011 = vadd.f32 %v943, %v979
      %v1012 = vadd.f32 %v944, %v980
      %v1013 = vadd.f32 %v945, %v981
      %v1014 = vadd.f32 %v946, %v982
      %v1015 = vadd.f32 %v947, %v983
      %v1016 = vadd.f32 %v948, %v984
      %v1017 = vadd.f32 %v949, %v985
      %v1018 = vadd.f32 %v950, %v986
      %v1019 = vadd.f32 %v951, %v987
      %v1020 = vadd.f32 %v952, %v988
      %v1021 = vadd.f32 %v953, %v989
      %v1022 = vadd.f32 %v954, %v990
      %v1023 = vadd.f32 %v955, %v991
      %v1024 = vadd.f32 %v956, %v992
      %v1025 = vadd.f32 %v957, %v993
      %v1026 = vadd.f32 %v958, %v994
      %v1027 = vadd.f32 %v959, %v995
      %v1028 = vadd.f32 %v960, %v996
      %v1029 = vadd.f32 %v961, %v997
      %v1030 = vadd.f32 %v962, %v998
      %v1031 = vadd.f32 %v963, %v999
      %v1032 = vadd.f32 %v964, %v1000
      %v1033 = vadd.f32 %v965, %v1001
      %v1034 = vadd.f32 %v966, %v1002
      %v1035 = vadd.f32 %v967, %v1003
      %v1036 = vadd.f32 %v968, %v1004
      %v1037 = vadd.f32 %v969, %v1005
      %v1038 = vadd.f32 %v970, %v1006
      %v1039 = vadd.f32 %v971, %v1007
      %v1040 = vadd.f32 %v972, %v1008
      %v1041 = vadd.f32 %v973, %v1009
      %v1042 = vadd.f32 %v974, %v1010
      %v1043 = vlaneseq
      %v1044 = vshrl.u32 %v1043, 7
      %v1045 = vsub.s32 1, %v1044
      %v1046 = vrot.slane %v415, %v1045
      %v1047 = vmul.f32 %v363, %v1046
      %v1048 = vmul.f32 %v364, %v1046
      %v1049 = vmul.f32 %v365, %v1046
      %v1050 = vmul.f32 %v366, %v1046
      %v1051 = vmul.f32 %v367, %v1046
      %v1052 = vmul.f32 %v368, %v1046
      %v1053 = vmul.f32 %v369, %v1046
      %v1054 = vmul.f32 %v370, %v1046
      %v1055 = vmul.f32 %v371, %v1046
      %v1056 = vmul.f32 %v372, %v1046
      %v1057 = vmul.f32 %v373, %v1046
      %v1058 = vmul.f32 %v374, %v1046
      %v1059 = vmul.f32 %v375, %v1046
      %v1060 = vmul.f32 %v376, %v1046
      %v1061 = vmul.f32 %v377, %v1046
      %v1062 = vmul.f32 %v378, %v1046
      %v1063 = vmul.f32 %v379, %v1046
      %v1064 = vmul.f32 %v380, %v1046
      %v1065 = vmul.f32 %v381, %v1046
      %v1066 = vmul.f32 %v382, %v1046
      %v1067 = vmul.f32 %v383, %v1046
      %v1068 = vmul.f32 %v384, %v1046
      %v1069 = vmul.f32 %v385, %v1046
      %v1070 = vmul.f32 %v386, %v1046
      %v1071 = vmul.f32 %v387, %v1046
      %v1072 = vmul.f32 %v388, %v1046
      %v1073 = vmul.f32 %v389, %v1046
      %v1074 = vmul.f32 %v390, %v1046
      %v1075 = vmul.f32 %v391, %v1046
      %v1076 = vmul.f32 %v392, %v1046
      %v1077 = vmul.f32 %v393, %v1046
      %v1078 = vmul.f32 %v394, %v1046
      %v1079 = vmul.f32 %v395, %v1046
      %v1080 = vmul.f32 %v396, %v1046
      %v1081 = vmul.f32 %v397, %v1046
      %v1082 = vmul.f32 %v398, %v1046
      %v1083 = vmul.f32 %v399, %v1046
      %v1084 = vmul.f32 %v400, %v1046
      %v1085 = vmul.f32 %v401, %v1046
      %v1086 = vmul.f32 %v402, %v1046
      %v1087 = vmul.f32 %v403, %v1046
      %v1088 = vmul.f32 %v404, %v1046
      %v1089 = vmul.f32 %v405, %v1046
      %v1090 = vmul.f32 %v406, %v1046
      %v1091 = vmul.f32 %v407, %v1046
      %v1092 = vmul.f32 %v408, %v1046
      %v1093 = vmul.f32 %v409, %v1046
      %v1094 = vmul.f32 %v410, %v1046
      %v1143 = vrot.slane %v1047, 1
      %v1144 = vrot.slane %v1048, 1
      %v1145 = vsel %vm585, %v1143, %v1144
      %v1146 = vrot.slane %v1049, 1
      %v1147 = vsel %vm585, %v1144, %v1146
      %v1148 = vrot.slane %v1050, 1
      %v1149 = vrot.slane %v1051, 1
      %v1150 = vsel %vm585, %v1148, %v1149
      %v1151 = vrot.slane %v1052, 1
      %v1152 = vsel %vm585, %v1149, %v1151
      %v1153 = vrot.slane %v1053, 1
      %v1154 = vrot.slane %v1054, 1
      %v1155 = vsel %vm585, %v1153, %v1154
      %v1156 = vrot.slane %v1055, 1
      %v1157 = vsel %vm585, %v1154, %v1156
      %v1158 = vrot.slane %v1056, 1
      %v1159 = vrot.slane %v1057, 1
      %v1160 = vsel %vm585, %v1158, %v1159
      %v1161 = vrot.slane %v1058, 1
      %v1162 = vsel %vm585, %v1159, %v1161
      %v1163 = vrot.slane %v1059, 1
      %v1164 = vrot.slane %v1060, 1
      %v1165 = vsel %vm585, %v1163, %v1164
      %v1166 = vrot.slane %v1061, 1
      %v1167 = vsel %vm585, %v1164, %v1166
      %v1168 = vrot.slane %v1062, 1
      %v1169 = vrot.slane %v1063, 1
      %v1170 = vsel %vm585, %v1168, %v1169
      %v1171 = vrot.slane %v1064, 1
      %v1172 = vsel %vm585, %v1169, %v1171
      %v1173 = vrot.slane %v1065, 1
      %v1174 = vrot.slane %v1066, 1
      %v1175 = vsel %vm585, %v1173, %v1174
      %v1176 = vrot.slane %v1067, 1
      %v1177 = vsel %vm585, %v1174, %v1176
      %v1178 = vrot.slane %v1068, 1
      %v1179 = vrot.slane %v1069, 1
      %v1180 = vsel %vm585, %v1178, %v1179
      %v1181 = vrot.slane %v1070, 1
      %v1182 = vsel %vm585, %v1179, %v1181
      %v1183 = vrot.slane %v1071, 1
      %v1184 = vrot.slane %v1072, 1
      %v1185 = vsel %vm585, %v1183, %v1184
      %v1186 = vrot.slane %v1073, 1
      %v1187 = vsel %vm585, %v1184, %v1186
      %v1188 = vrot.slane %v1074, 1
      %v1189 = vrot.slane %v1075, 1
      %v1190 = vsel %vm585, %v1188, %v1189
      %v1191 = vrot.slane %v1076, 1
      %v1192 = vsel %vm585, %v1189, %v1191
      %v1193 = vrot.slane %v1077, 1
      %v1194 = vrot.slane %v1078, 1
      %v1195 = vsel %vm585, %v1193, %v1194
      %v1196 = vrot.slane %v1079, 1
      %v1197 = vsel %vm585, %v1194, %v1196
      %v1198 = vrot.slane %v1080, 1
      %v1199 = vrot.slane %v1081, 1
      %v1200 = vsel %vm585, %v1198, %v1199
      %v1201 = vrot.slane %v1082, 1
      %v1202 = vsel %vm585, %v1199, %v1201
      %v1203 = vrot.slane %v1083, 1
      %v1204 = vrot.slane %v1084, 1
      %v1205 = vsel %vm585, %v1203, %v1204
      %v1206 = vrot.slane %v1085, 1
      %v1207 = vsel %vm585, %v1204, %v1206
      %v1208 = vrot.slane %v1086, 1
      %v1209 = vrot.slane %v1087, 1
      %v1210 = vsel %vm585, %v1208, %v1209
      %v1211 = vrot.slane %v1088, 1
      %v1212 = vsel %vm585, %v1209, %v1211
      %v1213 = vrot.slane %v1089, 1
      %v1214 = vrot.slane %v1090, 1
      %v1215 = vsel %vm585, %v1213, %v1214
      %v1216 = vrot.slane %v1091, 1
      %v1217 = vsel %vm585, %v1214, %v1216
      %v1218 = vrot.slane %v1092, 1
      %v1219 = vrot.slane %v1093, 1
      %v1220 = vsel %vm585, %v1218, %v1219
      %v1221 = vrot.slane %v1094, 1
      %v1222 = vsel %vm585, %v1219, %v1221
      %v1255 = vadd.f32 %v1011, %v1145
      %v1256 = vadd.f32 %v1012, %v1147
      %v1257 = vadd.f32 %v1013, %v1150
      %v1258 = vadd.f32 %v1014, %v1152
      %v1259 = vadd.f32 %v1015, %v1155
      %v1260 = vadd.f32 %v1016, %v1157
      %v1261 = vadd.f32 %v1017, %v1160
      %v1262 = vadd.f32 %v1018, %v1162
      %v1263 = vadd.f32 %v1019, %v1165
      %v1264 = vadd.f32 %v1020, %v1167
      %v1265 = vadd.f32 %v1021, %v1170
      %v1266 = vadd.f32 %v1022, %v1172
      %v1267 = vadd.f32 %v1023, %v1175
      %v1268 = vadd.f32 %v1024, %v1177
      %v1269 = vadd.f32 %v1025, %v1180
      %v1270 = vadd.f32 %v1026, %v1182
      %v1271 = vadd.f32 %v1027, %v1185
      %v1272 = vadd.f32 %v1028, %v1187
      %v1273 = vadd.f32 %v1029, %v1190
      %v1274 = vadd.f32 %v1030, %v1192
      %v1275 = vadd.f32 %v1031, %v1195
      %v1276 = vadd.f32 %v1032, %v1197
      %v1277 = vadd.f32 %v1033, %v1200
      %v1278 = vadd.f32 %v1034, %v1202
      %v1279 = vadd.f32 %v1035, %v1205
      %v1280 = vadd.f32 %v1036, %v1207
      %v1281 = vadd.f32 %v1037, %v1210
      %v1282 = vadd.f32 %v1038, %v1212
      %v1283 = vadd.f32 %v1039, %v1215
      %v1284 = vadd.f32 %v1040, %v1217
      %v1285 = vadd.f32 %v1041, %v1220
      %v1286 = vadd.f32 %v1042, %v1222
      %v1287 = vlaneseq
      %v1288 = vshrl.u32 %v1287, 7
      %v1289 = vsub.s32 2, %v1288
      %v1290 = vrot.slane %v415, %v1289
      %v1291 = vmul.f32 %v363, %v1290
      %v1292 = vmul.f32 %v364, %v1290
      %v1293 = vmul.f32 %v365, %v1290
      %v1294 = vmul.f32 %v366, %v1290
      %v1295 = vmul.f32 %v367, %v1290
      %v1296 = vmul.f32 %v368, %v1290
      %v1297 = vmul.f32 %v369, %v1290
      %v1298 = vmul.f32 %v370, %v1290
      %v1299 = vmul.f32 %v371, %v1290
      %v1300 = vmul.f32 %v372, %v1290
      %v1301 = vmul.f32 %v373, %v1290
      %v1302 = vmul.f32 %v374, %v1290
      %v1303 = vmul.f32 %v375, %v1290
      %v1304 = vmul.f32 %v376, %v1290
      %v1305 = vmul.f32 %v377, %v1290
      %v1306 = vmul.f32 %v378, %v1290
      %v1307 = vmul.f32 %v379, %v1290
      %v1308 = vmul.f32 %v380, %v1290
      %v1309 = vmul.f32 %v381, %v1290
      %v1310 = vmul.f32 %v382, %v1290
      %v1311 = vmul.f32 %v383, %v1290
      %v1312 = vmul.f32 %v384, %v1290
      %v1313 = vmul.f32 %v385, %v1290
      %v1314 = vmul.f32 %v386, %v1290
      %v1315 = vmul.f32 %v387, %v1290
      %v1316 = vmul.f32 %v388, %v1290
      %v1317 = vmul.f32 %v389, %v1290
      %v1318 = vmul.f32 %v390, %v1290
      %v1319 = vmul.f32 %v391, %v1290
      %v1320 = vmul.f32 %v392, %v1290
      %v1321 = vmul.f32 %v393, %v1290
      %v1322 = vmul.f32 %v394, %v1290
      %v1323 = vmul.f32 %v395, %v1290
      %v1324 = vmul.f32 %v396, %v1290
      %v1325 = vmul.f32 %v397, %v1290
      %v1326 = vmul.f32 %v398, %v1290
      %v1327 = vmul.f32 %v399, %v1290
      %v1328 = vmul.f32 %v400, %v1290
      %v1329 = vmul.f32 %v401, %v1290
      %v1330 = vmul.f32 %v402, %v1290
      %v1331 = vmul.f32 %v403, %v1290
      %v1332 = vmul.f32 %v404, %v1290
      %v1333 = vmul.f32 %v405, %v1290
      %v1334 = vmul.f32 %v406, %v1290
      %v1335 = vmul.f32 %v407, %v1290
      %v1336 = vmul.f32 %v408, %v1290
      %v1337 = vmul.f32 %v409, %v1290
      %v1338 = vmul.f32 %v410, %v1290
      %v1387 = vrot.slane %v1291, 2
      %v1388 = vrot.slane %v1292, 2
      %v1389 = vsel %vm830, %v1387, %v1388
      %v1390 = vrot.slane %v1293, 2
      %v1391 = vsel %vm830, %v1388, %v1390
      %v1392 = vrot.slane %v1294, 2
      %v1393 = vrot.slane %v1295, 2
      %v1394 = vsel %vm830, %v1392, %v1393
      %v1395 = vrot.slane %v1296, 2
      %v1396 = vsel %vm830, %v1393, %v1395
      %v1397 = vrot.slane %v1297, 2
      %v1398 = vrot.slane %v1298, 2
      %v1399 = vsel %vm830, %v1397, %v1398
      %v1400 = vrot.slane %v1299, 2
      %v1401 = vsel %vm830, %v1398, %v1400
      %v1402 = vrot.slane %v1300, 2
      %v1403 = vrot.slane %v1301, 2
      %v1404 = vsel %vm830, %v1402, %v1403
      %v1405 = vrot.slane %v1302, 2
      %v1406 = vsel %vm830, %v1403, %v1405
      %v1407 = vrot.slane %v1303, 2
      %v1408 = vrot.slane %v1304, 2
      %v1409 = vsel %vm830, %v1407, %v1408
      %v1410 = vrot.slane %v1305, 2
      %v1411 = vsel %vm830, %v1408, %v1410
      %v1412 = vrot.slane %v1306, 2
      %v1413 = vrot.slane %v1307, 2
      %v1414 = vsel %vm830, %v1412, %v1413
      %v1415 = vrot.slane %v1308, 2
      %v1416 = vsel %vm830, %v1413, %v1415
      %v1417 = vrot.slane %v1309, 2
      %v1418 = vrot.slane %v1310, 2
      %v1419 = vsel %vm830, %v1417, %v1418
      %v1420 = vrot.slane %v1311, 2
      %v1421 = vsel %vm830, %v1418, %v1420
      %v1422 = vrot.slane %v1312, 2
      %v1423 = vrot.slane %v1313, 2
      %v1424 = vsel %vm830, %v1422, %v1423
      %v1425 = vrot.slane %v1314, 2
      %v1426 = vsel %vm830, %v1423, %v1425
      %v1427 = vrot.slane %v1315, 2
      %v1428 = vrot.slane %v1316, 2
      %v1429 = vsel %vm830, %v1427, %v1428
      %v1430 = vrot.slane %v1317, 2
      %v1431 = vsel %vm830, %v1428, %v1430
      %v1432 = vrot.slane %v1318, 2
      %v1433 = vrot.slane %v1319, 2
      %v1434 = vsel %vm830, %v1432, %v1433
      %v1435 = vrot.slane %v1320, 2
      %v1436 = vsel %vm830, %v1433, %v1435
      %v1437 = vrot.slane %v1321, 2
      %v1438 = vrot.slane %v1322, 2
      %v1439 = vsel %vm830, %v1437, %v1438
      %v1440 = vrot.slane %v1323, 2
      %v1441 = vsel %vm830, %v1438, %v1440
      %v1442 = vrot.slane %v1324, 2
      %v1443 = vrot.slane %v1325, 2
      %v1444 = vsel %vm830, %v1442, %v1443
      %v1445 = vrot.slane %v1326, 2
      %v1446 = vsel %vm830, %v1443, %v1445
      %v1447 = vrot.slane %v1327, 2
      %v1448 = vrot.slane %v1328, 2
      %v1449 = vsel %vm830, %v1447, %v1448
      %v1450 = vrot.slane %v1329, 2
      %v1451 = vsel %vm830, %v1448, %v1450
      %v1452 = vrot.slane %v1330, 2
      %v1453 = vrot.slane %v1331, 2
      %v1454 = vsel %vm830, %v1452, %v1453
      %v1455 = vrot.slane %v1332, 2
      %v1456 = vsel %vm830, %v1453, %v1455
      %v1457 = vrot.slane %v1333, 2
      %v1458 = vrot.slane %v1334, 2
      %v1459 = vsel %vm830, %v1457, %v1458
      %v1460 = vrot.slane %v1335, 2
      %v1461 = vsel %vm830, %v1458, %v1460
      %v1462 = vrot.slane %v1336, 2
      %v1463 = vrot.slane %v1337, 2
      %v1464 = vsel %vm830, %v1462, %v1463
      %v1465 = vrot.slane %v1338, 2
      %v1466 = vsel %vm830, %v1463, %v1465
      %v1499 = vadd.f32 %v1255, %v1389
      %v1500 = vadd.f32 %v1256, %v1391
      %v1501 = vadd.f32 %v1257, %v1394
      %v1502 = vadd.f32 %v1258, %v1396
      %v1503 = vadd.f32 %v1259, %v1399
      %v1504 = vadd.f32 %v1260, %v1401
      %v1505 = vadd.f32 %v1261, %v1404
      %v1506 = vadd.f32 %v1262, %v1406
      %v1507 = vadd.f32 %v1263, %v1409
      %v1508 = vadd.f32 %v1264, %v1411
      %v1509 = vadd.f32 %v1265, %v1414
      %v1510 = vadd.f32 %v1266, %v1416
      %v1511 = vadd.f32 %v1267, %v1419
      %v1512 = vadd.f32 %v1268, %v1421
      %v1513 = vadd.f32 %v1269, %v1424
      %v1514 = vadd.f32 %v1270, %v1426
      %v1515 = vadd.f32 %v1271, %v1429
      %v1516 = vadd.f32 %v1272, %v1431
      %v1517 = vadd.f32 %v1273, %v1434
      %v1518 = vadd.f32 %v1274, %v1436
      %v1519 = vadd.f32 %v1275, %v1439
      %v1520 = vadd.f32 %v1276, %v1441
      %v1521 = vadd.f32 %v1277, %v1444
      %v1522 = vadd.f32 %v1278, %v1446
      %v1523 = vadd.f32 %v1279, %v1449
      %v1524 = vadd.f32 %v1280, %v1451
      %v1525 = vadd.f32 %v1281, %v1454
      %v1526 = vadd.f32 %v1282, %v1456
      %v1527 = vadd.f32 %v1283, %v1459
      %v1528 = vadd.f32 %v1284, %v1461
      %v1529 = vadd.f32 %v1285, %v1464
      %v1530 = vadd.f32 %v1286, %v1466
      %v1531 = vlaneseq
      %v1532 = vshrl.u32 %v1531, 7
      %v1533 = vsub.s32 0, %v1532
      %v1534 = vrot.slane %v416, %v1533
      %v1535 = vmul.f32 %v366, %v1534
      %v1536 = vmul.f32 %v367, %v1534
      %v1537 = vmul.f32 %v369, %v1534
      %v1538 = vmul.f32 %v370, %v1534
      %v1539 = vmul.f32 %v372, %v1534
      %v1540 = vmul.f32 %v373, %v1534
      %v1541 = vmul.f32 %v375, %v1534
      %v1542 = vmul.f32 %v376, %v1534
      %v1543 = vmul.f32 %v378, %v1534
      %v1544 = vmul.f32 %v379, %v1534
      %v1545 = vmul.f32 %v381, %v1534
      %v1546 = vmul.f32 %v382, %v1534
      %v1547 = vmul.f32 %v384, %v1534
      %v1548 = vmul.f32 %v385, %v1534
      %v1549 = vmul.f32 %v387, %v1534
      %v1550 = vmul.f32 %v388, %v1534
      %v1551 = vmul.f32 %v390, %v1534
      %v1552 = vmul.f32 %v391, %v1534
      %v1553 = vmul.f32 %v393, %v1534
      %v1554 = vmul.f32 %v394, %v1534
      %v1555 = vmul.f32 %v396, %v1534
      %v1556 = vmul.f32 %v397, %v1534
      %v1557 = vmul.f32 %v399, %v1534
      %v1558 = vmul.f32 %v400, %v1534
      %v1559 = vmul.f32 %v402, %v1534
      %v1560 = vmul.f32 %v403, %v1534
      %v1561 = vmul.f32 %v405, %v1534
      %v1562 = vmul.f32 %v406, %v1534
      %v1563 = vmul.f32 %v408, %v1534
      %v1564 = vmul.f32 %v409, %v1534
      %v1565 = vmul.f32 %v411, %v1534
      %v1566 = vmul.f32 %v412, %v1534
      %v1567 = vadd.f32 %v1499, %v1535
      %v1568 = vadd.f32 %v1500, %v1536
      %v1569 = vadd.f32 %v1501, %v1537
      %v1570 = vadd.f32 %v1502, %v1538
      %v1571 = vadd.f32 %v1503, %v1539
      %v1572 = vadd.f32 %v1504, %v1540
      %v1573 = vadd.f32 %v1505, %v1541
      %v1574 = vadd.f32 %v1506, %v1542
      %v1575 = vadd.f32 %v1507, %v1543
      %v1576 = vadd.f32 %v1508, %v1544
      %v1577 = vadd.f32 %v1509, %v1545
      %v1578 = vadd.f32 %v1510, %v1546
      %v1579 = vadd.f32 %v1511, %v1547
      %v1580 = vadd.f32 %v1512, %v1548
      %v1581 = vadd.f32 %v1513, %v1549
      %v1582 = vadd.f32 %v1514, %v1550
      %v1583 = vadd.f32 %v1515, %v1551
      %v1584 = vadd.f32 %v1516, %v1552
      %v1585 = vadd.f32 %v1517, %v1553
      %v1586 = vadd.f32 %v1518, %v1554
      %v1587 = vadd.f32 %v1519, %v1555
      %v1588 = vadd.f32 %v1520, %v1556
      %v1589 = vadd.f32 %v1521, %v1557
      %v1590 = vadd.f32 %v1522, %v1558
      %v1591 = vadd.f32 %v1523, %v1559
      %v1592 = vadd.f32 %v1524, %v1560
      %v1593 = vadd.f32 %v1525, %v1561
      %v1594 = vadd.f32 %v1526, %v1562
      %v1595 = vadd.f32 %v1527, %v1563
      %v1596 = vadd.f32 %v1528, %v1564
      %v1597 = vadd.f32 %v1529, %v1565
      %v1598 = vadd.f32 %v1530, %v1566
      %v1599 = vlaneseq
      %v1600 = vshrl.u32 %v1599, 7
      %v1601 = vsub.s32 1, %v1600
      %v1602 = vrot.slane %v416, %v1601
      %v1603 = vmul.f32 %v366, %v1602
      %v1604 = vmul.f32 %v367, %v1602
      %v1605 = vmul.f32 %v368, %v1602
      %v1606 = vmul.f32 %v369, %v1602
      %v1607 = vmul.f32 %v370, %v1602
      %v1608 = vmul.f32 %v371, %v1602
      %v1609 = vmul.f32 %v372, %v1602
      %v1610 = vmul.f32 %v373, %v1602
      %v1611 = vmul.f32 %v374, %v1602
      %v1612 = vmul.f32 %v375, %v1602
      %v1613 = vmul.f32 %v376, %v1602
      %v1614 = vmul.f32 %v377, %v1602
      %v1615 = vmul.f32 %v378, %v1602
      %v1616 = vmul.f32 %v379, %v1602
      %v1617 = vmul.f32 %v380, %v1602
      %v1618 = vmul.f32 %v381, %v1602
      %v1619 = vmul.f32 %v382, %v1602
      %v1620 = vmul.f32 %v383, %v1602
      %v1621 = vmul.f32 %v384, %v1602
      %v1622 = vmul.f32 %v385, %v1602
      %v1623 = vmul.f32 %v386, %v1602
      %v1624 = vmul.f32 %v387, %v1602
      %v1625 = vmul.f32 %v388, %v1602
      %v1626 = vmul.f32 %v389, %v1602
      %v1627 = vmul.f32 %v390, %v1602
      %v1628 = vmul.f32 %v391, %v1602
      %v1629 = vmul.f32 %v392, %v1602
      %v1630 = vmul.f32 %v393, %v1602
      %v1631 = vmul.f32 %v394, %v1602
      %v1632 = vmul.f32 %v395, %v1602
      %v1633 = vmul.f32 %v396, %v1602
      %v1634 = vmul.f32 %v397, %v1602
      %v1635 = vmul.f32 %v398, %v1602
      %v1636 = vmul.f32 %v399, %v1602
      %v1637 = vmul.f32 %v400, %v1602
      %v1638 = vmul.f32 %v401, %v1602
      %v1639 = vmul.f32 %v402, %v1602
      %v1640 = vmul.f32 %v403, %v1602
      %v1641 = vmul.f32 %v404, %v1602
      %v1642 = vmul.f32 %v405, %v1602
      %v1643 = vmul.f32 %v406, %v1602
      %v1644 = vmul.f32 %v407, %v1602
      %v1645 = vmul.f32 %v408, %v1602
      %v1646 = vmul.f32 %v409, %v1602
      %v1647 = vmul.f32 %v410, %v1602
      %v1648 = vmul.f32 %v411, %v1602
      %v1649 = vmul.f32 %v412, %v1602
      %v1650 = vmul.f32 %v413, %v1602
      %v1699 = vrot.slane %v1603, 1
      %v1700 = vrot.slane %v1604, 1
      %v1701 = vsel %vm585, %v1699, %v1700
      %v1702 = vrot.slane %v1605, 1
      %v1703 = vsel %vm585, %v1700, %v1702
      %v1704 = vrot.slane %v1606, 1
      %v1705 = vrot.slane %v1607, 1
      %v1706 = vsel %vm585, %v1704, %v1705
      %v1707 = vrot.slane %v1608, 1
      %v1708 = vsel %vm585, %v1705, %v1707
      %v1709 = vrot.slane %v1609, 1
      %v1710 = vrot.slane %v1610, 1
      %v1711 = vsel %vm585, %v1709, %v1710
      %v1712 = vrot.slane %v1611, 1
      %v1713 = vsel %vm585, %v1710, %v1712
      %v1714 = vrot.slane %v1612, 1
      %v1715 = vrot.slane %v1613, 1
      %v1716 = vsel %vm585, %v1714, %v1715
      %v1717 = vrot.slane %v1614, 1
      %v1718 = vsel %vm585, %v1715, %v1717
      %v1719 = vrot.slane %v1615, 1
      %v1720 = vrot.slane %v1616, 1
      %v1721 = vsel %vm585, %v1719, %v1720
      %v1722 = vrot.slane %v1617, 1
      %v1723 = vsel %vm585, %v1720, %v1722
      %v1724 = vrot.slane %v1618, 1
      %v1725 = vrot.slane %v1619, 1
      %v1726 = vsel %vm585, %v1724, %v1725
      %v1727 = vrot.slane %v1620, 1
      %v1728 = vsel %vm585, %v1725, %v1727
      %v1729 = vrot.slane %v1621, 1
      %v1730 = vrot.slane %v1622, 1
      %v1731 = vsel %vm585, %v1729, %v1730
      %v1732 = vrot.slane %v1623, 1
      %v1733 = vsel %vm585, %v1730, %v1732
      %v1734 = vrot.slane %v1624, 1
      %v1735 = vrot.slane %v1625, 1
      %v1736 = vsel %vm585, %v1734, %v1735
      %v1737 = vrot.slane %v1626, 1
      %v1738 = vsel %vm585, %v1735, %v1737
      %v1739 = vrot.slane %v1627, 1
      %v1740 = vrot.slane %v1628, 1
      %v1741 = vsel %vm585, %v1739, %v1740
      %v1742 = vrot.slane %v1629, 1
      %v1743 = vsel %vm585, %v1740, %v1742
      %v1744 = vrot.slane %v1630, 1
      %v1745 = vrot.slane %v1631, 1
      %v1746 = vsel %vm585, %v1744, %v1745
      %v1747 = vrot.slane %v1632, 1
      %v1748 = vsel %vm585, %v1745, %v1747
      %v1749 = vrot.slane %v1633, 1
      %v1750 = vrot.slane %v1634, 1
      %v1751 = vsel %vm585, %v1749, %v1750
      %v1752 = vrot.slane %v1635, 1
      %v1753 = vsel %vm585, %v1750, %v1752
      %v1754 = vrot.slane %v1636, 1
      %v1755 = vrot.slane %v1637, 1
      %v1756 = vsel %vm585, %v1754, %v1755
      %v1757 = vrot.slane %v1638, 1
      %v1758 = vsel %vm585, %v1755, %v1757
      %v1759 = vrot.slane %v1639, 1
      %v1760 = vrot.slane %v1640, 1
      %v1761 = vsel %vm585, %v1759, %v1760
      %v1762 = vrot.slane %v1641, 1
      %v1763 = vsel %vm585, %v1760, %v1762
      %v1764 = vrot.slane %v1642, 1
      %v1765 = vrot.slane %v1643, 1
      %v1766 = vsel %vm585, %v1764, %v1765
      %v1767 = vrot.slane %v1644, 1
      %v1768 = vsel %vm585, %v1765, %v1767
      %v1769 = vrot.slane %v1645, 1
      %v1770 = vrot.slane %v1646, 1
      %v1771 = vsel %vm585, %v1769, %v1770
      %v1772 = vrot.slane %v1647, 1
      %v1773 = vsel %vm585, %v1770, %v1772
      %v1774 = vrot.slane %v1648, 1
      %v1775 = vrot.slane %v1649, 1
      %v1776 = vsel %vm585, %v1774, %v1775
      %v1777 = vrot.slane %v1650, 1
      %v1778 = vsel %vm585, %v1775, %v1777
      %v1811 = vadd.f32 %v1567, %v1701
      %v1812 = vadd.f32 %v1568, %v1703
      %v1813 = vadd.f32 %v1569, %v1706
      %v1814 = vadd.f32 %v1570, %v1708
      %v1815 = vadd.f32 %v1571, %v1711
      %v1816 = vadd.f32 %v1572, %v1713
      %v1817 = vadd.f32 %v1573, %v1716
      %v1818 = vadd.f32 %v1574, %v1718
      %v1819 = vadd.f32 %v1575, %v1721
      %v1820 = vadd.f32 %v1576, %v1723
      %v1821 = vadd.f32 %v1577, %v1726
      %v1822 = vadd.f32 %v1578, %v1728
      %v1823 = vadd.f32 %v1579, %v1731
      %v1824 = vadd.f32 %v1580, %v1733
      %v1825 = vadd.f32 %v1581, %v1736
      %v1826 = vadd.f32 %v1582, %v1738
      %v1827 = vadd.f32 %v1583, %v1741
      %v1828 = vadd.f32 %v1584, %v1743
      %v1829 = vadd.f32 %v1585, %v1746
      %v1830 = vadd.f32 %v1586, %v1748
      %v1831 = vadd.f32 %v1587, %v1751
      %v1832 = vadd.f32 %v1588, %v1753
      %v1833 = vadd.f32 %v1589, %v1756
      %v1834 = vadd.f32 %v1590, %v1758
      %v1835 = vadd.f32 %v1591, %v1761
      %v1836 = vadd.f32 %v1592, %v1763
      %v1837 = vadd.f32 %v1593, %v1766
      %v1838 = vadd.f32 %v1594, %v1768
      %v1839 = vadd.f32 %v1595, %v1771
      %v1840 = vadd.f32 %v1596, %v1773
      %v1841 = vadd.f32 %v1597, %v1776
      %v1842 = vadd.f32 %v1598, %v1778
      %v1843 = vlaneseq
      %v1844 = vshrl.u32 %v1843, 7
      %v1845 = vsub.s32 2, %v1844
      %v1846 = vrot.slane %v416, %v1845
      %v1847 = vmul.f32 %v366, %v1846
      %v1848 = vmul.f32 %v367, %v1846
      %v1849 = vmul.f32 %v368, %v1846
      %v1850 = vmul.f32 %v369, %v1846
      %v1851 = vmul.f32 %v370, %v1846
      %v1852 = vmul.f32 %v371, %v1846
      %v1853 = vmul.f32 %v372, %v1846
      %v1854 = vmul.f32 %v373, %v1846
      %v1855 = vmul.f32 %v374, %v1846
      %v1856 = vmul.f32 %v375, %v1846
      %v1857 = vmul.f32 %v376, %v1846
      %v1858 = vmul.f32 %v377, %v1846
      %v1859 = vmul.f32 %v378, %v1846
      %v1860 = vmul.f32 %v379, %v1846
      %v1861 = vmul.f32 %v380, %v1846
      %v1862 = vmul.f32 %v381, %v1846
      %v1863 = vmul.f32 %v382, %v1846
      %v1864 = vmul.f32 %v383, %v1846
      %v1865 = vmul.f32 %v384, %v1846
      %v1866 = vmul.f32 %v385, %v1846
      %v1867 = vmul.f32 %v386, %v1846
      %v1868 = vmul.f32 %v387, %v1846
      %v1869 = vmul.f32 %v388, %v1846
      %v1870 = vmul.f32 %v389, %v1846
      %v1871 = vmul.f32 %v390, %v1846
      %v1872 = vmul.f32 %v391, %v1846
      %v1873 = vmul.f32 %v392, %v1846
      %v1874 = vmul.f32 %v393, %v1846
      %v1875 = vmul.f32 %v394, %v1846
      %v1876 = vmul.f32 %v395, %v1846
      %v1877 = vmul.f32 %v396, %v1846
      %v1878 = vmul.f32 %v397, %v1846
      %v1879 = vmul.f32 %v398, %v1846
      %v1880 = vmul.f32 %v399, %v1846
      %v1881 = vmul.f32 %v400, %v1846
      %v1882 = vmul.f32 %v401, %v1846
      %v1883 = vmul.f32 %v402, %v1846
      %v1884 = vmul.f32 %v403, %v1846
      %v1885 = vmul.f32 %v404, %v1846
      %v1886 = vmul.f32 %v405, %v1846
      %v1887 = vmul.f32 %v406, %v1846
      %v1888 = vmul.f32 %v407, %v1846
      %v1889 = vmul.f32 %v408, %v1846
      %v1890 = vmul.f32 %v409, %v1846
      %v1891 = vmul.f32 %v410, %v1846
      %v1892 = vmul.f32 %v411, %v1846
      %v1893 = vmul.f32 %v412, %v1846
      %v1894 = vmul.f32 %v413, %v1846
      %v1943 = vrot.slane %v1847, 2
      %v1944 = vrot.slane %v1848, 2
      %v1945 = vsel %vm830, %v1943, %v1944
      %v1946 = vrot.slane %v1849, 2
      %v1947 = vsel %vm830, %v1944, %v1946
      %v1948 = vrot.slane %v1850, 2
      %v1949 = vrot.slane %v1851, 2
      %v1950 = vsel %vm830, %v1948, %v1949
      %v1951 = vrot.slane %v1852, 2
      %v1952 = vsel %vm830, %v1949, %v1951
      %v1953 = vrot.slane %v1853, 2
      %v1954 = vrot.slane %v1854, 2
      %v1955 = vsel %vm830, %v1953, %v1954
      %v1956 = vrot.slane %v1855, 2
      %v1957 = vsel %vm830, %v1954, %v1956
      %v1958 = vrot.slane %v1856, 2
      %v1959 = vrot.slane %v1857, 2
      %v1960 = vsel %vm830, %v1958, %v1959
      %v1961 = vrot.slane %v1858, 2
      %v1962 = vsel %vm830, %v1959, %v1961
      %v1963 = vrot.slane %v1859, 2
      %v1964 = vrot.slane %v1860, 2
      %v1965 = vsel %vm830, %v1963, %v1964
      %v1966 = vrot.slane %v1861, 2
      %v1967 = vsel %vm830, %v1964, %v1966
      %v1968 = vrot.slane %v1862, 2
      %v1969 = vrot.slane %v1863, 2
      %v1970 = vsel %vm830, %v1968, %v1969
      %v1971 = vrot.slane %v1864, 2
      %v1972 = vsel %vm830, %v1969, %v1971
      %v1973 = vrot.slane %v1865, 2
      %v1974 = vrot.slane %v1866, 2
      %v1975 = vsel %vm830, %v1973, %v1974
      %v1976 = vrot.slane %v1867, 2
      %v1977 = vsel %vm830, %v1974, %v1976
      %v1978 = vrot.slane %v1868, 2
      %v1979 = vrot.slane %v1869, 2
      %v1980 = vsel %vm830, %v1978, %v1979
      %v1981 = vrot.slane %v1870, 2
      %v1982 = vsel %vm830, %v1979, %v1981
      %v1983 = vrot.slane %v1871, 2
      %v1984 = vrot.slane %v1872, 2
      %v1985 = vsel %vm830, %v1983, %v1984
      %v1986 = vrot.slane %v1873, 2
      %v1987 = vsel %vm830, %v1984, %v1986
      %v1988 = vrot.slane %v1874, 2
      %v1989 = vrot.slane %v1875, 2
      %v1990 = vsel %vm830, %v1988, %v1989
      %v1991 = vrot.slane %v1876, 2
      %v1992 = vsel %vm830, %v1989, %v1991
      %v1993 = vrot.slane %v1877, 2
      %v1994 = vrot.slane %v1878, 2
      %v1995 = vsel %vm830, %v1993, %v1994
      %v1996 = vrot.slane %v1879, 2
      %v1997 = vsel %vm830, %v1994, %v1996
      %v1998 = vrot.slane %v1880, 2
      %v1999 = vrot.slane %v1881, 2
      %v2000 = vsel %vm830, %v1998, %v1999
      %v2001 = vrot.slane %v1882, 2
      %v2002 = vsel %vm830, %v1999, %v2001
      %v2003 = vrot.slane %v1883, 2
      %v2004 = vrot.slane %v1884, 2
      %v2005 = vsel %vm830, %v2003, %v2004
      %v2006 = vrot.slane %v1885, 2
      %v2007 = vsel %vm830, %v2004, %v2006
      %v2008 = vrot.slane %v1886, 2
      %v2009 = vrot.slane %v1887, 2
      %v2010 = vsel %vm830, %v2008, %v2009
      %v2011 = vrot.slane %v1888, 2
      %v2012 = vsel %vm830, %v2009, %v2011
      %v2013 = vrot.slane %v1889, 2
      %v2014 = vrot.slane %v1890, 2
      %v2015 = vsel %vm830, %v2013, %v2014
      %v2016 = vrot.slane %v1891, 2
      %v2017 = vsel %vm830, %v2014, %v2016
      %v2018 = vrot.slane %v1892, 2
      %v2019 = vrot.slane %v1893, 2
      %v2020 = vsel %vm830, %v2018, %v2019
      %v2021 = vrot.slane %v1894, 2
      %v2022 = vsel %vm830, %v2019, %v2021
      %v2055 = vadd.f32 %v1811, %v1945
      %v2056 = vadd.f32 %v1812, %v1947
      %v2057 = vadd.f32 %v1813, %v1950
      %v2058 = vadd.f32 %v1814, %v1952
      %v2059 = vadd.f32 %v1815, %v1955
      %v2060 = vadd.f32 %v1816, %v1957
      %v2061 = vadd.f32 %v1817, %v1960
      %v2062 = vadd.f32 %v1818, %v1962
      %v2063 = vadd.f32 %v1819, %v1965
      %v2064 = vadd.f32 %v1820, %v1967
      %v2065 = vadd.f32 %v1821, %v1970
      %v2066 = vadd.f32 %v1822, %v1972
      %v2067 = vadd.f32 %v1823, %v1975
      %v2068 = vadd.f32 %v1824, %v1977
      %v2069 = vadd.f32 %v1825, %v1980
      %v2070 = vadd.f32 %v1826, %v1982
      %v2071 = vadd.f32 %v1827, %v1985
      %v2072 = vadd.f32 %v1828, %v1987
      %v2073 = vadd.f32 %v1829, %v1990
      %v2074 = vadd.f32 %v1830, %v1992
      %v2075 = vadd.f32 %v1831, %v1995
      %v2076 = vadd.f32 %v1832, %v1997
      %v2077 = vadd.f32 %v1833, %v2000
      %v2078 = vadd.f32 %v1834, %v2002
      %v2079 = vadd.f32 %v1835, %v2005
      %v2080 = vadd.f32 %v1836, %v2007
      %v2081 = vadd.f32 %v1837, %v2010
      %v2082 = vadd.f32 %v1838, %v2012
      %v2083 = vadd.f32 %v1839, %v2015
      %v2084 = vadd.f32 %v1840, %v2017
      %v2085 = vadd.f32 %v1841, %v2020
      %v2086 = vadd.f32 %v1842, %v2022
      %v2087 = vld [vmem:[%s2] sm:$0x1]
      %v2089 = vlaneseq
      %v2090 = vshrl.u32 %v2089, 7
      %v2091 = vsub.s32 0, %v2090
      %v2092 = vrot.slane %v2087, %v2091
      %v2094 = vadd.f32 %v2055, %v2092
      %v2095 = vadd.f32 %v2056, %v2092
      %v2096 = vadd.f32 %v2057, %v2092
      %v2097 = vadd.f32 %v2058, %v2092
      %v2098 = vadd.f32 %v2059, %v2092
      %v2099 = vadd.f32 %v2060, %v2092
      %v2100 = vadd.f32 %v2061, %v2092
      %v2101 = vadd.f32 %v2062, %v2092
      %v2102 = vadd.f32 %v2063, %v2092
      %v2103 = vadd.f32 %v2064, %v2092
      %v2104 = vadd.f32 %v2065, %v2092
      %v2105 = vadd.f32 %v2066, %v2092
      %v2106 = vadd.f32 %v2067, %v2092
      %v2107 = vadd.f32 %v2068, %v2092
      %v2108 = vadd.f32 %v2069, %v2092
      %v2109 = vadd.f32 %v2070, %v2092
      %v2110 = vadd.f32 %v2071, %v2092
      %v2111 = vadd.f32 %v2072, %v2092
      %v2112 = vadd.f32 %v2073, %v2092
      %v2113 = vadd.f32 %v2074, %v2092
      %v2114 = vadd.f32 %v2075, %v2092
      %v2115 = vadd.f32 %v2076, %v2092
      %v2116 = vadd.f32 %v2077, %v2092
      %v2117 = vadd.f32 %v2078, %v2092
      %v2118 = vadd.f32 %v2079, %v2092
      %v2119 = vadd.f32 %v2080, %v2092
      %v2120 = vadd.f32 %v2081, %v2092
      %v2121 = vadd.f32 %v2082, %v2092
      %v2122 = vadd.f32 %v2083, %v2092
      %v2123 = vadd.f32 %v2084, %v2092
      %v2124 = vadd.f32 %v2085, %v2092
      %v2125 = vadd.f32 %v2086, %v2092
      %v2126 = vadd.f32 %v2094, 3.0
      %v2127 = vadd.f32 %v2095, 3.0
      %v2128 = vadd.f32 %v2096, 3.0
      %v2129 = vadd.f32 %v2097, 3.0
      %v2130 = vadd.f32 %v2098, 3.0
      %v2131 = vadd.f32 %v2099, 3.0
      %v2132 = vadd.f32 %v2100, 3.0
      %v2133 = vadd.f32 %v2101, 3.0
      %v2134 = vadd.f32 %v2102, 3.0
      %v2135 = vadd.f32 %v2103, 3.0
      %v2136 = vadd.f32 %v2104, 3.0
      %v2137 = vadd.f32 %v2105, 3.0
      %v2138 = vadd.f32 %v2106, 3.0
      %v2139 = vadd.f32 %v2107, 3.0
      %v2140 = vadd.f32 %v2108, 3.0
      %v2141 = vadd.f32 %v2109, 3.0
      %v2142 = vadd.f32 %v2110, 3.0
      %v2143 = vadd.f32 %v2111, 3.0
      %v2144 = vadd.f32 %v2112, 3.0
      %v2145 = vadd.f32 %v2113, 3.0
      %v2146 = vadd.f32 %v2114, 3.0
      %v2147 = vadd.f32 %v2115, 3.0
      %v2148 = vadd.f32 %v2116, 3.0
      %v2149 = vadd.f32 %v2117, 3.0
      %v2150 = vadd.f32 %v2118, 3.0
      %v2151 = vadd.f32 %v2119, 3.0
      %v2152 = vadd.f32 %v2120, 3.0
      %v2153 = vadd.f32 %v2121, 3.0
      %v2154 = vadd.f32 %v2122, 3.0
      %v2155 = vadd.f32 %v2123, 3.0
      %v2156 = vadd.f32 %v2124, 3.0
      %v2157 = vadd.f32 %v2125, 3.0
      %v2158 = vmax.f32 %v2126, 0.0
      %v2159 = vmax.f32 %v2127, 0.0
      %v2160 = vmax.f32 %v2128, 0.0
      %v2161 = vmax.f32 %v2129, 0.0
      %v2162 = vmax.f32 %v2130, 0.0
      %v2163 = vmax.f32 %v2131, 0.0
      %v2164 = vmax.f32 %v2132, 0.0
      %v2165 = vmax.f32 %v2133, 0.0
      %v2166 = vmax.f32 %v2134, 0.0
      %v2167 = vmax.f32 %v2135, 0.0
      %v2168 = vmax.f32 %v2136, 0.0
      %v2169 = vmax.f32 %v2137, 0.0
      %v2170 = vmax.f32 %v2138, 0.0
      %v2171 = vmax.f32 %v2139, 0.0
      %v2172 = vmax.f32 %v2140, 0.0
      %v2173 = vmax.f32 %v2141, 0.0
      %v2174 = vmax.f32 %v2142, 0.0
      %v2175 = vmax.f32 %v2143, 0.0
      %v2176 = vmax.f32 %v2144, 0.0
      %v2177 = vmax.f32 %v2145, 0.0
      %v2178 = vmax.f32 %v2146, 0.0
      %v2179 = vmax.f32 %v2147, 0.0
      %v2180 = vmax.f32 %v2148, 0.0
      %v2181 = vmax.f32 %v2149, 0.0
      %v2182 = vmax.f32 %v2150, 0.0
      %v2183 = vmax.f32 %v2151, 0.0
      %v2184 = vmax.f32 %v2152, 0.0
      %v2185 = vmax.f32 %v2153, 0.0
      %v2186 = vmax.f32 %v2154, 0.0
      %v2187 = vmax.f32 %v2155, 0.0
      %v2188 = vmax.f32 %v2156, 0.0
      %v2189 = vmax.f32 %v2157, 0.0
      %v2190 = vmin.f32 %v2158, 6.0
      %v2191 = vmin.f32 %v2159, 6.0
      %v2192 = vmin.f32 %v2160, 6.0
      %v2193 = vmin.f32 %v2161, 6.0
      %v2194 = vmin.f32 %v2162, 6.0
      %v2195 = vmin.f32 %v2163, 6.0
      %v2196 = vmin.f32 %v2164, 6.0
      %v2197 = vmin.f32 %v2165, 6.0
      %v2198 = vmin.f32 %v2166, 6.0
      %v2199 = vmin.f32 %v2167, 6.0
      %v2200 = vmin.f32 %v2168, 6.0
      %v2201 = vmin.f32 %v2169, 6.0
      %v2202 = vmin.f32 %v2170, 6.0
      %v2203 = vmin.f32 %v2171, 6.0
      %v2204 = vmin.f32 %v2172, 6.0
      %v2205 = vmin.f32 %v2173, 6.0
      %v2206 = vmin.f32 %v2174, 6.0
      %v2207 = vmin.f32 %v2175, 6.0
      %v2208 = vmin.f32 %v2176, 6.0
      %v2209 = vmin.f32 %v2177, 6.0
      %v2210 = vmin.f32 %v2178, 6.0
      %v2211 = vmin.f32 %v2179, 6.0
      %v2212 = vmin.f32 %v2180, 6.0
      %v2213 = vmin.f32 %v2181, 6.0
      %v2214 = vmin.f32 %v2182, 6.0
      %v2215 = vmin.f32 %v2183, 6.0
      %v2216 = vmin.f32 %v2184, 6.0
      %v2217 = vmin.f32 %v2185, 6.0
      %v2218 = vmin.f32 %v2186, 6.0
      %v2219 = vmin.f32 %v2187, 6.0
      %v2220 = vmin.f32 %v2188, 6.0
      %v2221 = vmin.f32 %v2189, 6.0
      %v2222 = vmul.f32 %v2094, %v2190
      %v2223 = vmul.f32 %v2095, %v2191
      %v2224 = vmul.f32 %v2096, %v2192
      %v2225 = vmul.f32 %v2097, %v2193
      %v2226 = vmul.f32 %v2098, %v2194
      %v2227 = vmul.f32 %v2099, %v2195
      %v2228 = vmul.f32 %v2100, %v2196
      %v2229 = vmul.f32 %v2101, %v2197
      %v2230 = vmul.f32 %v2102, %v2198
      %v2231 = vmul.f32 %v2103, %v2199
      %v2232 = vmul.f32 %v2104, %v2200
      %v2233 = vmul.f32 %v2105, %v2201
      %v2234 = vmul.f32 %v2106, %v2202
      %v2235 = vmul.f32 %v2107, %v2203
      %v2236 = vmul.f32 %v2108, %v2204
      %v2237 = vmul.f32 %v2109, %v2205
      %v2238 = vmul.f32 %v2110, %v2206
      %v2239 = vmul.f32 %v2111, %v2207
      %v2240 = vmul.f32 %v2112, %v2208
      %v2241 = vmul.f32 %v2113, %v2209
      %v2242 = vmul.f32 %v2114, %v2210
      %v2243 = vmul.f32 %v2115, %v2211
      %v2244 = vmul.f32 %v2116, %v2212
      %v2245 = vmul.f32 %v2117, %v2213
      %v2246 = vmul.f32 %v2118, %v2214
      %v2247 = vmul.f32 %v2119, %v2215
      %v2248 = vmul.f32 %v2120, %v2216
      %v2249 = vmul.f32 %v2121, %v2217
      %v2250 = vmul.f32 %v2122, %v2218
      %v2251 = vmul.f32 %v2123, %v2219
      %v2252 = vmul.f32 %v2124, %v2220
      %v2253 = vmul.f32 %v2125, %v2221
      %v2254 = vmul.f32 %v2222, 0.16666667
      %v2255 = vmul.f32 %v2223, 0.16666667
      %v2256 = vmul.f32 %v2224, 0.16666667
      %v2257 = vmul.f32 %v2225, 0.16666667
      %v2258 = vmul.f32 %v2226, 0.16666667
      %v2259 = vmul.f32 %v2227, 0.16666667
      %v2260 = vmul.f32 %v2228, 0.16666667
      %v2261 = vmul.f32 %v2229, 0.16666667
      %v2262 = vmul.f32 %v2230, 0.16666667
      %v2263 = vmul.f32 %v2231, 0.16666667
      %v2264 = vmul.f32 %v2232, 0.16666667
      %v2265 = vmul.f32 %v2233, 0.16666667
      %v2266 = vmul.f32 %v2234, 0.16666667
      %v2267 = vmul.f32 %v2235, 0.16666667
      %v2268 = vmul.f32 %v2236, 0.16666667
      %v2269 = vmul.f32 %v2237, 0.16666667
      %v2270 = vmul.f32 %v2238, 0.16666667
      %v2271 = vmul.f32 %v2239, 0.16666667
      %v2272 = vmul.f32 %v2240, 0.16666667
      %v2273 = vmul.f32 %v2241, 0.16666667
      %v2274 = vmul.f32 %v2242, 0.16666667
      %v2275 = vmul.f32 %v2243, 0.16666667
      %v2276 = vmul.f32 %v2244, 0.16666667
      %v2277 = vmul.f32 %v2245, 0.16666667
      %v2278 = vmul.f32 %v2246, 0.16666667
      %v2279 = vmul.f32 %v2247, 0.16666667
      %v2280 = vmul.f32 %v2248, 0.16666667
      %v2281 = vmul.f32 %v2249, 0.16666667
      %v2282 = vmul.f32 %v2250, 0.16666667
      %v2283 = vmul.f32 %v2251, 0.16666667
      %v2284 = vmul.f32 %v2252, 0.16666667
      %v2285 = vmul.f32 %v2253, 0.16666667
      %v2286 = vpack.c.bf16 %v2255, %v2254
      %v2287 = vpack.c.bf16 %v2257, %v2256
      %v2288 = vpack.c.bf16 %v2259, %v2258
      %v2289 = vpack.c.bf16 %v2261, %v2260
      %v2290 = vpack.c.bf16 %v2263, %v2262
      %v2291 = vpack.c.bf16 %v2265, %v2264
      %v2292 = vpack.c.bf16 %v2267, %v2266
      %v2293 = vpack.c.bf16 %v2269, %v2268
      %v2294 = vpack.c.bf16 %v2271, %v2270
      %v2295 = vpack.c.bf16 %v2273, %v2272
      %v2296 = vpack.c.bf16 %v2275, %v2274
      %v2297 = vpack.c.bf16 %v2277, %v2276
      %v2298 = vpack.c.bf16 %v2279, %v2278
      %v2299 = vpack.c.bf16 %v2281, %v2280
      %v2300 = vpack.c.bf16 %v2283, %v2282
      %v2301 = vpack.c.bf16 %v2285, %v2284
      %v2318 = vunpack.c.l.b16 %v2286
      %v2319 = vunpack.c.h.b16 %v2286
      %v2320 = vunpack.c.l.b16 %v2287
      %v2321 = vunpack.c.h.b16 %v2287
      %v2322 = vunpack.c.l.b16 %v2288
      %v2323 = vunpack.c.h.b16 %v2288
      %v2324 = vunpack.c.l.b16 %v2289
      %v2325 = vunpack.c.h.b16 %v2289
      %v2326 = vunpack.c.l.b16 %v2290
      %v2327 = vunpack.c.h.b16 %v2290
      %v2328 = vunpack.c.l.b16 %v2291
      %v2329 = vunpack.c.h.b16 %v2291
      %v2330 = vunpack.c.l.b16 %v2292
      %v2331 = vunpack.c.h.b16 %v2292
      %v2332 = vunpack.c.l.b16 %v2293
      %v2333 = vunpack.c.h.b16 %v2293
      %v2334 = vunpack.c.l.b16 %v2294
      %v2335 = vunpack.c.h.b16 %v2294
      %v2336 = vunpack.c.l.b16 %v2295
      %v2337 = vunpack.c.h.b16 %v2295
      %v2338 = vunpack.c.l.b16 %v2296
      %v2339 = vunpack.c.h.b16 %v2296
      %v2340 = vunpack.c.l.b16 %v2297
      %v2341 = vunpack.c.h.b16 %v2297
      %v2342 = vunpack.c.l.b16 %v2298
      %v2343 = vunpack.c.h.b16 %v2298
      %v2344 = vunpack.c.l.b16 %v2299
      %v2345 = vunpack.c.h.b16 %v2299
      %v2346 = vunpack.c.l.b16 %v2300
      %v2347 = vunpack.c.h.b16 %v2300
      %v2348 = vunpack.c.l.b16 %v2301
      %v2349 = vunpack.c.h.b16 %v2301
      %v2350 = vpack.c.b16 %v2318, %v2318
      %v2351 = vpack.c.b16 %v2319, %v2319
      %v2352 = vpack.c.b16 %v2320, %v2320
      %v2353 = vpack.c.b16 %v2321, %v2321
      %v2354 = vpack.c.b16 %v2322, %v2322
      %v2355 = vpack.c.b16 %v2323, %v2323
      %v2356 = vpack.c.b16 %v2324, %v2324
      %v2357 = vpack.c.b16 %v2325, %v2325
      %v2358 = vpack.c.b16 %v2326, %v2326
      %v2359 = vpack.c.b16 %v2327, %v2327
      %v2360 = vpack.c.b16 %v2328, %v2328
      %v2361 = vpack.c.b16 %v2329, %v2329
      %v2362 = vpack.c.b16 %v2330, %v2330
      %v2363 = vpack.c.b16 %v2331, %v2331
      %v2364 = vpack.c.b16 %v2332, %v2332
      %v2365 = vpack.c.b16 %v2333, %v2333
      %v2366 = vpack.c.b16 %v2334, %v2334
      %v2367 = vpack.c.b16 %v2335, %v2335
      %v2368 = vpack.c.b16 %v2336, %v2336
      %v2369 = vpack.c.b16 %v2337, %v2337
      %v2370 = vpack.c.b16 %v2338, %v2338
      %v2371 = vpack.c.b16 %v2339, %v2339
      %v2372 = vpack.c.b16 %v2340, %v2340
      %v2373 = vpack.c.b16 %v2341, %v2341
      %v2374 = vpack.c.b16 %v2342, %v2342
      %v2375 = vpack.c.b16 %v2343, %v2343
      %v2376 = vpack.c.b16 %v2344, %v2344
      %v2377 = vpack.c.b16 %v2345, %v2345
      %v2378 = vpack.c.b16 %v2346, %v2346
      %v2379 = vpack.c.b16 %v2347, %v2347
      %v2380 = vpack.c.b16 %v2348, %v2348
      %v2381 = vpack.c.b16 %v2349, %v2349
      %vm2414 = vcmask 125952
      %2415 = vst.msk [vmem:[%s203] sm:$0xf] %vm2414, %v2350
      %2416 = vst.msk [vmem:[%s203 + $0x4] sm:$0xf] %vm2414, %v2351
      %2417 = vst.msk [vmem:[%s203 + $0x8] sm:$0xf] %vm2414, %v2352
      %2418 = vst.msk [vmem:[%s203 + $0xc] sm:$0xf] %vm2414, %v2353
      %2419 = vst.msk [vmem:[%s203 + $0x10] sm:$0xf] %vm2414, %v2354
      %2420 = vst.msk [vmem:[%s203 + $0x14] sm:$0xf] %vm2414, %v2355
      %2421 = vst.msk [vmem:[%s203 + $0x18] sm:$0xf] %vm2414, %v2356
      %2422 = vst.msk [vmem:[%s203 + $0x1c] sm:$0xf] %vm2414, %v2357
      %2423 = vst.msk [vmem:[%s203 + $0x20] sm:$0xf] %vm2414, %v2358
      %2424 = vst.msk [vmem:[%s203 + $0x24] sm:$0xf] %vm2414, %v2359
      %2425 = vst.msk [vmem:[%s203 + $0x28] sm:$0xf] %vm2414, %v2360
      %2426 = vst.msk [vmem:[%s203 + $0x2c] sm:$0xf] %vm2414, %v2361
      %2427 = vst.msk [vmem:[%s203 + $0x30] sm:$0xf] %vm2414, %v2362
      %2428 = vst.msk [vmem:[%s203 + $0x34] sm:$0xf] %vm2414, %v2363
      %2429 = vst.msk [vmem:[%s203 + $0x38] sm:$0xf] %vm2414, %v2364
      %2430 = vst.msk [vmem:[%s203 + $0x3c] sm:$0xf] %vm2414, %v2365
      %2431 = vst.msk [vmem:[%s203 + $0x40] sm:$0xf] %vm2414, %v2366
      %2432 = vst.msk [vmem:[%s203 + $0x44] sm:$0xf] %vm2414, %v2367
      %2433 = vst.msk [vmem:[%s203 + $0x48] sm:$0xf] %vm2414, %v2368
      %2434 = vst.msk [vmem:[%s203 + $0x4c] sm:$0xf] %vm2414, %v2369
      %2435 = vst.msk [vmem:[%s203 + $0x50] sm:$0xf] %vm2414, %v2370
      %2436 = vst.msk [vmem:[%s203 + $0x54] sm:$0xf] %vm2414, %v2371
      %2437 = vst.msk [vmem:[%s203 + $0x58] sm:$0xf] %vm2414, %v2372
      %2438 = vst.msk [vmem:[%s203 + $0x5c] sm:$0xf] %vm2414, %v2373
      %2439 = vst.msk [vmem:[%s203 + $0x60] sm:$0xf] %vm2414, %v2374
      %2440 = vst.msk [vmem:[%s203 + $0x64] sm:$0xf] %vm2414, %v2375
      %2441 = vst.msk [vmem:[%s203 + $0x68] sm:$0xf] %vm2414, %v2376
      %2442 = vst.msk [vmem:[%s203 + $0x6c] sm:$0xf] %vm2414, %v2377
      %2443 = vst.msk [vmem:[%s203 + $0x70] sm:$0xf] %vm2414, %v2378
      %2444 = vst.msk [vmem:[%s203 + $0x74] sm:$0xf] %vm2414, %v2379
      %2445 = vst.msk [vmem:[%s203 + $0x78] sm:$0xf] %vm2414, %v2380
      %2446 = vst.msk [vmem:[%s203 + $0x7c] sm:$0xf] %vm2414, %v2381
      %v2447 = vsel %vm207, %v2254, 0.0
      %v2448 = vsel %vm207, %v2255, 0.0
      %v2449 = vadd.f32 %v2447, %v2448
      %v2450 = vsel %vm207, %v2256, 0.0
      %v2451 = vadd.f32 %v2449, %v2450
      %v2452 = vsel %vm207, %v2257, 0.0
      %v2453 = vadd.f32 %v2451, %v2452
      %v2454 = vsel %vm207, %v2258, 0.0
      %v2455 = vadd.f32 %v2453, %v2454
      %v2456 = vsel %vm207, %v2259, 0.0
      %v2457 = vadd.f32 %v2455, %v2456
      %v2458 = vsel %vm207, %v2260, 0.0
      %v2459 = vadd.f32 %v2457, %v2458
      %v2460 = vsel %vm207, %v2261, 0.0
      %v2461 = vadd.f32 %v2459, %v2460
      %v2462 = vsel %vm207, %v2262, 0.0
      %v2463 = vadd.f32 %v2461, %v2462
      %v2464 = vsel %vm207, %v2263, 0.0
      %v2465 = vadd.f32 %v2463, %v2464
      %v2466 = vsel %vm207, %v2264, 0.0
      %v2467 = vadd.f32 %v2465, %v2466
      %v2468 = vsel %vm207, %v2265, 0.0
      %v2469 = vadd.f32 %v2467, %v2468
      %v2470 = vsel %vm207, %v2266, 0.0
      %v2471 = vadd.f32 %v2469, %v2470
      %v2472 = vsel %vm207, %v2267, 0.0
      %v2473 = vadd.f32 %v2471, %v2472
      %v2474 = vsel %vm207, %v2268, 0.0
      %v2475 = vadd.f32 %v2473, %v2474
      %v2476 = vsel %vm207, %v2269, 0.0
      %v2477 = vadd.f32 %v2475, %v2476
      %v2478 = vsel %vm207, %v2270, 0.0
      %v2479 = vadd.f32 %v2477, %v2478
      %v2480 = vsel %vm207, %v2271, 0.0
      %v2481 = vadd.f32 %v2479, %v2480
      %v2482 = vsel %vm207, %v2272, 0.0
      %v2483 = vadd.f32 %v2481, %v2482
      %v2484 = vsel %vm207, %v2273, 0.0
      %v2485 = vadd.f32 %v2483, %v2484
      %v2486 = vsel %vm207, %v2274, 0.0
      %v2487 = vadd.f32 %v2485, %v2486
      %v2488 = vsel %vm207, %v2275, 0.0
      %v2489 = vadd.f32 %v2487, %v2488
      %v2490 = vsel %vm207, %v2276, 0.0
      %v2491 = vadd.f32 %v2489, %v2490
      %v2492 = vsel %vm207, %v2277, 0.0
      %v2493 = vadd.f32 %v2491, %v2492
      %v2494 = vsel %vm207, %v2278, 0.0
      %v2495 = vadd.f32 %v2493, %v2494
      %v2496 = vsel %vm207, %v2279, 0.0
      %v2497 = vadd.f32 %v2495, %v2496
      %v2498 = vsel %vm207, %v2280, 0.0
      %v2499 = vadd.f32 %v2497, %v2498
      %v2500 = vsel %vm207, %v2281, 0.0
      %v2501 = vadd.f32 %v2499, %v2500
      %v2502 = vsel %vm207, %v2282, 0.0
      %v2503 = vadd.f32 %v2501, %v2502
      %v2504 = vsel %vm207, %v2283, 0.0
      %v2505 = vadd.f32 %v2503, %v2504
      %v2506 = vsel %vm207, %v2284, 0.0
      %v2507 = vadd.f32 %v2505, %v2506
      %v2508 = vsel %vm207, %v2285, 0.0
      %v2509 = vadd.f32 %v2507, %v2508
      %v2510 = vrot.slane %v2509, 4
      %v2511 = vadd.f32 %v2509, %v2510
      %v2512 = vrot.slane %v2511, 2
      %v2513 = vadd.f32 %v2511, %v2512
      %v2514 = vrot.slane %v2513, 1
      %v2515 = vadd.f32 %v2513, %v2514
      %vm2516 = vcmask 122880
      %2517 = vst.msk [vmem:[%s206] sm:$0x1] %vm2516, %v2515
      %p2518 = scmp.lt.s32.totalorder %s16, 1
      %s2519 = scalar_select %p2518, %s16, 1
      %s2520 = smul.addr %s2519, 32
      %s2521 = smul.addr %s2520, 4
      %s2522 = scalar_lea.vmem %s3, %s2521
      %p2523 = scmp.lt.s32.totalorder %s16, 1
      %s2524 = scalar_select %p2523, %s16, 1
      %s2525 = scalar_lea.vmem %s4, %s2524
      // Predicated region
      $region33: #{mb_block_forward.4} parent=31 // pred_check
        %p2526 = pneg %p102
      $region34: #{mb_block_forward.4} parent=31 // pred_check_branch
        %2528 = sbr.rel (%p2526) target = $region36
      $region35: #{mb_block_forward.4} parent=31 // pred_region
        _
      $region36: #{mb_block_forward.4} parent=31 // pred_fallthru
        _
      // Predicated region
      $region37: #{mb_block_forward.4} parent=31 // pred_check
        %p2529 = pneg %p128
      $region38: #{mb_block_forward.4} parent=31 // pred_check_branch
        %2531 = sbr.rel (%p2529) target = $region40
      $region39: #{mb_block_forward.4} parent=31 // pred_region
        _
      $region40: #{mb_block_forward.4} parent=31 // pred_fallthru
        _
    $region32: #{mb_block_forward.4} parent=5 // pred_fallthru
      _
    %p2532 = scmp.le.s32.totalorder 2, %s11
    // Predicated region
    $region41: #{mb_block_forward.4} parent=5 // pred_check
      %p2533 = pneg %p2532
    $region42: #{mb_block_forward.4} parent=5 // pred_check_branch
      %2535 = sbr.rel (%p2533) target = $region44
    $region43: #{mb_block_forward.4} parent=5 // pred_region
      %s2536 = ssub.s32 %s11, 2
      // Predicated region
      $region45: #{mb_block_forward.4} parent=43 // pred_check
        %p2537 = pneg %p108
      $region46: #{mb_block_forward.4} parent=43 // pred_check_branch
        %2539 = sbr.rel (%p2537) target = $region48
      $region47: #{mb_block_forward.4} parent=43 // pred_region
        %p2540 = scmp.lt.s32.totalorder %s17, 1
        %s2541 = scalar_select %p2540, %s17, 1
        %s2542 = smul.addr %s2541, 32
        %s2543 = smul.addr %s2542, 4
        %s2544 = scalar_lea.vmem %s3, %s2543
      $region48: #{mb_block_forward.4} parent=43 // pred_fallthru
        _
      // Predicated region
      $region49: #{mb_block_forward.4} parent=43 // pred_check
        %p2545 = pneg %p134
      $region50: #{mb_block_forward.4} parent=43 // pred_check_branch
        %2547 = sbr.rel (%p2545) target = $region52
      $region51: #{mb_block_forward.4} parent=43 // pred_region
        %p2548 = scmp.lt.s32.totalorder %s17, 1
        %s2549 = scalar_select %p2548, %s17, 1
        %s2550 = scalar_lea.vmem %s4, %s2549
      $region52: #{mb_block_forward.4} parent=43 // pred_fallthru
        _
    $region44: #{mb_block_forward.4} parent=5 // pred_fallthru
      _
  $region6: #{mb_block_forward.4} parent=0 // loop_footer
    %s15 = sadd.s32 1, %s11
  $region7: #{mb_block_forward.4} parent=0 // loop_footer_branch
    %10 = sbr.rel target = $region3
  $region8: #{mb_block_forward.4} parent=0 // loop_exit
    _

</llo_original>
